<compile_context>
chip_gen: v7x
topology: tpu7x:2x2x1
jax: 0.10.0
libtpu: 0.0.40
codegen_flags: <defaults>
</compile_context>

<pallas_src>
import functools

import jax
import jax.numpy as jnp
from jax.experimental import pallas as pl
from jax.experimental.pallas import tpu as pltpu

LANE = 128


def _round_up(x, m):
    return ((x + m - 1) // m) * m


def _im2col_3x3(strips, width):
    """strips: list of 3 arrays (rows, width+2, C) for tap dy = 0, 1, 2.

    Returns (rows, width, 9*C): all 9 taps folded into the contraction (lane) dim,
    ordered (dy, dx, c) to match w.reshape(9*C, Cout) for HWIO weights.
    """
    pieces = []
    for s in strips:                       # dy = 0, 1, 2
        for dx in range(3):
            pieces.append(s[:, dx:dx + width, :])
    return jnp.concatenate(pieces, axis=-1)


def _decoder_block_kernel(xu_ref, sk_ref, w1_ref, w2_ref,
                          s1_ref, b1_ref, s2_ref, b2_ref,
                          o_ref, y1_ref, *, th, hh, ww):
    """Fused upsampled-x/skip -> conv1(BN,ReLU) -> conv2(BN,ReLU) for one H-tile.

    xu_ref: (1, H+4, W+2, Cxp) f32  padded, channel-padded, 2x-upsampled x
    sk_ref: (1, H+4, W+2, Csp) f32  padded, channel-padded skip
    w1_ref: (9*(Cxp+Csp), Cop) bf16 conv1 weights, taps folded into rows
    w2_ref: (9*Cop, Cop)       bf16 conv2 weights, taps folded into rows
    s*_ref/b*_ref: (1, Cop)    f32  folded BatchNorm scale / bias
    o_ref:  (1, th, W, Cop)    f32  output tile
    y1_ref: (th+2, W+2, Cop)   f32  VMEM scratch: conv1 output + 1-pixel border
    """
    t = pl.program_id(1)
    r1 = th + 2                      # conv1 rows computed (1-row halo each side)
    base = t * th                    # first padded input row used by this tile

    # ---- conv1 (+ folded BN + ReLU) over r1 rows ----------------------------
    strips = []
    for dy in range(3):
        xu_s = xu_ref[0, pl.ds(base + dy, r1), :, :]     # (r1, W+2, Cxp)
        sk_s = sk_ref[0, pl.ds(base + dy, r1), :, :]     # (r1, W+2, Csp)
        # fused channel concat: per-tap layout is [x channels, skip channels]
        strips.append(jnp.concatenate([xu_s, sk_s], axis=-1))
    patch1 = _im2col_3x3(strips, ww)                     # (r1, W, 9*(Cxp+Csp))
    k1 = patch1.shape[-1]
    acc1 = jnp.dot(patch1.reshape(r1 * ww, k1).astype(jnp.bfloat16),
                   w1_ref[...],
                   preferred_element_type=jnp.float32)   # (r1*W, Cop) f32
    y1 = jnp.maximum(acc1 * s1_ref[0] + b1_ref[0], 0.0)  # BN (folded) + ReLU
    y1 = y1.reshape(r1, ww, y1.shape[-1])

    # Halo rows that fall outside the image must be ZERO (conv2 zero-padding),
    # not conv1-evaluated-on-zeros.
    grow = t * th - 1 + jax.lax.broadcasted_iota(jnp.int32, y1.shape, 0)
    y1 = jnp.where((grow >= 0) & (grow < hh), y1, 0.0)

    # Stage into VMEM scratch with a 1-column zero border (conv2 W padding).
    # The intermediate activation never leaves VMEM.
    y1_ref[...] = jnp.zeros_like(y1_ref)
    y1_ref[:, 1:ww + 1, :] = y1

    # ---- conv2 (+ folded BN + ReLU) over the th output rows -----------------
    strips2 = [y1_ref[dy:dy + th, :, :] for dy in range(3)]
    patch2 = _im2col_3x3(strips2, ww)                    # (th, W, 9*Cop)
    k2 = patch2.shape[-1]
    acc2 = jnp.dot(patch2.reshape(th * ww, k2).astype(jnp.bfloat16),
                   w2_ref[...],
                   preferred_element_type=jnp.float32)   # (th*W, Cop) f32
    y2 = jnp.maximum(acc2 * s2_ref[0] + b2_ref[0], 0.0)
    o_ref[0] = y2.reshape(th, ww, y2.shape[-1]).astype(o_ref.dtype)


def fold_bn(gamma, beta, mean, var, eps=1e-5):
    scale = gamma / jnp.sqrt(var + eps)
    return scale, beta - mean * scale


@jax.jit
def decoder_block_forward(x_nchw, skip_nchw, params):
    """DecoderBlock forward. Inputs/outputs are NCHW (PyTorch convention)."""
    n, cx, hs, ws = x_nchw.shape
    _, cs, hh, ww = skip_nchw.shape
    out_ch = params["w1"].shape[-1]

    cxp = _round_up(cx, LANE)          # lane-dense channel padding
    csp = _round_up(cs, LANE)
    cop = _round_up(out_ch, LANE)
    th = 8 if hh % 8 == 0 else hh      # H-tile (second parallel grid axis)
    num_t = hh // th

    # TODO(synk): in a full UNet keep activations NHWC across blocks; the
    # NCHW<->NHWC transposes here are a one-time model-boundary cost.
    x = jnp.transpose(x_nchw, (0, 2, 3, 1))
    skip = jnp.transpose(skip_nchw, (0, 2, 3, 1))

    # nearest-neighbour 2x upsample (== F.interpolate(scale_factor=2, 'nearest'))
    # TODO(synk): fold the nearest-upsample gather into the kernel input path to
    # avoid materializing the upsampled tensor in HBM.
    xu = jnp.repeat(jnp.repeat(x, 2, axis=1), 2, axis=2)

    # Spatial pad: 2 rows top/bottom (conv1 pad + conv2 row halo), 1 col left/right
    # (conv1 pad); channels zero-padded to a multiple of 128 (lane-dense).
    # TODO(synk): store these inputs in bf16 to halve HBM->VMEM traffic (kept f32
    # here so the in-kernel sub-lane tap slicing stays on unpacked data).
    def prep(a, cpad):
        return jnp.pad(
            a, ((0, 0), (2, 2), (1, 1), (0, cpad - a.shape[-1]))).astype(jnp.float32)

    xu_p = prep(xu, cxp)
    sk_p = prep(skip, csp)

    # conv1 weight (3, 3, cx+cs, out) HWIO, input channels ordered [x, skip] to
    # match torch.cat([x, skip], dim=1).  Split, channel-pad each part, re-concat
    # so rows line up with the kernel's per-tap [x_pad, skip_pad] patch layout,
    # then fold the 9 taps into the contraction dim.
    w1 = params["w1"].astype(jnp.float32)
    w1x = jnp.pad(w1[:, :, :cx, :],
                  ((0, 0), (0, 0), (0, cxp - cx), (0, cop - out_ch)))
    w1s = jnp.pad(w1[:, :, cx:, :],
                  ((0, 0), (0, 0), (0, csp - cs), (0, cop - out_ch)))
    w1p = jnp.concatenate([w1x, w1s], axis=2).reshape(9 * (cxp + csp), cop)
    w1p = w1p.astype(jnp.bfloat16)

    w2 = params["w2"].astype(jnp.float32)
    w2p = jnp.pad(w2, ((0, 0), (0, 0), (0, cop - out_ch), (0, cop - out_ch)))
    w2p = w2p.reshape(9 * cop, cop).astype(jnp.bfloat16)

    s1, b1 = fold_bn(params["bn1_gamma"], params["bn1_beta"],
                     params["bn1_mean"], params["bn1_var"])
    s2, b2 = fold_bn(params["bn2_gamma"], params["bn2_beta"],
                     params["bn2_mean"], params["bn2_var"])

    def pad_vec(v):
        return jnp.pad(v.astype(jnp.float32), (0, cop - out_ch)).reshape(1, cop)

    s1p, b1p, s2p, b2p = pad_vec(s1), pad_vec(b1), pad_vec(s2), pad_vec(b2)

    kernel = functools.partial(_decoder_block_kernel, th=th, hh=hh, ww=ww)

    # TODO(synk): for very large images, row-tile the input DMA as well (manual
    # halo DMA via pltpu.make_async_copy) so v7x's 64 MiB VMEM is never the limit;
    # at these sizes the whole padded image fits comfortably per grid step.
    out = pl.pallas_call(
        kernel,
        out_shape=jax.ShapeDtypeStruct((n, hh, ww, cop), jnp.float32),
        grid=(n, num_t),
        in_specs=[
            pl.BlockSpec((1, hh + 4, ww + 2, cxp), lambda i, t: (i, 0, 0, 0)),
            pl.BlockSpec((1, hh + 4, ww + 2, csp), lambda i, t: (i, 0, 0, 0)),
            pl.BlockSpec((9 * (cxp + csp), cop), lambda i, t: (0, 0)),
            pl.BlockSpec((9 * cop, cop), lambda i, t: (0, 0)),
            pl.BlockSpec((1, cop), lambda i, t: (0, 0)),
            pl.BlockSpec((1, cop), lambda i, t: (0, 0)),
            pl.BlockSpec((1, cop), lambda i, t: (0, 0)),
            pl.BlockSpec((1, cop), lambda i, t: (0, 0)),
        ],
        out_specs=pl.BlockSpec((1, th, ww, cop), lambda i, t: (i, t, 0, 0)),
        scratch_shapes=[pltpu.VMEM((th + 2, ww + 2, cop), jnp.float32)],
        compiler_params=pltpu.CompilerParams(
            dimension_semantics=("parallel", "parallel"),
            vmem_limit_bytes=48 * 1024 * 1024),
    )(xu_p, sk_p, w1p, w2p, s1p, b1p, s2p, b2p)

    out = out[..., :out_ch]                      # drop lane padding
    return jnp.transpose(out, (0, 3, 1, 2))      # back to NCHW at the boundary


def _reference_forward(x_nchw, skip_nchw, params):
    """Pure-JAX reference (lax conv; bf16 operands / f32 accumulate like the kernel)."""
    x = jnp.repeat(jnp.repeat(x_nchw, 2, axis=2), 2, axis=3)
    x = jnp.concatenate([x, skip_nchw], axis=1)
    x = jnp.transpose(x, (0, 2, 3, 1))  # NHWC

    def block(h, w, gamma, beta, mean, var):
        y = jax.lax.conv_general_dilated(
            h.astype(jnp.bfloat16), w.astype(jnp.bfloat16),
            window_strides=(1, 1), padding="SAME",
            dimension_numbers=("NHWC", "HWIO", "NHWC"),
            preferred_element_type=jnp.float32)
        s, b = fold_bn(gamma, beta, mean, var)
        return jnp.maximum(y * s + b, 0.0)

    x = block(x, params["w1"], params["bn1_gamma"], params["bn1_beta"],
              params["bn1_mean"], params["bn1_var"])
    x = block(x, params["w2"], params["bn2_gamma"], params["bn2_beta"],
              params["bn2_mean"], params["bn2_var"])
    return jnp.transpose(x, (0, 3, 1, 2))


if __name__ == "__main__":
    # Small shapes: in_channels=4, skip_channels=4, out_channels=8
    n = 2
    in_ch, skip_ch, out_ch = 4, 4, 8
    hs, ws = 8, 8                      # low-res input -> upsampled to 16x16
    hk, wk = 2 * hs, 2 * ws

    key = jax.random.PRNGKey(0)
    ks = jax.random.split(key, 12)

    x = jax.random.normal(ks[0], (n, in_ch, hs, ws), jnp.float32)
    skip = jax.random.normal(ks[1], (n, skip_ch, hk, wk), jnp.float32)

    cin1 = in_ch + skip_ch
    params = {
        # conv weights in HWIO layout (kernel uses NHWC / HWIO)
        "w1": jax.random.normal(ks[2], (3, 3, cin1, out_ch), jnp.float32) * 0.1,
        "bn1_gamma": jax.random.uniform(ks[3], (out_ch,), jnp.float32, 0.5, 1.5),
        "bn1_beta": jax.random.normal(ks[4], (out_ch,), jnp.float32) * 0.1,
        "bn1_mean": jax.random.normal(ks[5], (out_ch,), jnp.float32) * 0.1,
        "bn1_var": jax.random.uniform(ks[6], (out_ch,), jnp.float32, 0.5, 1.5),
        "w2": jax.random.normal(ks[7], (3, 3, out_ch, out_ch), jnp.float32) * 0.1,
        "bn2_gamma": jax.random.uniform(ks[8], (out_ch,), jnp.float32, 0.5, 1.5),
        "bn2_beta": jax.random.normal(ks[9], (out_ch,), jnp.float32) * 0.1,
        "bn2_mean": jax.random.normal(ks[10], (out_ch,), jnp.float32) * 0.1,
        "bn2_var": jax.random.uniform(ks[11], (out_ch,), jnp.float32, 0.5, 1.5),
    }

    out = jax.block_until_ready(decoder_block_forward(x, skip, params))
    ref = jax.block_until_ready(_reference_forward(x, skip, params))

    assert out.shape == (n, out_ch, hk, wk), out.shape
    max_err = float(jnp.max(jnp.abs(out - ref)))
    assert jnp.allclose(out, ref, atol=1e-2, rtol=1e-2), (
        f"mismatch vs reference (max abs err {max_err})")

    print("KERNEL_OK")
</pallas_src>

<mosaic_0001>
module attributes {stable_mosaic.version = 11 : i64} {
  func.func @_decoder_block_kernel(%arg0: i32, %arg1: i32, %arg2: memref<1x20x18x128xf32, #tpu.memory_space<vmem>>, %arg3: memref<1x20x18x128xf32, #tpu.memory_space<vmem>>, %arg4: memref<2304x128xbf16, #tpu.memory_space<vmem>>, %arg5: memref<1152x128xbf16, #tpu.memory_space<vmem>>, %arg6: memref<1x128xf32, #tpu.memory_space<vmem>>, %arg7: memref<1x128xf32, #tpu.memory_space<vmem>>, %arg8: memref<1x128xf32, #tpu.memory_space<vmem>>, %arg9: memref<1x128xf32, #tpu.memory_space<vmem>>, %arg10: memref<1x8x16x128xf32, #tpu.memory_space<vmem>>, %arg11: memref<10x18x128xf32, #tpu.memory_space<vmem>>) attributes {dimension_semantics = [#tpu.dimension_semantics<parallel>, #tpu.dimension_semantics<parallel>], iteration_bounds = array<i64: 2, 2>, scalar_prefetch = 0 : i64, scratch_operands = 1 : i64, tpu.core_type = #tpu.core_type<tc>, window_params = [{transform_indices = @transform_0, window_bounds = array<i64: 1, 20, 18, 128>}, {transform_indices = @transform_1, window_bounds = array<i64: 1, 20, 18, 128>}, {pipeline_mode = #tpu.pipeline_mode<synchronous>, transform_indices = @transform_2, window_bounds = array<i64: 2304, 128>}, {pipeline_mode = #tpu.pipeline_mode<synchronous>, transform_indices = @transform_3, window_bounds = array<i64: 1152, 128>}, {pipeline_mode = #tpu.pipeline_mode<synchronous>, transform_indices = @transform_4, window_bounds = array<i64: 1, 128>}, {pipeline_mode = #tpu.pipeline_mode<synchronous>, transform_indices = @transform_5, window_bounds = array<i64: 1, 128>}, {pipeline_mode = #tpu.pipeline_mode<synchronous>, transform_indices = @transform_6, window_bounds = array<i64: 1, 128>}, {pipeline_mode = #tpu.pipeline_mode<synchronous>, transform_indices = @transform_7, window_bounds = array<i64: 1, 128>}, {transform_indices = @transform_8, window_bounds = array<i64: 1, 8, 16, 128>}]} {
    %c8_i32 = arith.constant 8 : i32
    %0 = arith.muli %arg1, %c8_i32 : i32
    %c0_i32 = arith.constant 0 : i32
    %1 = arith.addi %0, %c0_i32 : i32
    %c0 = arith.constant 0 : index
    %2 = arith.index_cast %1 : i32 to index
    %c0_0 = arith.constant 0 : index
    %c0_1 = arith.constant 0 : index
    %3 = vector.load %arg2[%c0, %2, %c0_0, %c0_1] : memref<1x20x18x128xf32, #tpu.memory_space<vmem>>, vector<1x10x18x128xf32>
    %4 = vector.shape_cast %3 : vector<1x10x18x128xf32> to vector<10x18x128xf32>
    %c0_i32_2 = arith.constant 0 : i32
    %5 = arith.addi %0, %c0_i32_2 : i32
    %c0_3 = arith.constant 0 : index
    %6 = arith.index_cast %5 : i32 to index
    %c0_4 = arith.constant 0 : index
    %c0_5 = arith.constant 0 : index
    %7 = vector.load %arg3[%c0_3, %6, %c0_4, %c0_5] : memref<1x20x18x128xf32, #tpu.memory_space<vmem>>, vector<1x10x18x128xf32>
    %8 = vector.shape_cast %7 : vector<1x10x18x128xf32> to vector<10x18x128xf32>
    %9 = tpu.concatenate %4, %8 in 2 : vector<10x18x128xf32>, vector<10x18x128xf32> -> vector<10x18x256xf32>
    %c1_i32 = arith.constant 1 : i32
    %10 = arith.addi %0, %c1_i32 : i32
    %c0_6 = arith.constant 0 : index
    %11 = arith.index_cast %10 : i32 to index
    %c0_7 = arith.constant 0 : index
    %c0_8 = arith.constant 0 : index
    %12 = vector.load %arg2[%c0_6, %11, %c0_7, %c0_8] : memref<1x20x18x128xf32, #tpu.memory_space<vmem>>, vector<1x10x18x128xf32>
    %13 = vector.shape_cast %12 : vector<1x10x18x128xf32> to vector<10x18x128xf32>
    %c1_i32_9 = arith.constant 1 : i32
    %14 = arith.addi %0, %c1_i32_9 : i32
    %c0_10 = arith.constant 0 : index
    %15 = arith.index_cast %14 : i32 to index
    %c0_11 = arith.constant 0 : index
    %c0_12 = arith.constant 0 : index
    %16 = vector.load %arg3[%c0_10, %15, %c0_11, %c0_12] : memref<1x20x18x128xf32, #tpu.memory_space<vmem>>, vector<1x10x18x128xf32>
    %17 = vector.shape_cast %16 : vector<1x10x18x128xf32> to vector<10x18x128xf32>
    %18 = tpu.concatenate %13, %17 in 2 : vector<10x18x128xf32>, vector<10x18x128xf32> -> vector<10x18x256xf32>
    %c2_i32 = arith.constant 2 : i32
    %19 = arith.addi %0, %c2_i32 : i32
    %c0_13 = arith.constant 0 : index
    %20 = arith.index_cast %19 : i32 to index
    %c0_14 = arith.constant 0 : index
    %c0_15 = arith.constant 0 : index
    %21 = vector.load %arg2[%c0_13, %20, %c0_14, %c0_15] : memref<1x20x18x128xf32, #tpu.memory_space<vmem>>, vector<1x10x18x128xf32>
    %22 = vector.shape_cast %21 : vector<1x10x18x128xf32> to vector<10x18x128xf32>
    %c2_i32_16 = arith.constant 2 : i32
    %23 = arith.addi %0, %c2_i32_16 : i32
    %c0_17 = arith.constant 0 : index
    %24 = arith.index_cast %23 : i32 to index
    %c0_18 = arith.constant 0 : index
    %c0_19 = arith.constant 0 : index
    %25 = vector.load %arg3[%c0_17, %24, %c0_18, %c0_19] : memref<1x20x18x128xf32, #tpu.memory_space<vmem>>, vector<1x10x18x128xf32>
    %26 = vector.shape_cast %25 : vector<1x10x18x128xf32> to vector<10x18x128xf32>
    %27 = tpu.concatenate %22, %26 in 2 : vector<10x18x128xf32>, vector<10x18x128xf32> -> vector<10x18x256xf32>
    %28 = vector.extract_strided_slice %9 {offsets = [0, 0, 0], sizes = [10, 16, 256], strides = [1, 1, 1]} : vector<10x18x256xf32> to vector<10x16x256xf32>
    %29 = vector.extract_strided_slice %9 {offsets = [0, 1, 0], sizes = [10, 16, 256], strides = [1, 1, 1]} : vector<10x18x256xf32> to vector<10x16x256xf32>
    %30 = vector.extract_strided_slice %9 {offsets = [0, 2, 0], sizes = [10, 16, 256], strides = [1, 1, 1]} : vector<10x18x256xf32> to vector<10x16x256xf32>
    %31 = vector.extract_strided_slice %18 {offsets = [0, 0, 0], sizes = [10, 16, 256], strides = [1, 1, 1]} : vector<10x18x256xf32> to vector<10x16x256xf32>
    %32 = vector.extract_strided_slice %18 {offsets = [0, 1, 0], sizes = [10, 16, 256], strides = [1, 1, 1]} : vector<10x18x256xf32> to vector<10x16x256xf32>
    %33 = vector.extract_strided_slice %18 {offsets = [0, 2, 0], sizes = [10, 16, 256], strides = [1, 1, 1]} : vector<10x18x256xf32> to vector<10x16x256xf32>
    %34 = vector.extract_strided_slice %27 {offsets = [0, 0, 0], sizes = [10, 16, 256], strides = [1, 1, 1]} : vector<10x18x256xf32> to vector<10x16x256xf32>
    %35 = vector.extract_strided_slice %27 {offsets = [0, 1, 0], sizes = [10, 16, 256], strides = [1, 1, 1]} : vector<10x18x256xf32> to vector<10x16x256xf32>
    %36 = vector.extract_strided_slice %27 {offsets = [0, 2, 0], sizes = [10, 16, 256], strides = [1, 1, 1]} : vector<10x18x256xf32> to vector<10x16x256xf32>
    %37 = tpu.concatenate %28, %29, %30, %31, %32, %33, %34, %35, %36 in 2 : vector<10x16x256xf32>, vector<10x16x256xf32>, vector<10x16x256xf32>, vector<10x16x256xf32>, vector<10x16x256xf32>, vector<10x16x256xf32>, vector<10x16x256xf32>, vector<10x16x256xf32>, vector<10x16x256xf32> -> vector<10x16x2304xf32>
    %38 = vector.shape_cast %37 : vector<10x16x2304xf32> to vector<160x2304xf32>
    %39 = arith.truncf %38 : vector<160x2304xf32> to vector<160x2304xbf16>
    %c0_20 = arith.constant 0 : index
    %c0_21 = arith.constant 0 : index
    %40 = vector.load %arg4[%c0_20, %c0_21] : memref<2304x128xbf16, #tpu.memory_space<vmem>>, vector<2304x128xbf16>
    %cst = arith.constant dense<0.000000e+00> : vector<160x128xf32>
    %41 = tpu.matmul %39, %40, %cst {dimension_numbers = #tpu.dot_dimension_numbers<[1], [0], [0], [1], [0, 0, 1, 1], [], []>} : vector<160x2304xbf16>, vector<2304x128xbf16>, vector<160x128xf32> -> vector<160x128xf32>
    %c0_22 = arith.constant 0 : index
    %c0_23 = arith.constant 0 : index
    %42 = vector.load %arg6[%c0_22, %c0_23] : memref<1x128xf32, #tpu.memory_space<vmem>>, vector<1x128xf32>
    %43 = vector.shape_cast %42 : vector<1x128xf32> to vector<128xf32>
    %44 = vector.shape_cast %43 : vector<128xf32> to vector<1x128xf32>
    %45 = vector.broadcast %44 : vector<1x128xf32> to vector<160x128xf32>
    %46 = arith.mulf %41, %45 : vector<160x128xf32>
    %c0_24 = arith.constant 0 : index
    %c0_25 = arith.constant 0 : index
    %47 = vector.load %arg7[%c0_24, %c0_25] : memref<1x128xf32, #tpu.memory_space<vmem>>, vector<1x128xf32>
    %48 = vector.shape_cast %47 : vector<1x128xf32> to vector<128xf32>
    %49 = vector.shape_cast %48 : vector<128xf32> to vector<1x128xf32>
    %50 = vector.broadcast %49 : vector<1x128xf32> to vector<160x128xf32>
    %51 = arith.addf %46, %50 : vector<160x128xf32>
    %cst_26 = arith.constant 0.000000e+00 : f32
    %52 = vector.broadcast %cst_26 : f32 to vector<160x128xf32>
    %53 = arith.maximumf %51, %52 : vector<160x128xf32>
    %54 = vector.shape_cast %53 : vector<160x128xf32> to vector<10x16x128xf32>
    %c8_i32_27 = arith.constant 8 : i32
    %55 = arith.muli %arg1, %c8_i32_27 : i32
    %c1_i32_28 = arith.constant 1 : i32
    %56 = arith.subi %55, %c1_i32_28 : i32
    %57 = tpu.iota {dimensions = array<i32: 0>} : vector<10x16x128xi32>
    %58 = vector.broadcast %56 : i32 to vector<10x16x128xi32>
    %59 = arith.addi %58, %57 : vector<10x16x128xi32>
    %c0_i32_29 = arith.constant 0 : i32
    %60 = vector.broadcast %c0_i32_29 : i32 to vector<10x16x128xi32>
    %61 = arith.cmpi sge, %59, %60 : vector<10x16x128xi32>
    %c16_i32 = arith.constant 16 : i32
    %62 = vector.broadcast %c16_i32 : i32 to vector<10x16x128xi32>
    %63 = arith.cmpi slt, %59, %62 : vector<10x16x128xi32>
    %64 = arith.andi %61, %63 : vector<10x16x128xi1>
    %cst_30 = arith.constant 0.000000e+00 : f32
    %65 = vector.broadcast %cst_30 : f32 to vector<10x16x128xf32>
    %66 = arith.select %64, %54, %65 : vector<10x16x128xi1>, vector<10x16x128xf32>
    %cst_31 = arith.constant 0.000000e+00 : f32
    %67 = vector.broadcast %cst_31 : f32 to vector<10x18x128xf32>
    %c0_32 = arith.constant 0 : index
    %c0_33 = arith.constant 0 : index
    %c0_34 = arith.constant 0 : index
    %68 = vector.load %arg11[%c0_32, %c0_33, %c0_34] : memref<10x18x128xf32, #tpu.memory_space<vmem>>, vector<10x18x128xf32>
    tpu.vector_store %arg11[%c0_32, %c0_33, %c0_34], %67 {strides = array<i32>} : memref<10x18x128xf32, #tpu.memory_space<vmem>>, vector<10x18x128xf32>,
    %c0_35 = arith.constant 0 : index
    %c1 = arith.constant 1 : index
    %c0_36 = arith.constant 0 : index
    %69 = vector.load %arg11[%c0_35, %c1, %c0_36] : memref<10x18x128xf32, #tpu.memory_space<vmem>>, vector<10x16x128xf32>
    tpu.vector_store %arg11[%c0_35, %c1, %c0_36], %66 {strides = array<i32>} : memref<10x18x128xf32, #tpu.memory_space<vmem>>, vector<10x16x128xf32>,
    %c0_37 = arith.constant 0 : index
    %c0_38 = arith.constant 0 : index
    %c0_39 = arith.constant 0 : index
    %70 = vector.load %arg11[%c0_37, %c0_38, %c0_39] : memref<10x18x128xf32, #tpu.memory_space<vmem>>, vector<8x18x128xf32>
    %c1_40 = arith.constant 1 : index
    %c0_41 = arith.constant 0 : index
    %c0_42 = arith.constant 0 : index
    %71 = vector.load %arg11[%c1_40, %c0_41, %c0_42] : memref<10x18x128xf32, #tpu.memory_space<vmem>>, vector<8x18x128xf32>
    %c2 = arith.constant 2 : index
    %c0_43 = arith.constant 0 : index
    %c0_44 = arith.constant 0 : index
    %72 = vector.load %arg11[%c2, %c0_43, %c0_44] : memref<10x18x128xf32, #tpu.memory_space<vmem>>, vector<8x18x128xf32>
    %73 = vector.extract_strided_slice %70 {offsets = [0, 0, 0], sizes = [8, 16, 128], strides = [1, 1, 1]} : vector<8x18x128xf32> to vector<8x16x128xf32>
    %74 = vector.extract_strided_slice %70 {offsets = [0, 1, 0], sizes = [8, 16, 128], strides = [1, 1, 1]} : vector<8x18x128xf32> to vector<8x16x128xf32>
    %75 = vector.extract_strided_slice %70 {offsets = [0, 2, 0], sizes = [8, 16, 128], strides = [1, 1, 1]} : vector<8x18x128xf32> to vector<8x16x128xf32>
    %76 = vector.extract_strided_slice %71 {offsets = [0, 0, 0], sizes = [8, 16, 128], strides = [1, 1, 1]} : vector<8x18x128xf32> to vector<8x16x128xf32>
    %77 = vector.extract_strided_slice %71 {offsets = [0, 1, 0], sizes = [8, 16, 128], strides = [1, 1, 1]} : vector<8x18x128xf32> to vector<8x16x128xf32>
    %78 = vector.extract_strided_slice %71 {offsets = [0, 2, 0], sizes = [8, 16, 128], strides = [1, 1, 1]} : vector<8x18x128xf32> to vector<8x16x128xf32>
    %79 = vector.extract_strided_slice %72 {offsets = [0, 0, 0], sizes = [8, 16, 128], strides = [1, 1, 1]} : vector<8x18x128xf32> to vector<8x16x128xf32>
    %80 = vector.extract_strided_slice %72 {offsets = [0, 1, 0], sizes = [8, 16, 128], strides = [1, 1, 1]} : vector<8x18x128xf32> to vector<8x16x128xf32>
    %81 = vector.extract_strided_slice %72 {offsets = [0, 2, 0], sizes = [8, 16, 128], strides = [1, 1, 1]} : vector<8x18x128xf32> to vector<8x16x128xf32>
    %82 = tpu.concatenate %73, %74, %75, %76, %77, %78, %79, %80, %81 in 2 : vector<8x16x128xf32>, vector<8x16x128xf32>, vector<8x16x128xf32>, vector<8x16x128xf32>, vector<8x16x128xf32>, vector<8x16x128xf32>, vector<8x16x128xf32>, vector<8x16x128xf32>, vector<8x16x128xf32> -> vector<8x16x1152xf32>
    %83 = vector.shape_cast %82 : vector<8x16x1152xf32> to vector<128x1152xf32>
    %84 = arith.truncf %83 : vector<128x1152xf32> to vector<128x1152xbf16>
    %c0_45 = arith.constant 0 : index
    %c0_46 = arith.constant 0 : index
    %85 = vector.load %arg5[%c0_45, %c0_46] : memref<1152x128xbf16, #tpu.memory_space<vmem>>, vector<1152x128xbf16>
    %cst_47 = arith.constant dense<0.000000e+00> : vector<128x128xf32>
    %86 = tpu.matmul %84, %85, %cst_47 {dimension_numbers = #tpu.dot_dimension_numbers<[1], [0], [0], [1], [0, 0, 1, 1], [], []>} : vector<128x1152xbf16>, vector<1152x128xbf16>, vector<128x128xf32> -> vector<128x128xf32>
    %c0_48 = arith.constant 0 : index
    %c0_49 = arith.constant 0 : index
    %87 = vector.load %arg8[%c0_48, %c0_49] : memref<1x128xf32, #tpu.memory_space<vmem>>, vector<1x128xf32>
    %88 = vector.shape_cast %87 : vector<1x128xf32> to vector<128xf32>
    %89 = vector.shape_cast %88 : vector<128xf32> to vector<1x128xf32>
    %90 = vector.broadcast %89 : vector<1x128xf32> to vector<128x128xf32>
    %91 = arith.mulf %86, %90 : vector<128x128xf32>
    %c0_50 = arith.constant 0 : index
    %c0_51 = arith.constant 0 : index
    %92 = vector.load %arg9[%c0_50, %c0_51] : memref<1x128xf32, #tpu.memory_space<vmem>>, vector<1x128xf32>
    %93 = vector.shape_cast %92 : vector<1x128xf32> to vector<128xf32>
    %94 = vector.shape_cast %93 : vector<128xf32> to vector<1x128xf32>
    %95 = vector.broadcast %94 : vector<1x128xf32> to vector<128x128xf32>
    %96 = arith.addf %91, %95 : vector<128x128xf32>
    %cst_52 = arith.constant 0.000000e+00 : f32
    %97 = vector.broadcast %cst_52 : f32 to vector<128x128xf32>
    %98 = arith.maximumf %96, %97 : vector<128x128xf32>
    %99 = vector.shape_cast %98 : vector<128x128xf32> to vector<8x16x128xf32>
    %c0_53 = arith.constant 0 : index
    %c0_54 = arith.constant 0 : index
    %c0_55 = arith.constant 0 : index
    %c0_56 = arith.constant 0 : index
    %100 = vector.load %arg10[%c0_53, %c0_54, %c0_55, %c0_56] : memref<1x8x16x128xf32, #tpu.memory_space<vmem>>, vector<1x8x16x128xf32>
    %101 = vector.shape_cast %100 : vector<1x8x16x128xf32> to vector<8x16x128xf32>
    %102 = vector.shape_cast %99 : vector<8x16x128xf32> to vector<1x8x16x128xf32>
    tpu.vector_store %arg10[%c0_53, %c0_54, %c0_55, %c0_56], %102 {strides = array<i32>} : memref<1x8x16x128xf32, #tpu.memory_space<vmem>>, vector<1x8x16x128xf32>,
    return
  }
  func.func @transform_0(%arg0: i32, %arg1: i32) -> (i32, i32, i32, i32) {
    %c0_i32 = arith.constant 0 : i32
    %c0_i32_0 = arith.constant 0 : i32
    %c0_i32_1 = arith.constant 0 : i32
    %c0_i32_2 = arith.constant 0 : i32
    return %arg0, %c0_i32, %c0_i32_0, %c0_i32_1 : i32, i32, i32, i32
  }
  func.func @transform_1(%arg0: i32, %arg1: i32) -> (i32, i32, i32, i32) {
    %c0_i32 = arith.constant 0 : i32
    %c0_i32_0 = arith.constant 0 : i32
    %c0_i32_1 = arith.constant 0 : i32
    %c0_i32_2 = arith.constant 0 : i32
    return %arg0, %c0_i32, %c0_i32_0, %c0_i32_1 : i32, i32, i32, i32
  }
  func.func @transform_2(%arg0: i32, %arg1: i32) -> (i32, i32) {
    %c0_i32 = arith.constant 0 : i32
    %c0_i32_0 = arith.constant 0 : i32
    %c0_i32_1 = arith.constant 0 : i32
    return %c0_i32, %c0_i32_0 : i32, i32
  }
  func.func @transform_3(%arg0: i32, %arg1: i32) -> (i32, i32) {
    %c0_i32 = arith.constant 0 : i32
    %c0_i32_0 = arith.constant 0 : i32
    %c0_i32_1 = arith.constant 0 : i32
    return %c0_i32, %c0_i32_0 : i32, i32
  }
  func.func @transform_4(%arg0: i32, %arg1: i32) -> (i32, i32) {
    %c0_i32 = arith.constant 0 : i32
    %c0_i32_0 = arith.constant 0 : i32
    %c0_i32_1 = arith.constant 0 : i32
    return %c0_i32, %c0_i32_0 : i32, i32
  }
  func.func @transform_5(%arg0: i32, %arg1: i32) -> (i32, i32) {
    %c0_i32 = arith.constant 0 : i32
    %c0_i32_0 = arith.constant 0 : i32
    %c0_i32_1 = arith.constant 0 : i32
    return %c0_i32, %c0_i32_0 : i32, i32
  }
  func.func @transform_6(%arg0: i32, %arg1: i32) -> (i32, i32) {
    %c0_i32 = arith.constant 0 : i32
    %c0_i32_0 = arith.constant 0 : i32
    %c0_i32_1 = arith.constant 0 : i32
    return %c0_i32, %c0_i32_0 : i32, i32
  }
  func.func @transform_7(%arg0: i32, %arg1: i32) -> (i32, i32) {
    %c0_i32 = arith.constant 0 : i32
    %c0_i32_0 = arith.constant 0 : i32
    %c0_i32_1 = arith.constant 0 : i32
    return %c0_i32, %c0_i32_0 : i32, i32
  }
  func.func @transform_8(%arg0: i32, %arg1: i32) -> (i32, i32, i32, i32) {
    %c0_i32 = arith.constant 0 : i32
    %c0_i32_0 = arith.constant 0 : i32
    %c0_i32_1 = arith.constant 0 : i32
    return %arg0, %arg1, %c0_i32, %c0_i32_0 : i32, i32, i32, i32
  }
}

</mosaic_0001>

<llo_original>
// kernel: decoder_block_forward.1
$region0: #{decoder_block_forward.1}
  #allocation0 [shape = 'u32[]', space=smem, size = 0x4, offset = 0x4, fixed_abs, tag = 'smem constant byte address 0x4 - core index']
  #allocation1 [shape = 'u32[144,128]{1,0:T(1,128)}', space=vmem, size = 0x12000, scoped, tag = 'internal scratch']
  #allocation2 [shape = 'f32[10,18,128]{2,1,0:T(8,128)}', space=vmem, size = 0x1e000, scoped, tag = 'scratch operand']
  %s0 = inlined_call_operand.vmem [shape: f32[2,20,18,128], index: 0, kind: input, shape index: {}]
  %s1 = inlined_call_operand.vmem [shape: f32[2,20,18,128], index: 1, kind: input, shape index: {}]
  %s2 = inlined_call_operand.vmem [shape: bf16[2304,128], index: 2, kind: input, shape index: {}]
  %s3 = inlined_call_operand.vmem [shape: bf16[1152,128], index: 3, kind: input, shape index: {}]
  %s4 = inlined_call_operand.vmem [shape: f32[1,128], index: 4, kind: input, shape index: {}]
  %s5 = inlined_call_operand.vmem [shape: f32[1,128], index: 5, kind: input, shape index: {}]
  %s6 = inlined_call_operand.vmem [shape: f32[1,128], index: 6, kind: input, shape index: {}]
  %s7 = inlined_call_operand.vmem [shape: f32[1,128], index: 7, kind: input, shape index: {}]
  %s8 = inlined_call_operand.vmem [shape: f32[2,16,16,128], index: 8, kind: output, shape index: {}]
  %s9 = sld [smem:[#allocation0]]
  $region65: #{decoder_block_forward.1} parent=0
    _
  %s11 = ssub.s32 1, %s9
  %s12 = scalar_select 0, %s11, %s9
  loop: start=0, step=1, limit=6
  $region2: #{decoder_block_forward.1} parent=0 // loop_pre_header
    _
  $region3: #{decoder_block_forward.1} parent=0 // loop_header
    %s14 = sphi 0, %s18
    %p15 = scmp.ge.s32.totalorder %s14, 6
    %s21 = sphi 0, %s33
    %s22 = sphi 0, %s29
    %s23 = sphi 0, %s21
    %s24 = sphi 0, %s22
    %s25 = sphi 0, %s23
    %s26 = sphi 0, %s24
    %s36 = sphi 0, %s38
    %s39 = sphi 0, %s36
    %s40 = sphi 0, %s39
    %s56 = sphi 0, %s40
    %s62 = sphi 0, %s64
    %s65 = sphi 0, %s62
    %s66 = sphi 0, %s65
    %s82 = sphi 0, %s66
    %s86 = sphi 0, %s86
    %s88 = sphi 0, %s86
    %s89 = sphi 0, %s88
    %s103 = sphi 0, %s89
    %s107 = sphi 0, %s107
    %s109 = sphi 0, %s107
    %s110 = sphi 0, %s109
    %s124 = sphi 0, %s110
    %s128 = sphi 0, %s128
    %s130 = sphi 0, %s128
    %s131 = sphi 0, %s130
    %s145 = sphi 0, %s131
    %s149 = sphi 0, %s149
    %s151 = sphi 0, %s149
    %s152 = sphi 0, %s151
    %s166 = sphi 0, %s152
    %s170 = sphi 0, %s170
    %s172 = sphi 0, %s170
    %s173 = sphi 0, %s172
    %s187 = sphi 0, %s173
    %s191 = sphi 0, %s191
    %s193 = sphi 0, %s191
    %s194 = sphi 0, %s193
    %s208 = sphi 0, %s194
    %s216 = sphi 0, %s218
    %s219 = sphi 0, %s216
    %s220 = sphi 0, %s219
    %s236 = sphi 0, %s220
  $region4: #{decoder_block_forward.1} parent=0 // loop_header_branch
    %17 = sbr.rel (%p15) target = $region8
  $region5: #{decoder_block_forward.1} parent=0 // loop_body
    %s19 = ssub.s32 %s14, 1
    %s20 = ssub.s32 %s14, 2
    %s27 = sadd.s32 1, %s22
    %p28 = scmp.ge.s32.totalorder %s27, 2
    %s29 = scalar_select %p28, 0, %s27
    %s30 = sadd.s32 1, %s21
    %s31 = scalar_select %p28, %s30, %s21
    %p32 = scmp.ge.s32.totalorder %s31, 2
    %s33 = scalar_select %p32, 0, %s31
    %s34 = ssub.s32 %s21, %s33
    %p35 = scmp.eq.s32.totalorder %s34, 0
    %s37 = sadd.s32 %s36, 1
    %s38 = scalar_select %p35, %s36, %s37
    %p41 = pneg %p35
    %p42 = scmp.eq.s32.totalorder %s14, 3
    %p43 = por %p41, %p42
    %p44 = scmp.ne.s32.totalorder %s36, %s39
    %p45 = scmp.eq.s32.totalorder %s14, 0
    %p46 = por %p44, %p45
    %p47 = scmp.ne.s32.totalorder %s36, %s39
    %p48 = scmp.eq.s32.totalorder %s19, 3
    %p49 = por %p47, %p48
    %p50 = scmp.ne.s32.totalorder %s39, %s40
    %p51 = scmp.eq.s32.totalorder %s19, 0
    %p52 = por %p50, %p51
    %p53 = scmp.ne.s32.totalorder %s39, %s40
    %p54 = scmp.eq.s32.totalorder %s20, 3
    %p55 = por %p53, %p54
    %p57 = scmp.ne.s32.totalorder %s40, %s56
    %p58 = scmp.eq.s32.totalorder %s20, 0
    %p59 = por %p57, %p58
    %s60 = ssub.s32 %s21, %s33
    %p61 = scmp.eq.s32.totalorder %s60, 0
    %s63 = sadd.s32 %s62, 1
    %s64 = scalar_select %p61, %s62, %s63
    %p67 = pneg %p61
    %p68 = scmp.eq.s32.totalorder %s14, 3
    %p69 = por %p67, %p68
    %p70 = scmp.ne.s32.totalorder %s62, %s65
    %p71 = scmp.eq.s32.totalorder %s14, 0
    %p72 = por %p70, %p71
    %p73 = scmp.ne.s32.totalorder %s62, %s65
    %p74 = scmp.eq.s32.totalorder %s19, 3
    %p75 = por %p73, %p74
    %p76 = scmp.ne.s32.totalorder %s65, %s66
    %p77 = scmp.eq.s32.totalorder %s19, 0
    %p78 = por %p76, %p77
    %p79 = scmp.ne.s32.totalorder %s65, %s66
    %p80 = scmp.eq.s32.totalorder %s20, 3
    %p81 = por %p79, %p80
    %p83 = scmp.ne.s32.totalorder %s66, %s82
    %p84 = scmp.eq.s32.totalorder %s20, 0
    %p85 = por %p83, %p84
    %s87 = sadd.s32 %s86, 1
    %p90 = scmp.eq.s32.totalorder %s14, 3
    %p91 = scmp.ne.s32.totalorder %s86, %s88
    %p92 = scmp.eq.s32.totalorder %s14, 0
    %p93 = por %p91, %p92
    %p94 = scmp.ne.s32.totalorder %s86, %s88
    %p95 = scmp.eq.s32.totalorder %s19, 3
    %p96 = por %p94, %p95
    %p97 = scmp.ne.s32.totalorder %s88, %s89
    %p98 = scmp.eq.s32.totalorder %s19, 0
    %p99 = por %p97, %p98
    %p100 = scmp.ne.s32.totalorder %s88, %s89
    %p101 = scmp.eq.s32.totalorder %s20, 3
    %p102 = por %p100, %p101
    %p104 = scmp.ne.s32.totalorder %s89, %s103
    %p105 = scmp.eq.s32.totalorder %s20, 0
    %p106 = por %p104, %p105
    %s108 = sadd.s32 %s107, 1
    %p111 = scmp.eq.s32.totalorder %s14, 3
    %p112 = scmp.ne.s32.totalorder %s107, %s109
    %p113 = scmp.eq.s32.totalorder %s14, 0
    %p114 = por %p112, %p113
    %p115 = scmp.ne.s32.totalorder %s107, %s109
    %p116 = scmp.eq.s32.totalorder %s19, 3
    %p117 = por %p115, %p116
    %p118 = scmp.ne.s32.totalorder %s109, %s110
    %p119 = scmp.eq.s32.totalorder %s19, 0
    %p120 = por %p118, %p119
    %p121 = scmp.ne.s32.totalorder %s109, %s110
    %p122 = scmp.eq.s32.totalorder %s20, 3
    %p123 = por %p121, %p122
    %p125 = scmp.ne.s32.totalorder %s110, %s124
    %p126 = scmp.eq.s32.totalorder %s20, 0
    %p127 = por %p125, %p126
    %s129 = sadd.s32 %s128, 1
    %p132 = scmp.eq.s32.totalorder %s14, 3
    %p133 = scmp.ne.s32.totalorder %s128, %s130
    %p134 = scmp.eq.s32.totalorder %s14, 0
    %p135 = por %p133, %p134
    %p136 = scmp.ne.s32.totalorder %s128, %s130
    %p137 = scmp.eq.s32.totalorder %s19, 3
    %p138 = por %p136, %p137
    %p139 = scmp.ne.s32.totalorder %s130, %s131
    %p140 = scmp.eq.s32.totalorder %s19, 0
    %p141 = por %p139, %p140
    %p142 = scmp.ne.s32.totalorder %s130, %s131
    %p143 = scmp.eq.s32.totalorder %s20, 3
    %p144 = por %p142, %p143
    %p146 = scmp.ne.s32.totalorder %s131, %s145
    %p147 = scmp.eq.s32.totalorder %s20, 0
    %p148 = por %p146, %p147
    %s150 = sadd.s32 %s149, 1
    %p153 = scmp.eq.s32.totalorder %s14, 3
    %p154 = scmp.ne.s32.totalorder %s149, %s151
    %p155 = scmp.eq.s32.totalorder %s14, 0
    %p156 = por %p154, %p155
    %p157 = scmp.ne.s32.totalorder %s149, %s151
    %p158 = scmp.eq.s32.totalorder %s19, 3
    %p159 = por %p157, %p158
    %p160 = scmp.ne.s32.totalorder %s151, %s152
    %p161 = scmp.eq.s32.totalorder %s19, 0
    %p162 = por %p160, %p161
    %p163 = scmp.ne.s32.totalorder %s151, %s152
    %p164 = scmp.eq.s32.totalorder %s20, 3
    %p165 = por %p163, %p164
    %p167 = scmp.ne.s32.totalorder %s152, %s166
    %p168 = scmp.eq.s32.totalorder %s20, 0
    %p169 = por %p167, %p168
    %s171 = sadd.s32 %s170, 1
    %p174 = scmp.eq.s32.totalorder %s14, 3
    %p175 = scmp.ne.s32.totalorder %s170, %s172
    %p176 = scmp.eq.s32.totalorder %s14, 0
    %p177 = por %p175, %p176
    %p178 = scmp.ne.s32.totalorder %s170, %s172
    %p179 = scmp.eq.s32.totalorder %s19, 3
    %p180 = por %p178, %p179
    %p181 = scmp.ne.s32.totalorder %s172, %s173
    %p182 = scmp.eq.s32.totalorder %s19, 0
    %p183 = por %p181, %p182
    %p184 = scmp.ne.s32.totalorder %s172, %s173
    %p185 = scmp.eq.s32.totalorder %s20, 3
    %p186 = por %p184, %p185
    %p188 = scmp.ne.s32.totalorder %s173, %s187
    %p189 = scmp.eq.s32.totalorder %s20, 0
    %p190 = por %p188, %p189
    %s192 = sadd.s32 %s191, 1
    %p195 = scmp.eq.s32.totalorder %s14, 3
    %p196 = scmp.ne.s32.totalorder %s191, %s193
    %p197 = scmp.eq.s32.totalorder %s14, 0
    %p198 = por %p196, %p197
    %p199 = scmp.ne.s32.totalorder %s191, %s193
    %p200 = scmp.eq.s32.totalorder %s19, 3
    %p201 = por %p199, %p200
    %p202 = scmp.ne.s32.totalorder %s193, %s194
    %p203 = scmp.eq.s32.totalorder %s19, 0
    %p204 = por %p202, %p203
    %p205 = scmp.ne.s32.totalorder %s193, %s194
    %p206 = scmp.eq.s32.totalorder %s20, 3
    %p207 = por %p205, %p206
    %p209 = scmp.ne.s32.totalorder %s194, %s208
    %p210 = scmp.eq.s32.totalorder %s20, 0
    %p211 = por %p209, %p210
    %s212 = ssub.s32 %s21, %s33
    %s213 = ssub.s32 %s22, %s29
    %s214 = sor.u32 %s212, %s213
    %p215 = scmp.eq.s32.totalorder %s214, 0
    %s217 = sadd.s32 %s216, 1
    %s218 = scalar_select %p215, %s216, %s217
    %p221 = pneg %p215
    %p222 = scmp.eq.s32.totalorder %s14, 3
    %p223 = por %p221, %p222
    %p224 = scmp.ne.s32.totalorder %s216, %s219
    %p225 = scmp.eq.s32.totalorder %s14, 0
    %p226 = por %p224, %p225
    %p227 = scmp.ne.s32.totalorder %s216, %s219
    %p228 = scmp.eq.s32.totalorder %s19, 3
    %p229 = por %p227, %p228
    %p230 = scmp.ne.s32.totalorder %s219, %s220
    %p231 = scmp.eq.s32.totalorder %s19, 0
    %p232 = por %p230, %p231
    %p233 = scmp.ne.s32.totalorder %s219, %s220
    %p234 = scmp.eq.s32.totalorder %s20, 3
    %p235 = por %p233, %p234
    %p237 = scmp.ne.s32.totalorder %s220, %s236
    %p238 = scmp.eq.s32.totalorder %s20, 0
    %p239 = por %p237, %p238
    %p240 = scmp.le.s32.totalorder 1, %s14
    %p241 = scmp.lt.s32.totalorder %s14, 5
    %p242 = pnand %p240, %p241
    %p243 = pneg %p242
    // Predicated region
    $region9: #{decoder_block_forward.1} parent=5 // pred_check
      _
    $region10: #{decoder_block_forward.1} parent=5 // pred_check_branch
      %245 = sbr.rel (%p242) target = $region12
    $region11: #{decoder_block_forward.1} parent=5 // pred_region
      %s246 = ssub.s32 %s14, 1
      // Predicated region
      $region13: #{decoder_block_forward.1} parent=11 // pred_check
        %p247 = pneg %p99
      $region14: #{decoder_block_forward.1} parent=11 // pred_check_branch
        %249 = sbr.rel (%p247) target = $region16
      $region15: #{decoder_block_forward.1} parent=11 // pred_region
        _
      $region16: #{decoder_block_forward.1} parent=11 // pred_fallthru
        _
      // Predicated region
      $region17: #{decoder_block_forward.1} parent=11 // pred_check
        %p250 = pneg %p120
      $region18: #{decoder_block_forward.1} parent=11 // pred_check_branch
        %252 = sbr.rel (%p250) target = $region20
      $region19: #{decoder_block_forward.1} parent=11 // pred_region
        _
      $region20: #{decoder_block_forward.1} parent=11 // pred_fallthru
        _
      // Predicated region
      $region21: #{decoder_block_forward.1} parent=11 // pred_check
        %p253 = pneg %p141
      $region22: #{decoder_block_forward.1} parent=11 // pred_check_branch
        %255 = sbr.rel (%p253) target = $region24
      $region23: #{decoder_block_forward.1} parent=11 // pred_region
        _
      $region24: #{decoder_block_forward.1} parent=11 // pred_fallthru
        _
      // Predicated region
      $region25: #{decoder_block_forward.1} parent=11 // pred_check
        %p256 = pneg %p162
      $region26: #{decoder_block_forward.1} parent=11 // pred_check_branch
        %258 = sbr.rel (%p256) target = $region28
      $region27: #{decoder_block_forward.1} parent=11 // pred_region
        _
      $region28: #{decoder_block_forward.1} parent=11 // pred_fallthru
        _
      // Predicated region
      $region29: #{decoder_block_forward.1} parent=11 // pred_check
        %p259 = pneg %p183
      $region30: #{decoder_block_forward.1} parent=11 // pred_check_branch
        %261 = sbr.rel (%p259) target = $region32
      $region31: #{decoder_block_forward.1} parent=11 // pred_region
        _
      $region32: #{decoder_block_forward.1} parent=11 // pred_fallthru
        _
      // Predicated region
      $region33: #{decoder_block_forward.1} parent=11 // pred_check
        %p262 = pneg %p204
      $region34: #{decoder_block_forward.1} parent=11 // pred_check_branch
        %264 = sbr.rel (%p262) target = $region36
      $region35: #{decoder_block_forward.1} parent=11 // pred_region
        _
      $region36: #{decoder_block_forward.1} parent=11 // pred_fallthru
        _
    $region12: #{decoder_block_forward.1} parent=5 // pred_fallthru
      _
    %p265 = scmp.lt.s32.totalorder %s14, 4
    // Predicated region
    $region37: #{decoder_block_forward.1} parent=5 // pred_check
      %p266 = pneg %p265
    $region38: #{decoder_block_forward.1} parent=5 // pred_check_branch
      %268 = sbr.rel (%p266) target = $region40
    $region39: #{decoder_block_forward.1} parent=5 // pred_region
      // Predicated region
      $region41: #{decoder_block_forward.1} parent=39 // pred_check
        %p269 = pneg %p46
      $region42: #{decoder_block_forward.1} parent=39 // pred_check_branch
        %271 = sbr.rel (%p269) target = $region44
      $region43: #{decoder_block_forward.1} parent=39 // pred_region
        %p272 = scmp.lt.s32.totalorder %s21, 1
        %s273 = scalar_select %p272, %s21, 1
        %s274 = smul.addr %s273, 60
        %s275 = smul.addr %s274, 8
        %s276 = scalar_lea.vmem %s0, %s275
      $region44: #{decoder_block_forward.1} parent=39 // pred_fallthru
        _
      // Predicated region
      $region45: #{decoder_block_forward.1} parent=39 // pred_check
        %p277 = pneg %p72
      $region46: #{decoder_block_forward.1} parent=39 // pred_check_branch
        %279 = sbr.rel (%p277) target = $region48
      $region47: #{decoder_block_forward.1} parent=39 // pred_region
        %p280 = scmp.lt.s32.totalorder %s21, 1
        %s281 = scalar_select %p280, %s21, 1
        %s282 = smul.addr %s281, 60
        %s283 = smul.addr %s282, 8
        %s284 = scalar_lea.vmem %s1, %s283
      $region48: #{decoder_block_forward.1} parent=39 // pred_fallthru
        _
    $region40: #{decoder_block_forward.1} parent=5 // pred_fallthru
      _
    %p285 = scmp.le.s32.totalorder 1, %s14
    %p286 = scmp.lt.s32.totalorder %s14, 5
    %p287 = pnand %p285, %p286
    %p288 = pneg %p287
    // Predicated region
    $region49: #{decoder_block_forward.1} parent=5 // pred_check
      _
    $region50: #{decoder_block_forward.1} parent=5 // pred_check_branch
      %290 = sbr.rel (%p287) target = $region52
    $region51: #{decoder_block_forward.1} parent=5 // pred_region
      %s291 = ssub.s32 %s14, 1
      %p292 = scmp.lt.s32.totalorder %s23, 1
      %s293 = scalar_select %p292, %s23, 1
      %s294 = smul.addr %s293, 60
      %s295 = smul.addr %s294, 8
      %s296 = scalar_lea.vmem %s0, %s295
      %p297 = pneg %p52
      %p298 = pneg %p49
      %p299 = scmp.lt.s32.totalorder %s23, 1
      %s300 = scalar_select %p299, %s23, 1
      %s301 = smul.addr %s300, 60
      %s302 = smul.addr %s301, 8
      %s303 = scalar_lea.vmem %s1, %s302
      %p304 = pneg %p78
      %p305 = pneg %p75
      %p306 = pneg %p99
      %p307 = pneg %p96
      %p308 = pneg %p120
      %p309 = pneg %p117
      %p310 = pneg %p141
      %p311 = pneg %p138
      %p312 = pneg %p162
      %p313 = pneg %p159
      %p314 = pneg %p183
      %p315 = pneg %p180
      %p316 = pneg %p204
      %p317 = pneg %p201
      %p318 = pneg %p232
      %p319 = pneg %p229
      %s320 = smul.u32 8, %s24
      %p321 = scmp.lt.s32.totalorder %s23, 1
      %s322 = scalar_select %p321, %s23, 1
      %p323 = scmp.lt.s32.totalorder %s320, 15
      %s324 = scalar_select %p323, %s320, 15
      %s325 = smul.addr %s324, 2
      %s326 = smul.addr %s322, 32
      %s327 = sadd.s32 %s325, %s326
      %s328 = smul.addr %s327, 8
      %s329 = scalar_lea.vmem %s8, %s328
      %p330 = scmp.lt.s32.totalorder %s23, 1
      %s331 = scalar_select %p330, %s23, 1
      %s332 = smul.addr %s331, 60
      %s333 = smul.addr %s332, 8
      %s334 = scalar_lea.vmem %s0, %s333
      %p335 = scmp.lt.s32.totalorder %s23, 1
      %s336 = scalar_select %p335, %s23, 1
      %s337 = smul.addr %s336, 60
      %s338 = smul.addr %s337, 8
      %s339 = scalar_lea.vmem %s1, %s338
      %s340 = smul.u32 8, %s24
      %p341 = scmp.lt.s32.totalorder %s23, 1
      %s342 = scalar_select %p341, %s23, 1
      %p343 = scmp.lt.s32.totalorder %s340, 15
      %s344 = scalar_select %p343, %s340, 15
      %s345 = smul.addr %s344, 2
      %s346 = smul.addr %s342, 32
      %s347 = sadd.s32 %s345, %s346
      %s348 = smul.addr %s347, 8
      %s349 = scalar_lea.vmem %s8, %s348
      %s350 = smul.u32 8, %s24
      %s352 = smul.u32 %s24, 8
      %s353 = smul.u32 %s352, 24
      %s354 = scalar_lea.vmem %s334, %s353
      %v355 = vld [vmem:[%s354] sm:$0xff]
      %v356 = vld [vmem:[%s354 + $0x8] sm:$0xff]
      %v357 = vld [vmem:[%s354 + $0x10] sm:$0x3]
      %v358 = vld [vmem:[%s354 + $0x18] sm:$0xff]
      %v359 = vld [vmem:[%s354 + $0x20] sm:$0xff]
      %v360 = vld [vmem:[%s354 + $0x28] sm:$0x3]
      %v361 = vld [vmem:[%s354 + $0x30] sm:$0xff]
      %v362 = vld [vmem:[%s354 + $0x38] sm:$0xff]
      %v363 = vld [vmem:[%s354 + $0x40] sm:$0x3]
      %v364 = vld [vmem:[%s354 + $0x48] sm:$0xff]
      %v365 = vld [vmem:[%s354 + $0x50] sm:$0xff]
      %v366 = vld [vmem:[%s354 + $0x58] sm:$0x3]
      %v367 = vld [vmem:[%s354 + $0x60] sm:$0xff]
      %v368 = vld [vmem:[%s354 + $0x68] sm:$0xff]
      %v369 = vld [vmem:[%s354 + $0x70] sm:$0x3]
      %v370 = vld [vmem:[%s354 + $0x78] sm:$0xff]
      %v371 = vld [vmem:[%s354 + $0x80] sm:$0xff]
      %v372 = vld [vmem:[%s354 + $0x88] sm:$0x3]
      %v373 = vld [vmem:[%s354 + $0x90] sm:$0xff]
      %v374 = vld [vmem:[%s354 + $0x98] sm:$0xff]
      %v375 = vld [vmem:[%s354 + $0xa0] sm:$0x3]
      %v376 = vld [vmem:[%s354 + $0xa8] sm:$0xff]
      %v377 = vld [vmem:[%s354 + $0xb0] sm:$0xff]
      %v378 = vld [vmem:[%s354 + $0xb8] sm:$0x3]
      %v379 = vld [vmem:[%s354 + $0xc0] sm:$0xff]
      %v380 = vld [vmem:[%s354 + $0xc8] sm:$0xff]
      %v381 = vld [vmem:[%s354 + $0xd0] sm:$0x3]
      %v382 = vld [vmem:[%s354 + $0xd8] sm:$0xff]
      %v383 = vld [vmem:[%s354 + $0xe0] sm:$0xff]
      %v384 = vld [vmem:[%s354 + $0xe8] sm:$0x3]
      %s385 = scalar_lea.vmem %s339, %s353
      %v386 = vld [vmem:[%s385] sm:$0xff]
      %v387 = vld [vmem:[%s385 + $0x8] sm:$0xff]
      %v388 = vld [vmem:[%s385 + $0x10] sm:$0x3]
      %v389 = vld [vmem:[%s385 + $0x18] sm:$0xff]
      %v390 = vld [vmem:[%s385 + $0x20] sm:$0xff]
      %v391 = vld [vmem:[%s385 + $0x28] sm:$0x3]
      %v392 = vld [vmem:[%s385 + $0x30] sm:$0xff]
      %v393 = vld [vmem:[%s385 + $0x38] sm:$0xff]
      %v394 = vld [vmem:[%s385 + $0x40] sm:$0x3]
      %v395 = vld [vmem:[%s385 + $0x48] sm:$0xff]
      %v396 = vld [vmem:[%s385 + $0x50] sm:$0xff]
      %v397 = vld [vmem:[%s385 + $0x58] sm:$0x3]
      %v398 = vld [vmem:[%s385 + $0x60] sm:$0xff]
      %v399 = vld [vmem:[%s385 + $0x68] sm:$0xff]
      %v400 = vld [vmem:[%s385 + $0x70] sm:$0x3]
      %v401 = vld [vmem:[%s385 + $0x78] sm:$0xff]
      %v402 = vld [vmem:[%s385 + $0x80] sm:$0xff]
      %v403 = vld [vmem:[%s385 + $0x88] sm:$0x3]
      %v404 = vld [vmem:[%s385 + $0x90] sm:$0xff]
      %v405 = vld [vmem:[%s385 + $0x98] sm:$0xff]
      %v406 = vld [vmem:[%s385 + $0xa0] sm:$0x3]
      %v407 = vld [vmem:[%s385 + $0xa8] sm:$0xff]
      %v408 = vld [vmem:[%s385 + $0xb0] sm:$0xff]
      %v409 = vld [vmem:[%s385 + $0xb8] sm:$0x3]
      %v410 = vld [vmem:[%s385 + $0xc0] sm:$0xff]
      %v411 = vld [vmem:[%s385 + $0xc8] sm:$0xff]
      %v412 = vld [vmem:[%s385 + $0xd0] sm:$0x3]
      %v413 = vld [vmem:[%s385 + $0xd8] sm:$0xff]
      %v414 = vld [vmem:[%s385 + $0xe0] sm:$0xff]
      %v415 = vld [vmem:[%s385 + $0xe8] sm:$0x3]
      %s416 = sadd.s32 %s352, 1
      %s417 = smul.u32 %s416, 24
      %s418 = scalar_lea.vmem %s334, %s417
      %v419 = vld [vmem:[%s418] sm:$0xff]
      %v420 = vld [vmem:[%s418 + $0x8] sm:$0xff]
      %v421 = vld [vmem:[%s418 + $0x10] sm:$0x3]
      %v422 = vld [vmem:[%s418 + $0x18] sm:$0xff]
      %v423 = vld [vmem:[%s418 + $0x20] sm:$0xff]
      %v424 = vld [vmem:[%s418 + $0x28] sm:$0x3]
      %v425 = vld [vmem:[%s418 + $0x30] sm:$0xff]
      %v426 = vld [vmem:[%s418 + $0x38] sm:$0xff]
      %v427 = vld [vmem:[%s418 + $0x40] sm:$0x3]
      %v428 = vld [vmem:[%s418 + $0x48] sm:$0xff]
      %v429 = vld [vmem:[%s418 + $0x50] sm:$0xff]
      %v430 = vld [vmem:[%s418 + $0x58] sm:$0x3]
      %v431 = vld [vmem:[%s418 + $0x60] sm:$0xff]
      %v432 = vld [vmem:[%s418 + $0x68] sm:$0xff]
      %v433 = vld [vmem:[%s418 + $0x70] sm:$0x3]
      %v434 = vld [vmem:[%s418 + $0x78] sm:$0xff]
      %v435 = vld [vmem:[%s418 + $0x80] sm:$0xff]
      %v436 = vld [vmem:[%s418 + $0x88] sm:$0x3]
      %v437 = vld [vmem:[%s418 + $0x90] sm:$0xff]
      %v438 = vld [vmem:[%s418 + $0x98] sm:$0xff]
      %v439 = vld [vmem:[%s418 + $0xa0] sm:$0x3]
      %v440 = vld [vmem:[%s418 + $0xa8] sm:$0xff]
      %v441 = vld [vmem:[%s418 + $0xb0] sm:$0xff]
      %v442 = vld [vmem:[%s418 + $0xb8] sm:$0x3]
      %v443 = vld [vmem:[%s418 + $0xc0] sm:$0xff]
      %v444 = vld [vmem:[%s418 + $0xc8] sm:$0xff]
      %v445 = vld [vmem:[%s418 + $0xd0] sm:$0x3]
      %v446 = vld [vmem:[%s418 + $0xd8] sm:$0xff]
      %v447 = vld [vmem:[%s418 + $0xe0] sm:$0xff]
      %v448 = vld [vmem:[%s418 + $0xe8] sm:$0x3]
      %s449 = scalar_lea.vmem %s339, %s417
      %v450 = vld [vmem:[%s449] sm:$0xff]
      %v451 = vld [vmem:[%s449 + $0x8] sm:$0xff]
      %v452 = vld [vmem:[%s449 + $0x10] sm:$0x3]
      %v453 = vld [vmem:[%s449 + $0x18] sm:$0xff]
      %v454 = vld [vmem:[%s449 + $0x20] sm:$0xff]
      %v455 = vld [vmem:[%s449 + $0x28] sm:$0x3]
      %v456 = vld [vmem:[%s449 + $0x30] sm:$0xff]
      %v457 = vld [vmem:[%s449 + $0x38] sm:$0xff]
      %v458 = vld [vmem:[%s449 + $0x40] sm:$0x3]
      %v459 = vld [vmem:[%s449 + $0x48] sm:$0xff]
      %v460 = vld [vmem:[%s449 + $0x50] sm:$0xff]
      %v461 = vld [vmem:[%s449 + $0x58] sm:$0x3]
      %v462 = vld [vmem:[%s449 + $0x60] sm:$0xff]
      %v463 = vld [vmem:[%s449 + $0x68] sm:$0xff]
      %v464 = vld [vmem:[%s449 + $0x70] sm:$0x3]
      %v465 = vld [vmem:[%s449 + $0x78] sm:$0xff]
      %v466 = vld [vmem:[%s449 + $0x80] sm:$0xff]
      %v467 = vld [vmem:[%s449 + $0x88] sm:$0x3]
      %v468 = vld [vmem:[%s449 + $0x90] sm:$0xff]
      %v469 = vld [vmem:[%s449 + $0x98] sm:$0xff]
      %v470 = vld [vmem:[%s449 + $0xa0] sm:$0x3]
      %v471 = vld [vmem:[%s449 + $0xa8] sm:$0xff]
      %v472 = vld [vmem:[%s449 + $0xb0] sm:$0xff]
      %v473 = vld [vmem:[%s449 + $0xb8] sm:$0x3]
      %v474 = vld [vmem:[%s449 + $0xc0] sm:$0xff]
      %v475 = vld [vmem:[%s449 + $0xc8] sm:$0xff]
      %v476 = vld [vmem:[%s449 + $0xd0] sm:$0x3]
      %v477 = vld [vmem:[%s449 + $0xd8] sm:$0xff]
      %v478 = vld [vmem:[%s449 + $0xe0] sm:$0xff]
      %v479 = vld [vmem:[%s449 + $0xe8] sm:$0x3]
      %s480 = sadd.s32 %s352, 2
      %s481 = smul.u32 %s480, 24
      %s482 = scalar_lea.vmem %s334, %s481
      %v483 = vld [vmem:[%s482] sm:$0xff]
      %v484 = vld [vmem:[%s482 + $0x8] sm:$0xff]
      %v485 = vld [vmem:[%s482 + $0x10] sm:$0x3]
      %v486 = vld [vmem:[%s482 + $0x18] sm:$0xff]
      %v487 = vld [vmem:[%s482 + $0x20] sm:$0xff]
      %v488 = vld [vmem:[%s482 + $0x28] sm:$0x3]
      %v489 = vld [vmem:[%s482 + $0x30] sm:$0xff]
      %v490 = vld [vmem:[%s482 + $0x38] sm:$0xff]
      %v491 = vld [vmem:[%s482 + $0x40] sm:$0x3]
      %v492 = vld [vmem:[%s482 + $0x48] sm:$0xff]
      %v493 = vld [vmem:[%s482 + $0x50] sm:$0xff]
      %v494 = vld [vmem:[%s482 + $0x58] sm:$0x3]
      %v495 = vld [vmem:[%s482 + $0x60] sm:$0xff]
      %v496 = vld [vmem:[%s482 + $0x68] sm:$0xff]
      %v497 = vld [vmem:[%s482 + $0x70] sm:$0x3]
      %v498 = vld [vmem:[%s482 + $0x78] sm:$0xff]
      %v499 = vld [vmem:[%s482 + $0x80] sm:$0xff]
      %v500 = vld [vmem:[%s482 + $0x88] sm:$0x3]
      %v501 = vld [vmem:[%s482 + $0x90] sm:$0xff]
      %v502 = vld [vmem:[%s482 + $0x98] sm:$0xff]
      %v503 = vld [vmem:[%s482 + $0xa0] sm:$0x3]
      %v504 = vld [vmem:[%s482 + $0xa8] sm:$0xff]
      %v505 = vld [vmem:[%s482 + $0xb0] sm:$0xff]
      %v506 = vld [vmem:[%s482 + $0xb8] sm:$0x3]
      %v507 = vld [vmem:[%s482 + $0xc0] sm:$0xff]
      %v508 = vld [vmem:[%s482 + $0xc8] sm:$0xff]
      %v509 = vld [vmem:[%s482 + $0xd0] sm:$0x3]
      %v510 = vld [vmem:[%s482 + $0xd8] sm:$0xff]
      %v511 = vld [vmem:[%s482 + $0xe0] sm:$0xff]
      %v512 = vld [vmem:[%s482 + $0xe8] sm:$0x3]
      %s513 = scalar_lea.vmem %s339, %s481
      %v514 = vld [vmem:[%s513] sm:$0xff]
      %v515 = vld [vmem:[%s513 + $0x8] sm:$0xff]
      %v516 = vld [vmem:[%s513 + $0x10] sm:$0x3]
      %v517 = vld [vmem:[%s513 + $0x18] sm:$0xff]
      %v518 = vld [vmem:[%s513 + $0x20] sm:$0xff]
      %v519 = vld [vmem:[%s513 + $0x28] sm:$0x3]
      %v520 = vld [vmem:[%s513 + $0x30] sm:$0xff]
      %v521 = vld [vmem:[%s513 + $0x38] sm:$0xff]
      %v522 = vld [vmem:[%s513 + $0x40] sm:$0x3]
      %v523 = vld [vmem:[%s513 + $0x48] sm:$0xff]
      %v524 = vld [vmem:[%s513 + $0x50] sm:$0xff]
      %v525 = vld [vmem:[%s513 + $0x58] sm:$0x3]
      %v526 = vld [vmem:[%s513 + $0x60] sm:$0xff]
      %v527 = vld [vmem:[%s513 + $0x68] sm:$0xff]
      %v528 = vld [vmem:[%s513 + $0x70] sm:$0x3]
      %v529 = vld [vmem:[%s513 + $0x78] sm:$0xff]
      %v530 = vld [vmem:[%s513 + $0x80] sm:$0xff]
      %v531 = vld [vmem:[%s513 + $0x88] sm:$0x3]
      %v532 = vld [vmem:[%s513 + $0x90] sm:$0xff]
      %v533 = vld [vmem:[%s513 + $0x98] sm:$0xff]
      %v534 = vld [vmem:[%s513 + $0xa0] sm:$0x3]
      %v535 = vld [vmem:[%s513 + $0xa8] sm:$0xff]
      %v536 = vld [vmem:[%s513 + $0xb0] sm:$0xff]
      %v537 = vld [vmem:[%s513 + $0xb8] sm:$0x3]
      %v538 = vld [vmem:[%s513 + $0xc0] sm:$0xff]
      %v539 = vld [vmem:[%s513 + $0xc8] sm:$0xff]
      %v540 = vld [vmem:[%s513 + $0xd0] sm:$0x3]
      %v541 = vld [vmem:[%s513 + $0xd8] sm:$0xff]
      %v542 = vld [vmem:[%s513 + $0xe0] sm:$0xff]
      %v543 = vld [vmem:[%s513 + $0xe8] sm:$0x3]
      %vm604 = vcmask 1046528
      %v605 = vrot.slane %v355, 1
      %v606 = vrot.slane %v356, 1
      %v607 = vsel %vm604, %v605, %v606
      %v608 = vrot.slane %v386, 1
      %v609 = vrot.slane %v387, 1
      %v610 = vsel %vm604, %v608, %v609
      %v611 = vrot.slane %v357, 1
      %v612 = vsel %vm604, %v606, %v611
      %v613 = vrot.slane %v388, 1
      %v614 = vsel %vm604, %v609, %v613
      %v615 = vrot.slane %v358, 1
      %v616 = vrot.slane %v359, 1
      %v617 = vsel %vm604, %v615, %v616
      %v618 = vrot.slane %v389, 1
      %v619 = vrot.slane %v390, 1
      %v620 = vsel %vm604, %v618, %v619
      %v621 = vrot.slane %v360, 1
      %v622 = vsel %vm604, %v616, %v621
      %v623 = vrot.slane %v391, 1
      %v624 = vsel %vm604, %v619, %v623
      %v625 = vrot.slane %v361, 1
      %v626 = vrot.slane %v362, 1
      %v627 = vsel %vm604, %v625, %v626
      %v628 = vrot.slane %v392, 1
      %v629 = vrot.slane %v393, 1
      %v630 = vsel %vm604, %v628, %v629
      %v631 = vrot.slane %v363, 1
      %v632 = vsel %vm604, %v626, %v631
      %v633 = vrot.slane %v394, 1
      %v634 = vsel %vm604, %v629, %v633
      %v635 = vrot.slane %v364, 1
      %v636 = vrot.slane %v365, 1
      %v637 = vsel %vm604, %v635, %v636
      %v638 = vrot.slane %v395, 1
      %v639 = vrot.slane %v396, 1
      %v640 = vsel %vm604, %v638, %v639
      %v641 = vrot.slane %v366, 1
      %v642 = vsel %vm604, %v636, %v641
      %v643 = vrot.slane %v397, 1
      %v644 = vsel %vm604, %v639, %v643
      %v645 = vrot.slane %v367, 1
      %v646 = vrot.slane %v368, 1
      %v647 = vsel %vm604, %v645, %v646
      %v648 = vrot.slane %v398, 1
      %v649 = vrot.slane %v399, 1
      %v650 = vsel %vm604, %v648, %v649
      %v651 = vrot.slane %v369, 1
      %v652 = vsel %vm604, %v646, %v651
      %v653 = vrot.slane %v400, 1
      %v654 = vsel %vm604, %v649, %v653
      %v655 = vrot.slane %v370, 1
      %v656 = vrot.slane %v371, 1
      %v657 = vsel %vm604, %v655, %v656
      %v658 = vrot.slane %v401, 1
      %v659 = vrot.slane %v402, 1
      %v660 = vsel %vm604, %v658, %v659
      %v661 = vrot.slane %v372, 1
      %v662 = vsel %vm604, %v656, %v661
      %v663 = vrot.slane %v403, 1
      %v664 = vsel %vm604, %v659, %v663
      %v665 = vrot.slane %v373, 1
      %v666 = vrot.slane %v374, 1
      %v667 = vsel %vm604, %v665, %v666
      %v668 = vrot.slane %v404, 1
      %v669 = vrot.slane %v405, 1
      %v670 = vsel %vm604, %v668, %v669
      %v671 = vrot.slane %v375, 1
      %v672 = vsel %vm604, %v666, %v671
      %v673 = vrot.slane %v406, 1
      %v674 = vsel %vm604, %v669, %v673
      %v675 = vrot.slane %v376, 1
      %v676 = vrot.slane %v377, 1
      %v677 = vsel %vm604, %v675, %v676
      %v678 = vrot.slane %v407, 1
      %v679 = vrot.slane %v408, 1
      %v680 = vsel %vm604, %v678, %v679
      %v681 = vrot.slane %v378, 1
      %v682 = vsel %vm604, %v676, %v681
      %v683 = vrot.slane %v409, 1
      %v684 = vsel %vm604, %v679, %v683
      %v685 = vrot.slane %v379, 1
      %v686 = vrot.slane %v380, 1
      %v687 = vsel %vm604, %v685, %v686
      %v688 = vrot.slane %v410, 1
      %v689 = vrot.slane %v411, 1
      %v690 = vsel %vm604, %v688, %v689
      %v691 = vrot.slane %v381, 1
      %v692 = vsel %vm604, %v686, %v691
      %v693 = vrot.slane %v412, 1
      %v694 = vsel %vm604, %v689, %v693
      %v695 = vrot.slane %v382, 1
      %v696 = vrot.slane %v383, 1
      %v697 = vsel %vm604, %v695, %v696
      %v698 = vrot.slane %v413, 1
      %v699 = vrot.slane %v414, 1
      %v700 = vsel %vm604, %v698, %v699
      %v701 = vrot.slane %v384, 1
      %v702 = vsel %vm604, %v696, %v701
      %v703 = vrot.slane %v415, 1
      %v704 = vsel %vm604, %v699, %v703
      %vm745 = vcmask 1045504
      %v746 = vrot.slane %v355, 2
      %v747 = vrot.slane %v356, 2
      %v748 = vsel %vm745, %v746, %v747
      %v749 = vrot.slane %v386, 2
      %v750 = vrot.slane %v387, 2
      %v751 = vsel %vm745, %v749, %v750
      %v752 = vrot.slane %v357, 2
      %v753 = vsel %vm745, %v747, %v752
      %v754 = vrot.slane %v388, 2
      %v755 = vsel %vm745, %v750, %v754
      %v756 = vrot.slane %v358, 2
      %v757 = vrot.slane %v359, 2
      %v758 = vsel %vm745, %v756, %v757
      %v759 = vrot.slane %v389, 2
      %v760 = vrot.slane %v390, 2
      %v761 = vsel %vm745, %v759, %v760
      %v762 = vrot.slane %v360, 2
      %v763 = vsel %vm745, %v757, %v762
      %v764 = vrot.slane %v391, 2
      %v765 = vsel %vm745, %v760, %v764
      %v766 = vrot.slane %v361, 2
      %v767 = vrot.slane %v362, 2
      %v768 = vsel %vm745, %v766, %v767
      %v769 = vrot.slane %v392, 2
      %v770 = vrot.slane %v393, 2
      %v771 = vsel %vm745, %v769, %v770
      %v772 = vrot.slane %v363, 2
      %v773 = vsel %vm745, %v767, %v772
      %v774 = vrot.slane %v394, 2
      %v775 = vsel %vm745, %v770, %v774
      %v776 = vrot.slane %v364, 2
      %v777 = vrot.slane %v365, 2
      %v778 = vsel %vm745, %v776, %v777
      %v779 = vrot.slane %v395, 2
      %v780 = vrot.slane %v396, 2
      %v781 = vsel %vm745, %v779, %v780
      %v782 = vrot.slane %v366, 2
      %v783 = vsel %vm745, %v777, %v782
      %v784 = vrot.slane %v397, 2
      %v785 = vsel %vm745, %v780, %v784
      %v786 = vrot.slane %v367, 2
      %v787 = vrot.slane %v368, 2
      %v788 = vsel %vm745, %v786, %v787
      %v789 = vrot.slane %v398, 2
      %v790 = vrot.slane %v399, 2
      %v791 = vsel %vm745, %v789, %v790
      %v792 = vrot.slane %v369, 2
      %v793 = vsel %vm745, %v787, %v792
      %v794 = vrot.slane %v400, 2
      %v795 = vsel %vm745, %v790, %v794
      %v796 = vrot.slane %v370, 2
      %v797 = vrot.slane %v371, 2
      %v798 = vsel %vm745, %v796, %v797
      %v799 = vrot.slane %v401, 2
      %v800 = vrot.slane %v402, 2
      %v801 = vsel %vm745, %v799, %v800
      %v802 = vrot.slane %v372, 2
      %v803 = vsel %vm745, %v797, %v802
      %v804 = vrot.slane %v403, 2
      %v805 = vsel %vm745, %v800, %v804
      %v806 = vrot.slane %v373, 2
      %v807 = vrot.slane %v374, 2
      %v808 = vsel %vm745, %v806, %v807
      %v809 = vrot.slane %v404, 2
      %v810 = vrot.slane %v405, 2
      %v811 = vsel %vm745, %v809, %v810
      %v812 = vrot.slane %v375, 2
      %v813 = vsel %vm745, %v807, %v812
      %v814 = vrot.slane %v406, 2
      %v815 = vsel %vm745, %v810, %v814
      %v816 = vrot.slane %v376, 2
      %v817 = vrot.slane %v377, 2
      %v818 = vsel %vm745, %v816, %v817
      %v819 = vrot.slane %v407, 2
      %v820 = vrot.slane %v408, 2
      %v821 = vsel %vm745, %v819, %v820
      %v822 = vrot.slane %v378, 2
      %v823 = vsel %vm745, %v817, %v822
      %v824 = vrot.slane %v409, 2
      %v825 = vsel %vm745, %v820, %v824
      %v826 = vrot.slane %v379, 2
      %v827 = vrot.slane %v380, 2
      %v828 = vsel %vm745, %v826, %v827
      %v829 = vrot.slane %v410, 2
      %v830 = vrot.slane %v411, 2
      %v831 = vsel %vm745, %v829, %v830
      %v832 = vrot.slane %v381, 2
      %v833 = vsel %vm745, %v827, %v832
      %v834 = vrot.slane %v412, 2
      %v835 = vsel %vm745, %v830, %v834
      %v836 = vrot.slane %v382, 2
      %v837 = vrot.slane %v383, 2
      %v838 = vsel %vm745, %v836, %v837
      %v839 = vrot.slane %v413, 2
      %v840 = vrot.slane %v414, 2
      %v841 = vsel %vm745, %v839, %v840
      %v842 = vrot.slane %v384, 2
      %v843 = vsel %vm745, %v837, %v842
      %v844 = vrot.slane %v415, 2
      %v845 = vsel %vm745, %v840, %v844
      %v946 = vrot.slane %v419, 1
      %v947 = vrot.slane %v420, 1
      %v948 = vsel %vm604, %v946, %v947
      %v949 = vrot.slane %v450, 1
      %v950 = vrot.slane %v451, 1
      %v951 = vsel %vm604, %v949, %v950
      %v952 = vrot.slane %v421, 1
      %v953 = vsel %vm604, %v947, %v952
      %v954 = vrot.slane %v452, 1
      %v955 = vsel %vm604, %v950, %v954
      %v956 = vrot.slane %v422, 1
      %v957 = vrot.slane %v423, 1
      %v958 = vsel %vm604, %v956, %v957
      %v959 = vrot.slane %v453, 1
      %v960 = vrot.slane %v454, 1
      %v961 = vsel %vm604, %v959, %v960
      %v962 = vrot.slane %v424, 1
      %v963 = vsel %vm604, %v957, %v962
      %v964 = vrot.slane %v455, 1
      %v965 = vsel %vm604, %v960, %v964
      %v966 = vrot.slane %v425, 1
      %v967 = vrot.slane %v426, 1
      %v968 = vsel %vm604, %v966, %v967
      %v969 = vrot.slane %v456, 1
      %v970 = vrot.slane %v457, 1
      %v971 = vsel %vm604, %v969, %v970
      %v972 = vrot.slane %v427, 1
      %v973 = vsel %vm604, %v967, %v972
      %v974 = vrot.slane %v458, 1
      %v975 = vsel %vm604, %v970, %v974
      %v976 = vrot.slane %v428, 1
      %v977 = vrot.slane %v429, 1
      %v978 = vsel %vm604, %v976, %v977
      %v979 = vrot.slane %v459, 1
      %v980 = vrot.slane %v460, 1
      %v981 = vsel %vm604, %v979, %v980
      %v982 = vrot.slane %v430, 1
      %v983 = vsel %vm604, %v977, %v982
      %v984 = vrot.slane %v461, 1
      %v985 = vsel %vm604, %v980, %v984
      %v986 = vrot.slane %v431, 1
      %v987 = vrot.slane %v432, 1
      %v988 = vsel %vm604, %v986, %v987
      %v989 = vrot.slane %v462, 1
      %v990 = vrot.slane %v463, 1
      %v991 = vsel %vm604, %v989, %v990
      %v992 = vrot.slane %v433, 1
      %v993 = vsel %vm604, %v987, %v992
      %v994 = vrot.slane %v464, 1
      %v995 = vsel %vm604, %v990, %v994
      %v996 = vrot.slane %v434, 1
      %v997 = vrot.slane %v435, 1
      %v998 = vsel %vm604, %v996, %v997
      %v999 = vrot.slane %v465, 1
      %v1000 = vrot.slane %v466, 1
      %v1001 = vsel %vm604, %v999, %v1000
      %v1002 = vrot.slane %v436, 1
      %v1003 = vsel %vm604, %v997, %v1002
      %v1004 = vrot.slane %v467, 1
      %v1005 = vsel %vm604, %v1000, %v1004
      %v1006 = vrot.slane %v437, 1
      %v1007 = vrot.slane %v438, 1
      %v1008 = vsel %vm604, %v1006, %v1007
      %v1009 = vrot.slane %v468, 1
      %v1010 = vrot.slane %v469, 1
      %v1011 = vsel %vm604, %v1009, %v1010
      %v1012 = vrot.slane %v439, 1
      %v1013 = vsel %vm604, %v1007, %v1012
      %v1014 = vrot.slane %v470, 1
      %v1015 = vsel %vm604, %v1010, %v1014
      %v1016 = vrot.slane %v440, 1
      %v1017 = vrot.slane %v441, 1
      %v1018 = vsel %vm604, %v1016, %v1017
      %v1019 = vrot.slane %v471, 1
      %v1020 = vrot.slane %v472, 1
      %v1021 = vsel %vm604, %v1019, %v1020
      %v1022 = vrot.slane %v442, 1
      %v1023 = vsel %vm604, %v1017, %v1022
      %v1024 = vrot.slane %v473, 1
      %v1025 = vsel %vm604, %v1020, %v1024
      %v1026 = vrot.slane %v443, 1
      %v1027 = vrot.slane %v444, 1
      %v1028 = vsel %vm604, %v1026, %v1027
      %v1029 = vrot.slane %v474, 1
      %v1030 = vrot.slane %v475, 1
      %v1031 = vsel %vm604, %v1029, %v1030
      %v1032 = vrot.slane %v445, 1
      %v1033 = vsel %vm604, %v1027, %v1032
      %v1034 = vrot.slane %v476, 1
      %v1035 = vsel %vm604, %v1030, %v1034
      %v1036 = vrot.slane %v446, 1
      %v1037 = vrot.slane %v447, 1
      %v1038 = vsel %vm604, %v1036, %v1037
      %v1039 = vrot.slane %v477, 1
      %v1040 = vrot.slane %v478, 1
      %v1041 = vsel %vm604, %v1039, %v1040
      %v1042 = vrot.slane %v448, 1
      %v1043 = vsel %vm604, %v1037, %v1042
      %v1044 = vrot.slane %v479, 1
      %v1045 = vsel %vm604, %v1040, %v1044
      %v1086 = vrot.slane %v419, 2
      %v1087 = vrot.slane %v420, 2
      %v1088 = vsel %vm745, %v1086, %v1087
      %v1089 = vrot.slane %v450, 2
      %v1090 = vrot.slane %v451, 2
      %v1091 = vsel %vm745, %v1089, %v1090
      %v1092 = vrot.slane %v421, 2
      %v1093 = vsel %vm745, %v1087, %v1092
      %v1094 = vrot.slane %v452, 2
      %v1095 = vsel %vm745, %v1090, %v1094
      %v1096 = vrot.slane %v422, 2
      %v1097 = vrot.slane %v423, 2
      %v1098 = vsel %vm745, %v1096, %v1097
      %v1099 = vrot.slane %v453, 2
      %v1100 = vrot.slane %v454, 2
      %v1101 = vsel %vm745, %v1099, %v1100
      %v1102 = vrot.slane %v424, 2
      %v1103 = vsel %vm745, %v1097, %v1102
      %v1104 = vrot.slane %v455, 2
      %v1105 = vsel %vm745, %v1100, %v1104
      %v1106 = vrot.slane %v425, 2
      %v1107 = vrot.slane %v426, 2
      %v1108 = vsel %vm745, %v1106, %v1107
      %v1109 = vrot.slane %v456, 2
      %v1110 = vrot.slane %v457, 2
      %v1111 = vsel %vm745, %v1109, %v1110
      %v1112 = vrot.slane %v427, 2
      %v1113 = vsel %vm745, %v1107, %v1112
      %v1114 = vrot.slane %v458, 2
      %v1115 = vsel %vm745, %v1110, %v1114
      %v1116 = vrot.slane %v428, 2
      %v1117 = vrot.slane %v429, 2
      %v1118 = vsel %vm745, %v1116, %v1117
      %v1119 = vrot.slane %v459, 2
      %v1120 = vrot.slane %v460, 2
      %v1121 = vsel %vm745, %v1119, %v1120
      %v1122 = vrot.slane %v430, 2
      %v1123 = vsel %vm745, %v1117, %v1122
      %v1124 = vrot.slane %v461, 2
      %v1125 = vsel %vm745, %v1120, %v1124
      %v1126 = vrot.slane %v431, 2
      %v1127 = vrot.slane %v432, 2
      %v1128 = vsel %vm745, %v1126, %v1127
      %v1129 = vrot.slane %v462, 2
      %v1130 = vrot.slane %v463, 2
      %v1131 = vsel %vm745, %v1129, %v1130
      %v1132 = vrot.slane %v433, 2
      %v1133 = vsel %vm745, %v1127, %v1132
      %v1134 = vrot.slane %v464, 2
      %v1135 = vsel %vm745, %v1130, %v1134
      %v1136 = vrot.slane %v434, 2
      %v1137 = vrot.slane %v435, 2
      %v1138 = vsel %vm745, %v1136, %v1137
      %v1139 = vrot.slane %v465, 2
      %v1140 = vrot.slane %v466, 2
      %v1141 = vsel %vm745, %v1139, %v1140
      %v1142 = vrot.slane %v436, 2
      %v1143 = vsel %vm745, %v1137, %v1142
      %v1144 = vrot.slane %v467, 2
      %v1145 = vsel %vm745, %v1140, %v1144
      %v1146 = vrot.slane %v437, 2
      %v1147 = vrot.slane %v438, 2
      %v1148 = vsel %vm745, %v1146, %v1147
      %v1149 = vrot.slane %v468, 2
      %v1150 = vrot.slane %v469, 2
      %v1151 = vsel %vm745, %v1149, %v1150
      %v1152 = vrot.slane %v439, 2
      %v1153 = vsel %vm745, %v1147, %v1152
      %v1154 = vrot.slane %v470, 2
      %v1155 = vsel %vm745, %v1150, %v1154
      %v1156 = vrot.slane %v440, 2
      %v1157 = vrot.slane %v441, 2
      %v1158 = vsel %vm745, %v1156, %v1157
      %v1159 = vrot.slane %v471, 2
      %v1160 = vrot.slane %v472, 2
      %v1161 = vsel %vm745, %v1159, %v1160
      %v1162 = vrot.slane %v442, 2
      %v1163 = vsel %vm745, %v1157, %v1162
      %v1164 = vrot.slane %v473, 2
      %v1165 = vsel %vm745, %v1160, %v1164
      %v1166 = vrot.slane %v443, 2
      %v1167 = vrot.slane %v444, 2
      %v1168 = vsel %vm745, %v1166, %v1167
      %v1169 = vrot.slane %v474, 2
      %v1170 = vrot.slane %v475, 2
      %v1171 = vsel %vm745, %v1169, %v1170
      %v1172 = vrot.slane %v445, 2
      %v1173 = vsel %vm745, %v1167, %v1172
      %v1174 = vrot.slane %v476, 2
      %v1175 = vsel %vm745, %v1170, %v1174
      %v1176 = vrot.slane %v446, 2
      %v1177 = vrot.slane %v447, 2
      %v1178 = vsel %vm745, %v1176, %v1177
      %v1179 = vrot.slane %v477, 2
      %v1180 = vrot.slane %v478, 2
      %v1181 = vsel %vm745, %v1179, %v1180
      %v1182 = vrot.slane %v448, 2
      %v1183 = vsel %vm745, %v1177, %v1182
      %v1184 = vrot.slane %v479, 2
      %v1185 = vsel %vm745, %v1180, %v1184
      %v1286 = vrot.slane %v483, 1
      %v1287 = vrot.slane %v484, 1
      %v1288 = vsel %vm604, %v1286, %v1287
      %v1289 = vrot.slane %v514, 1
      %v1290 = vrot.slane %v515, 1
      %v1291 = vsel %vm604, %v1289, %v1290
      %v1292 = vrot.slane %v485, 1
      %v1293 = vsel %vm604, %v1287, %v1292
      %v1294 = vrot.slane %v516, 1
      %v1295 = vsel %vm604, %v1290, %v1294
      %v1296 = vrot.slane %v486, 1
      %v1297 = vrot.slane %v487, 1
      %v1298 = vsel %vm604, %v1296, %v1297
      %v1299 = vrot.slane %v517, 1
      %v1300 = vrot.slane %v518, 1
      %v1301 = vsel %vm604, %v1299, %v1300
      %v1302 = vrot.slane %v488, 1
      %v1303 = vsel %vm604, %v1297, %v1302
      %v1304 = vrot.slane %v519, 1
      %v1305 = vsel %vm604, %v1300, %v1304
      %v1306 = vrot.slane %v489, 1
      %v1307 = vrot.slane %v490, 1
      %v1308 = vsel %vm604, %v1306, %v1307
      %v1309 = vrot.slane %v520, 1
      %v1310 = vrot.slane %v521, 1
      %v1311 = vsel %vm604, %v1309, %v1310
      %v1312 = vrot.slane %v491, 1
      %v1313 = vsel %vm604, %v1307, %v1312
      %v1314 = vrot.slane %v522, 1
      %v1315 = vsel %vm604, %v1310, %v1314
      %v1316 = vrot.slane %v492, 1
      %v1317 = vrot.slane %v493, 1
      %v1318 = vsel %vm604, %v1316, %v1317
      %v1319 = vrot.slane %v523, 1
      %v1320 = vrot.slane %v524, 1
      %v1321 = vsel %vm604, %v1319, %v1320
      %v1322 = vrot.slane %v494, 1
      %v1323 = vsel %vm604, %v1317, %v1322
      %v1324 = vrot.slane %v525, 1
      %v1325 = vsel %vm604, %v1320, %v1324
      %v1326 = vrot.slane %v495, 1
      %v1327 = vrot.slane %v496, 1
      %v1328 = vsel %vm604, %v1326, %v1327
      %v1329 = vrot.slane %v526, 1
      %v1330 = vrot.slane %v527, 1
      %v1331 = vsel %vm604, %v1329, %v1330
      %v1332 = vrot.slane %v497, 1
      %v1333 = vsel %vm604, %v1327, %v1332
      %v1334 = vrot.slane %v528, 1
      %v1335 = vsel %vm604, %v1330, %v1334
      %v1336 = vrot.slane %v498, 1
      %v1337 = vrot.slane %v499, 1
      %v1338 = vsel %vm604, %v1336, %v1337
      %v1339 = vrot.slane %v529, 1
      %v1340 = vrot.slane %v530, 1
      %v1341 = vsel %vm604, %v1339, %v1340
      %v1342 = vrot.slane %v500, 1
      %v1343 = vsel %vm604, %v1337, %v1342
      %v1344 = vrot.slane %v531, 1
      %v1345 = vsel %vm604, %v1340, %v1344
      %v1346 = vrot.slane %v501, 1
      %v1347 = vrot.slane %v502, 1
      %v1348 = vsel %vm604, %v1346, %v1347
      %v1349 = vrot.slane %v532, 1
      %v1350 = vrot.slane %v533, 1
      %v1351 = vsel %vm604, %v1349, %v1350
      %v1352 = vrot.slane %v503, 1
      %v1353 = vsel %vm604, %v1347, %v1352
      %v1354 = vrot.slane %v534, 1
      %v1355 = vsel %vm604, %v1350, %v1354
      %v1356 = vrot.slane %v504, 1
      %v1357 = vrot.slane %v505, 1
      %v1358 = vsel %vm604, %v1356, %v1357
      %v1359 = vrot.slane %v535, 1
      %v1360 = vrot.slane %v536, 1
      %v1361 = vsel %vm604, %v1359, %v1360
      %v1362 = vrot.slane %v506, 1
      %v1363 = vsel %vm604, %v1357, %v1362
      %v1364 = vrot.slane %v537, 1
      %v1365 = vsel %vm604, %v1360, %v1364
      %v1366 = vrot.slane %v507, 1
      %v1367 = vrot.slane %v508, 1
      %v1368 = vsel %vm604, %v1366, %v1367
      %v1369 = vrot.slane %v538, 1
      %v1370 = vrot.slane %v539, 1
      %v1371 = vsel %vm604, %v1369, %v1370
      %v1372 = vrot.slane %v509, 1
      %v1373 = vsel %vm604, %v1367, %v1372
      %v1374 = vrot.slane %v540, 1
      %v1375 = vsel %vm604, %v1370, %v1374
      %v1376 = vrot.slane %v510, 1
      %v1377 = vrot.slane %v511, 1
      %v1378 = vsel %vm604, %v1376, %v1377
      %v1379 = vrot.slane %v541, 1
      %v1380 = vrot.slane %v542, 1
      %v1381 = vsel %vm604, %v1379, %v1380
      %v1382 = vrot.slane %v512, 1
      %v1383 = vsel %vm604, %v1377, %v1382
      %v1384 = vrot.slane %v543, 1
      %v1385 = vsel %vm604, %v1380, %v1384
      %v1426 = vrot.slane %v483, 2
      %v1427 = vrot.slane %v484, 2
      %v1428 = vsel %vm745, %v1426, %v1427
      %v1429 = vrot.slane %v514, 2
      %v1430 = vrot.slane %v515, 2
      %v1431 = vsel %vm745, %v1429, %v1430
      %v1432 = vrot.slane %v485, 2
      %v1433 = vsel %vm745, %v1427, %v1432
      %v1434 = vrot.slane %v516, 2
      %v1435 = vsel %vm745, %v1430, %v1434
      %v1436 = vrot.slane %v486, 2
      %v1437 = vrot.slane %v487, 2
      %v1438 = vsel %vm745, %v1436, %v1437
      %v1439 = vrot.slane %v517, 2
      %v1440 = vrot.slane %v518, 2
      %v1441 = vsel %vm745, %v1439, %v1440
      %v1442 = vrot.slane %v488, 2
      %v1443 = vsel %vm745, %v1437, %v1442
      %v1444 = vrot.slane %v519, 2
      %v1445 = vsel %vm745, %v1440, %v1444
      %v1446 = vrot.slane %v489, 2
      %v1447 = vrot.slane %v490, 2
      %v1448 = vsel %vm745, %v1446, %v1447
      %v1449 = vrot.slane %v520, 2
      %v1450 = vrot.slane %v521, 2
      %v1451 = vsel %vm745, %v1449, %v1450
      %v1452 = vrot.slane %v491, 2
      %v1453 = vsel %vm745, %v1447, %v1452
      %v1454 = vrot.slane %v522, 2
      %v1455 = vsel %vm745, %v1450, %v1454
      %v1456 = vrot.slane %v492, 2
      %v1457 = vrot.slane %v493, 2
      %v1458 = vsel %vm745, %v1456, %v1457
      %v1459 = vrot.slane %v523, 2
      %v1460 = vrot.slane %v524, 2
      %v1461 = vsel %vm745, %v1459, %v1460
      %v1462 = vrot.slane %v494, 2
      %v1463 = vsel %vm745, %v1457, %v1462
      %v1464 = vrot.slane %v525, 2
      %v1465 = vsel %vm745, %v1460, %v1464
      %v1466 = vrot.slane %v495, 2
      %v1467 = vrot.slane %v496, 2
      %v1468 = vsel %vm745, %v1466, %v1467
      %v1469 = vrot.slane %v526, 2
      %v1470 = vrot.slane %v527, 2
      %v1471 = vsel %vm745, %v1469, %v1470
      %v1472 = vrot.slane %v497, 2
      %v1473 = vsel %vm745, %v1467, %v1472
      %v1474 = vrot.slane %v528, 2
      %v1475 = vsel %vm745, %v1470, %v1474
      %v1476 = vrot.slane %v498, 2
      %v1477 = vrot.slane %v499, 2
      %v1478 = vsel %vm745, %v1476, %v1477
      %v1479 = vrot.slane %v529, 2
      %v1480 = vrot.slane %v530, 2
      %v1481 = vsel %vm745, %v1479, %v1480
      %v1482 = vrot.slane %v500, 2
      %v1483 = vsel %vm745, %v1477, %v1482
      %v1484 = vrot.slane %v531, 2
      %v1485 = vsel %vm745, %v1480, %v1484
      %v1486 = vrot.slane %v501, 2
      %v1487 = vrot.slane %v502, 2
      %v1488 = vsel %vm745, %v1486, %v1487
      %v1489 = vrot.slane %v532, 2
      %v1490 = vrot.slane %v533, 2
      %v1491 = vsel %vm745, %v1489, %v1490
      %v1492 = vrot.slane %v503, 2
      %v1493 = vsel %vm745, %v1487, %v1492
      %v1494 = vrot.slane %v534, 2
      %v1495 = vsel %vm745, %v1490, %v1494
      %v1496 = vrot.slane %v504, 2
      %v1497 = vrot.slane %v505, 2
      %v1498 = vsel %vm745, %v1496, %v1497
      %v1499 = vrot.slane %v535, 2
      %v1500 = vrot.slane %v536, 2
      %v1501 = vsel %vm745, %v1499, %v1500
      %v1502 = vrot.slane %v506, 2
      %v1503 = vsel %vm745, %v1497, %v1502
      %v1504 = vrot.slane %v537, 2
      %v1505 = vsel %vm745, %v1500, %v1504
      %v1506 = vrot.slane %v507, 2
      %v1507 = vrot.slane %v508, 2
      %v1508 = vsel %vm745, %v1506, %v1507
      %v1509 = vrot.slane %v538, 2
      %v1510 = vrot.slane %v539, 2
      %v1511 = vsel %vm745, %v1509, %v1510
      %v1512 = vrot.slane %v509, 2
      %v1513 = vsel %vm745, %v1507, %v1512
      %v1514 = vrot.slane %v540, 2
      %v1515 = vsel %vm745, %v1510, %v1514
      %v1516 = vrot.slane %v510, 2
      %v1517 = vrot.slane %v511, 2
      %v1518 = vsel %vm745, %v1516, %v1517
      %v1519 = vrot.slane %v541, 2
      %v1520 = vrot.slane %v542, 2
      %v1521 = vsel %vm745, %v1519, %v1520
      %v1522 = vrot.slane %v512, 2
      %v1523 = vsel %vm745, %v1517, %v1522
      %v1524 = vrot.slane %v543, 2
      %v1525 = vsel %vm745, %v1520, %v1524
      %v1566 = vpack.c.bf16 %v356, %v355
      %v1567 = vpack.c.bf16 %v387, %v386
      %v1568 = vpack.c.bf16 %v612, %v607
      %v1569 = vpack.c.bf16 %v614, %v610
      %v1570 = vpack.c.bf16 %v753, %v748
      %v1571 = vpack.c.bf16 %v755, %v751
      %v1572 = vpack.c.bf16 %v420, %v419
      %v1573 = vpack.c.bf16 %v451, %v450
      %v1574 = vpack.c.bf16 %v953, %v948
      %v1575 = vpack.c.bf16 %v955, %v951
      %v1576 = vpack.c.bf16 %v1093, %v1088
      %v1577 = vpack.c.bf16 %v1095, %v1091
      %v1578 = vpack.c.bf16 %v484, %v483
      %v1579 = vpack.c.bf16 %v515, %v514
      %v1580 = vpack.c.bf16 %v1293, %v1288
      %v1581 = vpack.c.bf16 %v1295, %v1291
      %v1582 = vpack.c.bf16 %v1433, %v1428
      %v1583 = vpack.c.bf16 %v1435, %v1431
      %v1584 = vpack.c.bf16 %v359, %v358
      %v1585 = vpack.c.bf16 %v390, %v389
      %v1586 = vpack.c.bf16 %v622, %v617
      %v1587 = vpack.c.bf16 %v624, %v620
      %v1588 = vpack.c.bf16 %v763, %v758
      %v1589 = vpack.c.bf16 %v765, %v761
      %v1590 = vpack.c.bf16 %v423, %v422
      %v1591 = vpack.c.bf16 %v454, %v453
      %v1592 = vpack.c.bf16 %v963, %v958
      %v1593 = vpack.c.bf16 %v965, %v961
      %v1594 = vpack.c.bf16 %v1103, %v1098
      %v1595 = vpack.c.bf16 %v1105, %v1101
      %v1596 = vpack.c.bf16 %v487, %v486
      %v1597 = vpack.c.bf16 %v518, %v517
      %v1598 = vpack.c.bf16 %v1303, %v1298
      %v1599 = vpack.c.bf16 %v1305, %v1301
      %v1600 = vpack.c.bf16 %v1443, %v1438
      %v1601 = vpack.c.bf16 %v1445, %v1441
      %v1602 = vpack.c.bf16 %v362, %v361
      %v1603 = vpack.c.bf16 %v393, %v392
      %v1604 = vpack.c.bf16 %v632, %v627
      %v1605 = vpack.c.bf16 %v634, %v630
      %v1606 = vpack.c.bf16 %v773, %v768
      %v1607 = vpack.c.bf16 %v775, %v771
      %v1608 = vpack.c.bf16 %v426, %v425
      %v1609 = vpack.c.bf16 %v457, %v456
      %v1610 = vpack.c.bf16 %v973, %v968
      %v1611 = vpack.c.bf16 %v975, %v971
      %v1612 = vpack.c.bf16 %v1113, %v1108
      %v1613 = vpack.c.bf16 %v1115, %v1111
      %v1614 = vpack.c.bf16 %v490, %v489
      %v1615 = vpack.c.bf16 %v521, %v520
      %v1616 = vpack.c.bf16 %v1313, %v1308
      %v1617 = vpack.c.bf16 %v1315, %v1311
      %v1618 = vpack.c.bf16 %v1453, %v1448
      %v1619 = vpack.c.bf16 %v1455, %v1451
      %v1620 = vpack.c.bf16 %v365, %v364
      %v1621 = vpack.c.bf16 %v396, %v395
      %v1622 = vpack.c.bf16 %v642, %v637
      %v1623 = vpack.c.bf16 %v644, %v640
      %v1624 = vpack.c.bf16 %v783, %v778
      %v1625 = vpack.c.bf16 %v785, %v781
      %v1626 = vpack.c.bf16 %v429, %v428
      %v1627 = vpack.c.bf16 %v460, %v459
      %v1628 = vpack.c.bf16 %v983, %v978
      %v1629 = vpack.c.bf16 %v985, %v981
      %v1630 = vpack.c.bf16 %v1123, %v1118
      %v1631 = vpack.c.bf16 %v1125, %v1121
      %v1632 = vpack.c.bf16 %v493, %v492
      %v1633 = vpack.c.bf16 %v524, %v523
      %v1634 = vpack.c.bf16 %v1323, %v1318
      %v1635 = vpack.c.bf16 %v1325, %v1321
      %v1636 = vpack.c.bf16 %v1463, %v1458
      %v1637 = vpack.c.bf16 %v1465, %v1461
      %v1638 = vpack.c.bf16 %v368, %v367
      %v1639 = vpack.c.bf16 %v399, %v398
      %v1640 = vpack.c.bf16 %v652, %v647
      %v1641 = vpack.c.bf16 %v654, %v650
      %v1642 = vpack.c.bf16 %v793, %v788
      %v1643 = vpack.c.bf16 %v795, %v791
      %v1644 = vpack.c.bf16 %v432, %v431
      %v1645 = vpack.c.bf16 %v463, %v462
      %v1646 = vpack.c.bf16 %v993, %v988
      %v1647 = vpack.c.bf16 %v995, %v991
      %v1648 = vpack.c.bf16 %v1133, %v1128
      %v1649 = vpack.c.bf16 %v1135, %v1131
      %v1650 = vpack.c.bf16 %v496, %v495
      %v1651 = vpack.c.bf16 %v527, %v526
      %v1652 = vpack.c.bf16 %v1333, %v1328
      %v1653 = vpack.c.bf16 %v1335, %v1331
      %v1654 = vpack.c.bf16 %v1473, %v1468
      %v1655 = vpack.c.bf16 %v1475, %v1471
      %v1656 = vpack.c.bf16 %v371, %v370
      %v1657 = vpack.c.bf16 %v402, %v401
      %v1658 = vpack.c.bf16 %v662, %v657
      %v1659 = vpack.c.bf16 %v664, %v660
      %v1660 = vpack.c.bf16 %v803, %v798
      %v1661 = vpack.c.bf16 %v805, %v801
      %v1662 = vpack.c.bf16 %v435, %v434
      %v1663 = vpack.c.bf16 %v466, %v465
      %v1664 = vpack.c.bf16 %v1003, %v998
      %v1665 = vpack.c.bf16 %v1005, %v1001
      %v1666 = vpack.c.bf16 %v1143, %v1138
      %v1667 = vpack.c.bf16 %v1145, %v1141
      %v1668 = vpack.c.bf16 %v499, %v498
      %v1669 = vpack.c.bf16 %v530, %v529
      %v1670 = vpack.c.bf16 %v1343, %v1338
      %v1671 = vpack.c.bf16 %v1345, %v1341
      %v1672 = vpack.c.bf16 %v1483, %v1478
      %v1673 = vpack.c.bf16 %v1485, %v1481
      %v1674 = vpack.c.bf16 %v374, %v373
      %v1675 = vpack.c.bf16 %v405, %v404
      %v1676 = vpack.c.bf16 %v672, %v667
      %v1677 = vpack.c.bf16 %v674, %v670
      %v1678 = vpack.c.bf16 %v813, %v808
      %v1679 = vpack.c.bf16 %v815, %v811
      %v1680 = vpack.c.bf16 %v438, %v437
      %v1681 = vpack.c.bf16 %v469, %v468
      %v1682 = vpack.c.bf16 %v1013, %v1008
      %v1683 = vpack.c.bf16 %v1015, %v1011
      %v1684 = vpack.c.bf16 %v1153, %v1148
      %v1685 = vpack.c.bf16 %v1155, %v1151
      %v1686 = vpack.c.bf16 %v502, %v501
      %v1687 = vpack.c.bf16 %v533, %v532
      %v1688 = vpack.c.bf16 %v1353, %v1348
      %v1689 = vpack.c.bf16 %v1355, %v1351
      %v1690 = vpack.c.bf16 %v1493, %v1488
      %v1691 = vpack.c.bf16 %v1495, %v1491
      %v1692 = vpack.c.bf16 %v377, %v376
      %v1693 = vpack.c.bf16 %v408, %v407
      %v1694 = vpack.c.bf16 %v682, %v677
      %v1695 = vpack.c.bf16 %v684, %v680
      %v1696 = vpack.c.bf16 %v823, %v818
      %v1697 = vpack.c.bf16 %v825, %v821
      %v1698 = vpack.c.bf16 %v441, %v440
      %v1699 = vpack.c.bf16 %v472, %v471
      %v1700 = vpack.c.bf16 %v1023, %v1018
      %v1701 = vpack.c.bf16 %v1025, %v1021
      %v1702 = vpack.c.bf16 %v1163, %v1158
      %v1703 = vpack.c.bf16 %v1165, %v1161
      %v1704 = vpack.c.bf16 %v505, %v504
      %v1705 = vpack.c.bf16 %v536, %v535
      %v1706 = vpack.c.bf16 %v1363, %v1358
      %v1707 = vpack.c.bf16 %v1365, %v1361
      %v1708 = vpack.c.bf16 %v1503, %v1498
      %v1709 = vpack.c.bf16 %v1505, %v1501
      %v1710 = vpack.c.bf16 %v380, %v379
      %v1711 = vpack.c.bf16 %v411, %v410
      %v1712 = vpack.c.bf16 %v692, %v687
      %v1713 = vpack.c.bf16 %v694, %v690
      %v1714 = vpack.c.bf16 %v833, %v828
      %v1715 = vpack.c.bf16 %v835, %v831
      %v1716 = vpack.c.bf16 %v444, %v443
      %v1717 = vpack.c.bf16 %v475, %v474
      %v1718 = vpack.c.bf16 %v1033, %v1028
      %v1719 = vpack.c.bf16 %v1035, %v1031
      %v1720 = vpack.c.bf16 %v1173, %v1168
      %v1721 = vpack.c.bf16 %v1175, %v1171
      %v1722 = vpack.c.bf16 %v508, %v507
      %v1723 = vpack.c.bf16 %v539, %v538
      %v1724 = vpack.c.bf16 %v1373, %v1368
      %v1725 = vpack.c.bf16 %v1375, %v1371
      %v1726 = vpack.c.bf16 %v1513, %v1508
      %v1727 = vpack.c.bf16 %v1515, %v1511
      %v1728 = vpack.c.bf16 %v383, %v382
      %v1729 = vpack.c.bf16 %v414, %v413
      %v1730 = vpack.c.bf16 %v702, %v697
      %v1731 = vpack.c.bf16 %v704, %v700
      %v1732 = vpack.c.bf16 %v843, %v838
      %v1733 = vpack.c.bf16 %v845, %v841
      %v1734 = vpack.c.bf16 %v447, %v446
      %v1735 = vpack.c.bf16 %v478, %v477
      %v1736 = vpack.c.bf16 %v1043, %v1038
      %v1737 = vpack.c.bf16 %v1045, %v1041
      %v1738 = vpack.c.bf16 %v1183, %v1178
      %v1739 = vpack.c.bf16 %v1185, %v1181
      %v1740 = vpack.c.bf16 %v511, %v510
      %v1741 = vpack.c.bf16 %v542, %v541
      %v1742 = vpack.c.bf16 %v1383, %v1378
      %v1743 = vpack.c.bf16 %v1385, %v1381
      %v1744 = vpack.c.bf16 %v1523, %v1518
      %v1745 = vpack.c.bf16 %v1525, %v1521
      %v1746 = vld [vmem:[%s2] sm:$0xf]
      %v1747 = vld [vmem:[%s2 + $0x4] sm:$0xf]
      %v1748 = vld [vmem:[%s2 + $0x8] sm:$0xf]
      %v1749 = vld [vmem:[%s2 + $0xc] sm:$0xf]
      %v1750 = vld [vmem:[%s2 + $0x10] sm:$0xf]
      %v1751 = vld [vmem:[%s2 + $0x14] sm:$0xf]
      %v1752 = vld [vmem:[%s2 + $0x18] sm:$0xf]
      %v1753 = vld [vmem:[%s2 + $0x1c] sm:$0xf]
      %v1754 = vld [vmem:[%s2 + $0x20] sm:$0xf]
      %v1755 = vld [vmem:[%s2 + $0x24] sm:$0xf]
      %v1756 = vld [vmem:[%s2 + $0x28] sm:$0xf]
      %v1757 = vld [vmem:[%s2 + $0x2c] sm:$0xf]
      %v1758 = vld [vmem:[%s2 + $0x30] sm:$0xf]
      %v1759 = vld [vmem:[%s2 + $0x34] sm:$0xf]
      %v1760 = vld [vmem:[%s2 + $0x38] sm:$0xf]
      %v1761 = vld [vmem:[%s2 + $0x3c] sm:$0xf]
      %v1762 = vld [vmem:[%s2 + $0x40] sm:$0xf]
      %v1763 = vld [vmem:[%s2 + $0x44] sm:$0xf]
      %v1764 = vld [vmem:[%s2 + $0x48] sm:$0xf]
      %v1765 = vld [vmem:[%s2 + $0x4c] sm:$0xf]
      %v1766 = vld [vmem:[%s2 + $0x50] sm:$0xf]
      %v1767 = vld [vmem:[%s2 + $0x54] sm:$0xf]
      %v1768 = vld [vmem:[%s2 + $0x58] sm:$0xf]
      %v1769 = vld [vmem:[%s2 + $0x5c] sm:$0xf]
      %v1770 = vld [vmem:[%s2 + $0x60] sm:$0xf]
      %v1771 = vld [vmem:[%s2 + $0x64] sm:$0xf]
      %v1772 = vld [vmem:[%s2 + $0x68] sm:$0xf]
      %v1773 = vld [vmem:[%s2 + $0x6c] sm:$0xf]
      %v1774 = vld [vmem:[%s2 + $0x70] sm:$0xf]
      %v1775 = vld [vmem:[%s2 + $0x74] sm:$0xf]
      %v1776 = vld [vmem:[%s2 + $0x78] sm:$0xf]
      %v1777 = vld [vmem:[%s2 + $0x7c] sm:$0xf]
      %v1778 = vld [vmem:[%s2 + $0x80] sm:$0xf]
      %v1779 = vld [vmem:[%s2 + $0x84] sm:$0xf]
      %v1780 = vld [vmem:[%s2 + $0x88] sm:$0xf]
      %v1781 = vld [vmem:[%s2 + $0x8c] sm:$0xf]
      %v1782 = vld [vmem:[%s2 + $0x90] sm:$0xf]
      %v1783 = vld [vmem:[%s2 + $0x94] sm:$0xf]
      %v1784 = vld [vmem:[%s2 + $0x98] sm:$0xf]
      %v1785 = vld [vmem:[%s2 + $0x9c] sm:$0xf]
      %v1786 = vld [vmem:[%s2 + $0xa0] sm:$0xf]
      %v1787 = vld [vmem:[%s2 + $0xa4] sm:$0xf]
      %v1788 = vld [vmem:[%s2 + $0xa8] sm:$0xf]
      %v1789 = vld [vmem:[%s2 + $0xac] sm:$0xf]
      %v1790 = vld [vmem:[%s2 + $0xb0] sm:$0xf]
      %v1791 = vld [vmem:[%s2 + $0xb4] sm:$0xf]
      %v1792 = vld [vmem:[%s2 + $0xb8] sm:$0xf]
      %v1793 = vld [vmem:[%s2 + $0xbc] sm:$0xf]
      %v1794 = vld [vmem:[%s2 + $0xc0] sm:$0xf]
      %v1795 = vld [vmem:[%s2 + $0xc4] sm:$0xf]
      %v1796 = vld [vmem:[%s2 + $0xc8] sm:$0xf]
      %v1797 = vld [vmem:[%s2 + $0xcc] sm:$0xf]
      %v1798 = vld [vmem:[%s2 + $0xd0] sm:$0xf]
      %v1799 = vld [vmem:[%s2 + $0xd4] sm:$0xf]
      %v1800 = vld [vmem:[%s2 + $0xd8] sm:$0xf]
      %v1801 = vld [vmem:[%s2 + $0xdc] sm:$0xf]
      %v1802 = vld [vmem:[%s2 + $0xe0] sm:$0xf]
      %v1803 = vld [vmem:[%s2 + $0xe4] sm:$0xf]
      %v1804 = vld [vmem:[%s2 + $0xe8] sm:$0xf]
      %v1805 = vld [vmem:[%s2 + $0xec] sm:$0xf]
      %v1806 = vld [vmem:[%s2 + $0xf0] sm:$0xf]
      %v1807 = vld [vmem:[%s2 + $0xf4] sm:$0xf]
      %v1808 = vld [vmem:[%s2 + $0xf8] sm:$0xf]
      %v1809 = vld [vmem:[%s2 + $0xfc] sm:$0xf]
      %v1810 = vld [vmem:[%s2 + $0x100] sm:$0xf]
      %v1811 = vld [vmem:[%s2 + $0x104] sm:$0xf]
      %v1812 = vld [vmem:[%s2 + $0x108] sm:$0xf]
      %v1813 = vld [vmem:[%s2 + $0x10c] sm:$0xf]
      %v1814 = vld [vmem:[%s2 + $0x110] sm:$0xf]
      %v1815 = vld [vmem:[%s2 + $0x114] sm:$0xf]
      %v1816 = vld [vmem:[%s2 + $0x118] sm:$0xf]
      %v1817 = vld [vmem:[%s2 + $0x11c] sm:$0xf]
      %v1818 = vld [vmem:[%s2 + $0x120] sm:$0xf]
      %v1819 = vld [vmem:[%s2 + $0x124] sm:$0xf]
      %v1820 = vld [vmem:[%s2 + $0x128] sm:$0xf]
      %v1821 = vld [vmem:[%s2 + $0x12c] sm:$0xf]
      %v1822 = vld [vmem:[%s2 + $0x130] sm:$0xf]
      %v1823 = vld [vmem:[%s2 + $0x134] sm:$0xf]
      %v1824 = vld [vmem:[%s2 + $0x138] sm:$0xf]
      %v1825 = vld [vmem:[%s2 + $0x13c] sm:$0xf]
      %v1826 = vld [vmem:[%s2 + $0x140] sm:$0xf]
      %v1827 = vld [vmem:[%s2 + $0x144] sm:$0xf]
      %v1828 = vld [vmem:[%s2 + $0x148] sm:$0xf]
      %v1829 = vld [vmem:[%s2 + $0x14c] sm:$0xf]
      %v1830 = vld [vmem:[%s2 + $0x150] sm:$0xf]
      %v1831 = vld [vmem:[%s2 + $0x154] sm:$0xf]
      %v1832 = vld [vmem:[%s2 + $0x158] sm:$0xf]
      %v1833 = vld [vmem:[%s2 + $0x15c] sm:$0xf]
      %v1834 = vld [vmem:[%s2 + $0x160] sm:$0xf]
      %v1835 = vld [vmem:[%s2 + $0x164] sm:$0xf]
      %v1836 = vld [vmem:[%s2 + $0x168] sm:$0xf]
      %v1837 = vld [vmem:[%s2 + $0x16c] sm:$0xf]
      %v1838 = vld [vmem:[%s2 + $0x170] sm:$0xf]
      %v1839 = vld [vmem:[%s2 + $0x174] sm:$0xf]
      %v1840 = vld [vmem:[%s2 + $0x178] sm:$0xf]
      %v1841 = vld [vmem:[%s2 + $0x17c] sm:$0xf]
      %v1842 = vld [vmem:[%s2 + $0x180] sm:$0xf]
      %v1843 = vld [vmem:[%s2 + $0x184] sm:$0xf]
      %v1844 = vld [vmem:[%s2 + $0x188] sm:$0xf]
      %v1845 = vld [vmem:[%s2 + $0x18c] sm:$0xf]
      %v1846 = vld [vmem:[%s2 + $0x190] sm:$0xf]
      %v1847 = vld [vmem:[%s2 + $0x194] sm:$0xf]
      %v1848 = vld [vmem:[%s2 + $0x198] sm:$0xf]
      %v1849 = vld [vmem:[%s2 + $0x19c] sm:$0xf]
      %v1850 = vld [vmem:[%s2 + $0x1a0] sm:$0xf]
      %v1851 = vld [vmem:[%s2 + $0x1a4] sm:$0xf]
      %v1852 = vld [vmem:[%s2 + $0x1a8] sm:$0xf]
      %v1853 = vld [vmem:[%s2 + $0x1ac] sm:$0xf]
      %v1854 = vld [vmem:[%s2 + $0x1b0] sm:$0xf]
      %v1855 = vld [vmem:[%s2 + $0x1b4] sm:$0xf]
      %v1856 = vld [vmem:[%s2 + $0x1b8] sm:$0xf]
      %v1857 = vld [vmem:[%s2 + $0x1bc] sm:$0xf]
      %v1858 = vld [vmem:[%s2 + $0x1c0] sm:$0xf]
      %v1859 = vld [vmem:[%s2 + $0x1c4] sm:$0xf]
      %v1860 = vld [vmem:[%s2 + $0x1c8] sm:$0xf]
      %v1861 = vld [vmem:[%s2 + $0x1cc] sm:$0xf]
      %v1862 = vld [vmem:[%s2 + $0x1d0] sm:$0xf]
      %v1863 = vld [vmem:[%s2 + $0x1d4] sm:$0xf]
      %v1864 = vld [vmem:[%s2 + $0x1d8] sm:$0xf]
      %v1865 = vld [vmem:[%s2 + $0x1dc] sm:$0xf]
      %v1866 = vld [vmem:[%s2 + $0x1e0] sm:$0xf]
      %v1867 = vld [vmem:[%s2 + $0x1e4] sm:$0xf]
      %v1868 = vld [vmem:[%s2 + $0x1e8] sm:$0xf]
      %v1869 = vld [vmem:[%s2 + $0x1ec] sm:$0xf]
      %v1870 = vld [vmem:[%s2 + $0x1f0] sm:$0xf]
      %v1871 = vld [vmem:[%s2 + $0x1f4] sm:$0xf]
      %v1872 = vld [vmem:[%s2 + $0x1f8] sm:$0xf]
      %v1873 = vld [vmem:[%s2 + $0x1fc] sm:$0xf]
      %v1874 = vld [vmem:[%s2 + $0x200] sm:$0xf]
      %v1875 = vld [vmem:[%s2 + $0x204] sm:$0xf]
      %v1876 = vld [vmem:[%s2 + $0x208] sm:$0xf]
      %v1877 = vld [vmem:[%s2 + $0x20c] sm:$0xf]
      %v1878 = vld [vmem:[%s2 + $0x210] sm:$0xf]
      %v1879 = vld [vmem:[%s2 + $0x214] sm:$0xf]
      %v1880 = vld [vmem:[%s2 + $0x218] sm:$0xf]
      %v1881 = vld [vmem:[%s2 + $0x21c] sm:$0xf]
      %v1882 = vld [vmem:[%s2 + $0x220] sm:$0xf]
      %v1883 = vld [vmem:[%s2 + $0x224] sm:$0xf]
      %v1884 = vld [vmem:[%s2 + $0x228] sm:$0xf]
      %v1885 = vld [vmem:[%s2 + $0x22c] sm:$0xf]
      %v1886 = vld [vmem:[%s2 + $0x230] sm:$0xf]
      %v1887 = vld [vmem:[%s2 + $0x234] sm:$0xf]
      %v1888 = vld [vmem:[%s2 + $0x238] sm:$0xf]
      %v1889 = vld [vmem:[%s2 + $0x23c] sm:$0xf]
      %v1890 = vld [vmem:[%s2 + $0x240] sm:$0xf]
      %v1891 = vld [vmem:[%s2 + $0x244] sm:$0xf]
      %v1892 = vld [vmem:[%s2 + $0x248] sm:$0xf]
      %v1893 = vld [vmem:[%s2 + $0x24c] sm:$0xf]
      %v1894 = vld [vmem:[%s2 + $0x250] sm:$0xf]
      %v1895 = vld [vmem:[%s2 + $0x254] sm:$0xf]
      %v1896 = vld [vmem:[%s2 + $0x258] sm:$0xf]
      %v1897 = vld [vmem:[%s2 + $0x25c] sm:$0xf]
      %v1898 = vld [vmem:[%s2 + $0x260] sm:$0xf]
      %v1899 = vld [vmem:[%s2 + $0x264] sm:$0xf]
      %v1900 = vld [vmem:[%s2 + $0x268] sm:$0xf]
      %v1901 = vld [vmem:[%s2 + $0x26c] sm:$0xf]
      %v1902 = vld [vmem:[%s2 + $0x270] sm:$0xf]
      %v1903 = vld [vmem:[%s2 + $0x274] sm:$0xf]
      %v1904 = vld [vmem:[%s2 + $0x278] sm:$0xf]
      %v1905 = vld [vmem:[%s2 + $0x27c] sm:$0xf]
      %v1906 = vld [vmem:[%s2 + $0x280] sm:$0xf]
      %v1907 = vld [vmem:[%s2 + $0x284] sm:$0xf]
      %v1908 = vld [vmem:[%s2 + $0x288] sm:$0xf]
      %v1909 = vld [vmem:[%s2 + $0x28c] sm:$0xf]
      %v1910 = vld [vmem:[%s2 + $0x290] sm:$0xf]
      %v1911 = vld [vmem:[%s2 + $0x294] sm:$0xf]
      %v1912 = vld [vmem:[%s2 + $0x298] sm:$0xf]
      %v1913 = vld [vmem:[%s2 + $0x29c] sm:$0xf]
      %v1914 = vld [vmem:[%s2 + $0x2a0] sm:$0xf]
      %v1915 = vld [vmem:[%s2 + $0x2a4] sm:$0xf]
      %v1916 = vld [vmem:[%s2 + $0x2a8] sm:$0xf]
      %v1917 = vld [vmem:[%s2 + $0x2ac] sm:$0xf]
      %v1918 = vld [vmem:[%s2 + $0x2b0] sm:$0xf]
      %v1919 = vld [vmem:[%s2 + $0x2b4] sm:$0xf]
      %v1920 = vld [vmem:[%s2 + $0x2b8] sm:$0xf]
      %v1921 = vld [vmem:[%s2 + $0x2bc] sm:$0xf]
      %v1922 = vld [vmem:[%s2 + $0x2c0] sm:$0xf]
      %v1923 = vld [vmem:[%s2 + $0x2c4] sm:$0xf]
      %v1924 = vld [vmem:[%s2 + $0x2c8] sm:$0xf]
      %v1925 = vld [vmem:[%s2 + $0x2cc] sm:$0xf]
      %v1926 = vld [vmem:[%s2 + $0x2d0] sm:$0xf]
      %v1927 = vld [vmem:[%s2 + $0x2d4] sm:$0xf]
      %v1928 = vld [vmem:[%s2 + $0x2d8] sm:$0xf]
      %v1929 = vld [vmem:[%s2 + $0x2dc] sm:$0xf]
      %v1930 = vld [vmem:[%s2 + $0x2e0] sm:$0xf]
      %v1931 = vld [vmem:[%s2 + $0x2e4] sm:$0xf]
      %v1932 = vld [vmem:[%s2 + $0x2e8] sm:$0xf]
      %v1933 = vld [vmem:[%s2 + $0x2ec] sm:$0xf]
      %v1934 = vld [vmem:[%s2 + $0x2f0] sm:$0xf]
      %v1935 = vld [vmem:[%s2 + $0x2f4] sm:$0xf]
      %v1936 = vld [vmem:[%s2 + $0x2f8] sm:$0xf]
      %v1937 = vld [vmem:[%s2 + $0x2fc] sm:$0xf]
      %v1938 = vld [vmem:[%s2 + $0x300] sm:$0xf]
      %v1939 = vld [vmem:[%s2 + $0x304] sm:$0xf]
      %v1940 = vld [vmem:[%s2 + $0x308] sm:$0xf]
      %v1941 = vld [vmem:[%s2 + $0x30c] sm:$0xf]
      %v1942 = vld [vmem:[%s2 + $0x310] sm:$0xf]
      %v1943 = vld [vmem:[%s2 + $0x314] sm:$0xf]
      %v1944 = vld [vmem:[%s2 + $0x318] sm:$0xf]
      %v1945 = vld [vmem:[%s2 + $0x31c] sm:$0xf]
      %v1946 = vld [vmem:[%s2 + $0x320] sm:$0xf]
      %v1947 = vld [vmem:[%s2 + $0x324] sm:$0xf]
      %v1948 = vld [vmem:[%s2 + $0x328] sm:$0xf]
      %v1949 = vld [vmem:[%s2 + $0x32c] sm:$0xf]
      %v1950 = vld [vmem:[%s2 + $0x330] sm:$0xf]
      %v1951 = vld [vmem:[%s2 + $0x334] sm:$0xf]
      %v1952 = vld [vmem:[%s2 + $0x338] sm:$0xf]
      %v1953 = vld [vmem:[%s2 + $0x33c] sm:$0xf]
      %v1954 = vld [vmem:[%s2 + $0x340] sm:$0xf]
      %v1955 = vld [vmem:[%s2 + $0x344] sm:$0xf]
      %v1956 = vld [vmem:[%s2 + $0x348] sm:$0xf]
      %v1957 = vld [vmem:[%s2 + $0x34c] sm:$0xf]
      %v1958 = vld [vmem:[%s2 + $0x350] sm:$0xf]
      %v1959 = vld [vmem:[%s2 + $0x354] sm:$0xf]
      %v1960 = vld [vmem:[%s2 + $0x358] sm:$0xf]
      %v1961 = vld [vmem:[%s2 + $0x35c] sm:$0xf]
      %v1962 = vld [vmem:[%s2 + $0x360] sm:$0xf]
      %v1963 = vld [vmem:[%s2 + $0x364] sm:$0xf]
      %v1964 = vld [vmem:[%s2 + $0x368] sm:$0xf]
      %v1965 = vld [vmem:[%s2 + $0x36c] sm:$0xf]
      %v1966 = vld [vmem:[%s2 + $0x370] sm:$0xf]
      %v1967 = vld [vmem:[%s2 + $0x374] sm:$0xf]
      %v1968 = vld [vmem:[%s2 + $0x378] sm:$0xf]
      %v1969 = vld [vmem:[%s2 + $0x37c] sm:$0xf]
      %v1970 = vld [vmem:[%s2 + $0x380] sm:$0xf]
      %v1971 = vld [vmem:[%s2 + $0x384] sm:$0xf]
      %v1972 = vld [vmem:[%s2 + $0x388] sm:$0xf]
      %v1973 = vld [vmem:[%s2 + $0x38c] sm:$0xf]
      %v1974 = vld [vmem:[%s2 + $0x390] sm:$0xf]
      %v1975 = vld [vmem:[%s2 + $0x394] sm:$0xf]
      %v1976 = vld [vmem:[%s2 + $0x398] sm:$0xf]
      %v1977 = vld [vmem:[%s2 + $0x39c] sm:$0xf]
      %v1978 = vld [vmem:[%s2 + $0x3a0] sm:$0xf]
      %v1979 = vld [vmem:[%s2 + $0x3a4] sm:$0xf]
      %v1980 = vld [vmem:[%s2 + $0x3a8] sm:$0xf]
      %v1981 = vld [vmem:[%s2 + $0x3ac] sm:$0xf]
      %v1982 = vld [vmem:[%s2 + $0x3b0] sm:$0xf]
      %v1983 = vld [vmem:[%s2 + $0x3b4] sm:$0xf]
      %v1984 = vld [vmem:[%s2 + $0x3b8] sm:$0xf]
      %v1985 = vld [vmem:[%s2 + $0x3bc] sm:$0xf]
      %v1986 = vld [vmem:[%s2 + $0x3c0] sm:$0xf]
      %v1987 = vld [vmem:[%s2 + $0x3c4] sm:$0xf]
      %v1988 = vld [vmem:[%s2 + $0x3c8] sm:$0xf]
      %v1989 = vld [vmem:[%s2 + $0x3cc] sm:$0xf]
      %v1990 = vld [vmem:[%s2 + $0x3d0] sm:$0xf]
      %v1991 = vld [vmem:[%s2 + $0x3d4] sm:$0xf]
      %v1992 = vld [vmem:[%s2 + $0x3d8] sm:$0xf]
      %v1993 = vld [vmem:[%s2 + $0x3dc] sm:$0xf]
      %v1994 = vld [vmem:[%s2 + $0x3e0] sm:$0xf]
      %v1995 = vld [vmem:[%s2 + $0x3e4] sm:$0xf]
      %v1996 = vld [vmem:[%s2 + $0x3e8] sm:$0xf]
      %v1997 = vld [vmem:[%s2 + $0x3ec] sm:$0xf]
      %v1998 = vld [vmem:[%s2 + $0x3f0] sm:$0xf]
      %v1999 = vld [vmem:[%s2 + $0x3f4] sm:$0xf]
      %v2000 = vld [vmem:[%s2 + $0x3f8] sm:$0xf]
      %v2001 = vld [vmem:[%s2 + $0x3fc] sm:$0xf]
      %v2002 = vld [vmem:[%s2 + $0x400] sm:$0xf]
      %v2003 = vld [vmem:[%s2 + $0x404] sm:$0xf]
      %v2004 = vld [vmem:[%s2 + $0x408] sm:$0xf]
      %v2005 = vld [vmem:[%s2 + $0x40c] sm:$0xf]
      %v2006 = vld [vmem:[%s2 + $0x410] sm:$0xf]
      %v2007 = vld [vmem:[%s2 + $0x414] sm:$0xf]
      %v2008 = vld [vmem:[%s2 + $0x418] sm:$0xf]
      %v2009 = vld [vmem:[%s2 + $0x41c] sm:$0xf]
      %v2010 = vld [vmem:[%s2 + $0x420] sm:$0xf]
      %v2011 = vld [vmem:[%s2 + $0x424] sm:$0xf]
      %v2012 = vld [vmem:[%s2 + $0x428] sm:$0xf]
      %v2013 = vld [vmem:[%s2 + $0x42c] sm:$0xf]
      %v2014 = vld [vmem:[%s2 + $0x430] sm:$0xf]
      %v2015 = vld [vmem:[%s2 + $0x434] sm:$0xf]
      %v2016 = vld [vmem:[%s2 + $0x438] sm:$0xf]
      %v2017 = vld [vmem:[%s2 + $0x43c] sm:$0xf]
      %v2018 = vld [vmem:[%s2 + $0x440] sm:$0xf]
      %v2019 = vld [vmem:[%s2 + $0x444] sm:$0xf]
      %v2020 = vld [vmem:[%s2 + $0x448] sm:$0xf]
      %v2021 = vld [vmem:[%s2 + $0x44c] sm:$0xf]
      %v2022 = vld [vmem:[%s2 + $0x450] sm:$0xf]
      %v2023 = vld [vmem:[%s2 + $0x454] sm:$0xf]
      %v2024 = vld [vmem:[%s2 + $0x458] sm:$0xf]
      %v2025 = vld [vmem:[%s2 + $0x45c] sm:$0xf]
      %v2026 = vld [vmem:[%s2 + $0x460] sm:$0xf]
      %v2027 = vld [vmem:[%s2 + $0x464] sm:$0xf]
      %v2028 = vld [vmem:[%s2 + $0x468] sm:$0xf]
      %v2029 = vld [vmem:[%s2 + $0x46c] sm:$0xf]
      %v2030 = vld [vmem:[%s2 + $0x470] sm:$0xf]
      %v2031 = vld [vmem:[%s2 + $0x474] sm:$0xf]
      %v2032 = vld [vmem:[%s2 + $0x478] sm:$0xf]
      %v2033 = vld [vmem:[%s2 + $0x47c] sm:$0xf]
      %v2322 = vunpack.c.l.b16 %v1746
      %v2323 = vunpack.c.l.b16 %v1747
      %v2324 = vunpack.c.l.b16 %v1748
      %v2325 = vunpack.c.l.b16 %v1749
      %v2326 = vunpack.c.l.b16 %v1750
      %v2327 = vunpack.c.l.b16 %v1751
      %v2328 = vunpack.c.l.b16 %v1752
      %v2329 = vunpack.c.l.b16 %v1753
      %v2330 = vunpack.c.l.b16 %v1754
      %v2331 = vunpack.c.l.b16 %v1755
      %v2332 = vunpack.c.l.b16 %v1756
      %v2333 = vunpack.c.l.b16 %v1757
      %v2334 = vunpack.c.l.b16 %v1758
      %v2335 = vunpack.c.l.b16 %v1759
      %v2336 = vunpack.c.l.b16 %v1760
      %v2337 = vunpack.c.l.b16 %v1761
      %v2338 = vunpack.c.l.b16 %v1762
      %v2339 = vunpack.c.l.b16 %v1763
      %v2340 = vunpack.c.l.b16 %v1764
      %v2341 = vunpack.c.l.b16 %v1765
      %v2342 = vunpack.c.l.b16 %v1766
      %v2343 = vunpack.c.l.b16 %v1767
      %v2344 = vunpack.c.l.b16 %v1768
      %v2345 = vunpack.c.l.b16 %v1769
      %v2346 = vunpack.c.l.b16 %v1770
      %v2347 = vunpack.c.l.b16 %v1771
      %v2348 = vunpack.c.l.b16 %v1772
      %v2349 = vunpack.c.l.b16 %v1773
      %v2350 = vunpack.c.l.b16 %v1774
      %v2351 = vunpack.c.l.b16 %v1775
      %v2352 = vunpack.c.l.b16 %v1776
      %v2353 = vunpack.c.l.b16 %v1777
      %v2354 = vunpack.c.l.b16 %v1778
      %v2355 = vunpack.c.l.b16 %v1779
      %v2356 = vunpack.c.l.b16 %v1780
      %v2357 = vunpack.c.l.b16 %v1781
      %v2358 = vunpack.c.l.b16 %v1782
      %v2359 = vunpack.c.l.b16 %v1783
      %v2360 = vunpack.c.l.b16 %v1784
      %v2361 = vunpack.c.l.b16 %v1785
      %v2362 = vunpack.c.l.b16 %v1786
      %v2363 = vunpack.c.l.b16 %v1787
      %v2364 = vunpack.c.l.b16 %v1788
      %v2365 = vunpack.c.l.b16 %v1789
      %v2366 = vunpack.c.l.b16 %v1790
      %v2367 = vunpack.c.l.b16 %v1791
      %v2368 = vunpack.c.l.b16 %v1792
      %v2369 = vunpack.c.l.b16 %v1793
      %v2370 = vunpack.c.l.b16 %v1794
      %v2371 = vunpack.c.l.b16 %v1795
      %v2372 = vunpack.c.l.b16 %v1796
      %v2373 = vunpack.c.l.b16 %v1797
      %v2374 = vunpack.c.l.b16 %v1798
      %v2375 = vunpack.c.l.b16 %v1799
      %v2376 = vunpack.c.l.b16 %v1800
      %v2377 = vunpack.c.l.b16 %v1801
      %v2378 = vunpack.c.l.b16 %v1802
      %v2379 = vunpack.c.l.b16 %v1803
      %v2380 = vunpack.c.l.b16 %v1804
      %v2381 = vunpack.c.l.b16 %v1805
      %v2382 = vunpack.c.l.b16 %v1806
      %v2383 = vunpack.c.l.b16 %v1807
      %v2384 = vunpack.c.l.b16 %v1808
      %v2385 = vunpack.c.l.b16 %v1809
      %v2386 = vunpack.c.l.b16 %v1810
      %v2387 = vunpack.c.l.b16 %v1811
      %v2388 = vunpack.c.l.b16 %v1812
      %v2389 = vunpack.c.l.b16 %v1813
      %v2390 = vunpack.c.l.b16 %v1814
      %v2391 = vunpack.c.l.b16 %v1815
      %v2392 = vunpack.c.l.b16 %v1816
      %v2393 = vunpack.c.l.b16 %v1817
      %v2394 = vunpack.c.l.b16 %v1818
      %v2395 = vunpack.c.l.b16 %v1819
      %v2396 = vunpack.c.l.b16 %v1820
      %v2397 = vunpack.c.l.b16 %v1821
      %v2398 = vunpack.c.l.b16 %v1822
      %v2399 = vunpack.c.l.b16 %v1823
      %v2400 = vunpack.c.l.b16 %v1824
      %v2401 = vunpack.c.l.b16 %v1825
      %v2402 = vunpack.c.l.b16 %v1826
      %v2403 = vunpack.c.l.b16 %v1827
      %v2404 = vunpack.c.l.b16 %v1828
      %v2405 = vunpack.c.l.b16 %v1829
      %v2406 = vunpack.c.l.b16 %v1830
      %v2407 = vunpack.c.l.b16 %v1831
      %v2408 = vunpack.c.l.b16 %v1832
      %v2409 = vunpack.c.l.b16 %v1833
      %v2410 = vunpack.c.l.b16 %v1834
      %v2411 = vunpack.c.l.b16 %v1835
      %v2412 = vunpack.c.l.b16 %v1836
      %v2413 = vunpack.c.l.b16 %v1837
      %v2414 = vunpack.c.l.b16 %v1838
      %v2415 = vunpack.c.l.b16 %v1839
      %v2416 = vunpack.c.l.b16 %v1840
      %v2417 = vunpack.c.l.b16 %v1841
      %v2418 = vunpack.c.l.b16 %v1842
      %v2419 = vunpack.c.l.b16 %v1843
      %v2420 = vunpack.c.l.b16 %v1844
      %v2421 = vunpack.c.l.b16 %v1845
      %v2422 = vunpack.c.l.b16 %v1846
      %v2423 = vunpack.c.l.b16 %v1847
      %v2424 = vunpack.c.l.b16 %v1848
      %v2425 = vunpack.c.l.b16 %v1849
      %v2426 = vunpack.c.l.b16 %v1850
      %v2427 = vunpack.c.l.b16 %v1851
      %v2428 = vunpack.c.l.b16 %v1852
      %v2429 = vunpack.c.l.b16 %v1853
      %v2430 = vunpack.c.l.b16 %v1854
      %v2431 = vunpack.c.l.b16 %v1855
      %v2432 = vunpack.c.l.b16 %v1856
      %v2433 = vunpack.c.l.b16 %v1857
      %v2434 = vunpack.c.l.b16 %v1858
      %v2435 = vunpack.c.l.b16 %v1859
      %v2436 = vunpack.c.l.b16 %v1860
      %v2437 = vunpack.c.l.b16 %v1861
      %v2438 = vunpack.c.l.b16 %v1862
      %v2439 = vunpack.c.l.b16 %v1863
      %v2440 = vunpack.c.l.b16 %v1864
      %v2441 = vunpack.c.l.b16 %v1865
      %v2442 = vunpack.c.l.b16 %v1866
      %v2443 = vunpack.c.l.b16 %v1867
      %v2444 = vunpack.c.l.b16 %v1868
      %v2445 = vunpack.c.l.b16 %v1869
      %v2446 = vunpack.c.l.b16 %v1870
      %v2447 = vunpack.c.l.b16 %v1871
      %v2448 = vunpack.c.l.b16 %v1872
      %v2449 = vunpack.c.l.b16 %v1873
      %v2450 = vunpack.c.l.b16 %v1874
      %v2451 = vunpack.c.l.b16 %v1875
      %v2452 = vunpack.c.l.b16 %v1876
      %v2453 = vunpack.c.l.b16 %v1877
      %v2454 = vunpack.c.l.b16 %v1878
      %v2455 = vunpack.c.l.b16 %v1879
      %v2456 = vunpack.c.l.b16 %v1880
      %v2457 = vunpack.c.l.b16 %v1881
      %v2458 = vunpack.c.l.b16 %v1882
      %v2459 = vunpack.c.l.b16 %v1883
      %v2460 = vunpack.c.l.b16 %v1884
      %v2461 = vunpack.c.l.b16 %v1885
      %v2462 = vunpack.c.l.b16 %v1886
      %v2463 = vunpack.c.l.b16 %v1887
      %v2464 = vunpack.c.l.b16 %v1888
      %v2465 = vunpack.c.l.b16 %v1889
      %v2466 = vunpack.c.l.b16 %v1890
      %v2467 = vunpack.c.l.b16 %v1891
      %v2468 = vunpack.c.l.b16 %v1892
      %v2469 = vunpack.c.l.b16 %v1893
      %v2470 = vunpack.c.l.b16 %v1894
      %v2471 = vunpack.c.l.b16 %v1895
      %v2472 = vunpack.c.l.b16 %v1896
      %v2473 = vunpack.c.l.b16 %v1897
      %v2474 = vunpack.c.l.b16 %v1898
      %v2475 = vunpack.c.l.b16 %v1899
      %v2476 = vunpack.c.l.b16 %v1900
      %v2477 = vunpack.c.l.b16 %v1901
      %v2478 = vunpack.c.l.b16 %v1902
      %v2479 = vunpack.c.l.b16 %v1903
      %v2480 = vunpack.c.l.b16 %v1904
      %v2481 = vunpack.c.l.b16 %v1905
      %v2482 = vunpack.c.l.b16 %v1906
      %v2483 = vunpack.c.l.b16 %v1907
      %v2484 = vunpack.c.l.b16 %v1908
      %v2485 = vunpack.c.l.b16 %v1909
      %v2486 = vunpack.c.l.b16 %v1910
      %v2487 = vunpack.c.l.b16 %v1911
      %v2488 = vunpack.c.l.b16 %v1912
      %v2489 = vunpack.c.l.b16 %v1913
      %v2490 = vunpack.c.l.b16 %v1914
      %v2491 = vunpack.c.l.b16 %v1915
      %v2492 = vunpack.c.l.b16 %v1916
      %v2493 = vunpack.c.l.b16 %v1917
      %v2494 = vunpack.c.l.b16 %v1918
      %v2495 = vunpack.c.l.b16 %v1919
      %v2496 = vunpack.c.l.b16 %v1920
      %v2497 = vunpack.c.l.b16 %v1921
      %v2498 = vunpack.c.l.b16 %v1922
      %v2499 = vunpack.c.l.b16 %v1923
      %v2500 = vunpack.c.l.b16 %v1924
      %v2501 = vunpack.c.l.b16 %v1925
      %v2502 = vunpack.c.l.b16 %v1926
      %v2503 = vunpack.c.l.b16 %v1927
      %v2504 = vunpack.c.l.b16 %v1928
      %v2505 = vunpack.c.l.b16 %v1929
      %v2506 = vunpack.c.l.b16 %v1930
      %v2507 = vunpack.c.l.b16 %v1931
      %v2508 = vunpack.c.l.b16 %v1932
      %v2509 = vunpack.c.l.b16 %v1933
      %v2510 = vunpack.c.l.b16 %v1934
      %v2511 = vunpack.c.l.b16 %v1935
      %v2512 = vunpack.c.l.b16 %v1936
      %v2513 = vunpack.c.l.b16 %v1937
      %v2514 = vunpack.c.l.b16 %v1938
      %v2515 = vunpack.c.l.b16 %v1939
      %v2516 = vunpack.c.l.b16 %v1940
      %v2517 = vunpack.c.l.b16 %v1941
      %v2518 = vunpack.c.l.b16 %v1942
      %v2519 = vunpack.c.l.b16 %v1943
      %v2520 = vunpack.c.l.b16 %v1944
      %v2521 = vunpack.c.l.b16 %v1945
      %v2522 = vunpack.c.l.b16 %v1946
      %v2523 = vunpack.c.l.b16 %v1947
      %v2524 = vunpack.c.l.b16 %v1948
      %v2525 = vunpack.c.l.b16 %v1949
      %v2526 = vunpack.c.l.b16 %v1950
      %v2527 = vunpack.c.l.b16 %v1951
      %v2528 = vunpack.c.l.b16 %v1952
      %v2529 = vunpack.c.l.b16 %v1953
      %v2530 = vunpack.c.l.b16 %v1954
      %v2531 = vunpack.c.l.b16 %v1955
      %v2532 = vunpack.c.l.b16 %v1956
      %v2533 = vunpack.c.l.b16 %v1957
      %v2534 = vunpack.c.l.b16 %v1958
      %v2535 = vunpack.c.l.b16 %v1959
      %v2536 = vunpack.c.l.b16 %v1960
      %v2537 = vunpack.c.l.b16 %v1961
      %v2538 = vunpack.c.l.b16 %v1962
      %v2539 = vunpack.c.l.b16 %v1963
      %v2540 = vunpack.c.l.b16 %v1964
      %v2541 = vunpack.c.l.b16 %v1965
      %v2542 = vunpack.c.l.b16 %v1966
      %v2543 = vunpack.c.l.b16 %v1967
      %v2544 = vunpack.c.l.b16 %v1968
      %v2545 = vunpack.c.l.b16 %v1969
      %v2546 = vunpack.c.l.b16 %v1970
      %v2547 = vunpack.c.l.b16 %v1971
      %v2548 = vunpack.c.l.b16 %v1972
      %v2549 = vunpack.c.l.b16 %v1973
      %v2550 = vunpack.c.l.b16 %v1974
      %v2551 = vunpack.c.l.b16 %v1975
      %v2552 = vunpack.c.l.b16 %v1976
      %v2553 = vunpack.c.l.b16 %v1977
      %v2554 = vunpack.c.l.b16 %v1978
      %v2555 = vunpack.c.l.b16 %v1979
      %v2556 = vunpack.c.l.b16 %v1980
      %v2557 = vunpack.c.l.b16 %v1981
      %v2558 = vunpack.c.l.b16 %v1982
      %v2559 = vunpack.c.l.b16 %v1983
      %v2560 = vunpack.c.l.b16 %v1984
      %v2561 = vunpack.c.l.b16 %v1985
      %v2562 = vunpack.c.l.b16 %v1986
      %v2563 = vunpack.c.l.b16 %v1987
      %v2564 = vunpack.c.l.b16 %v1988
      %v2565 = vunpack.c.l.b16 %v1989
      %v2566 = vunpack.c.l.b16 %v1990
      %v2567 = vunpack.c.l.b16 %v1991
      %v2568 = vunpack.c.l.b16 %v1992
      %v2569 = vunpack.c.l.b16 %v1993
      %v2570 = vunpack.c.l.b16 %v1994
      %v2571 = vunpack.c.l.b16 %v1995
      %v2572 = vunpack.c.l.b16 %v1996
      %v2573 = vunpack.c.l.b16 %v1997
      %v2574 = vunpack.c.l.b16 %v1998
      %v2575 = vunpack.c.l.b16 %v1999
      %v2576 = vunpack.c.l.b16 %v2000
      %v2577 = vunpack.c.l.b16 %v2001
      %v2578 = vunpack.c.l.b16 %v2002
      %v2579 = vunpack.c.l.b16 %v2003
      %v2580 = vunpack.c.l.b16 %v2004
      %v2581 = vunpack.c.l.b16 %v2005
      %v2582 = vunpack.c.l.b16 %v2006
      %v2583 = vunpack.c.l.b16 %v2007
      %v2584 = vunpack.c.l.b16 %v2008
      %v2585 = vunpack.c.l.b16 %v2009
      %v2586 = vunpack.c.l.b16 %v2010
      %v2587 = vunpack.c.l.b16 %v2011
      %v2588 = vunpack.c.l.b16 %v2012
      %v2589 = vunpack.c.l.b16 %v2013
      %v2590 = vunpack.c.l.b16 %v2014
      %v2591 = vunpack.c.l.b16 %v2015
      %v2592 = vunpack.c.l.b16 %v2016
      %v2593 = vunpack.c.l.b16 %v2017
      %v2594 = vunpack.c.l.b16 %v2018
      %v2595 = vunpack.c.l.b16 %v2019
      %v2596 = vunpack.c.l.b16 %v2020
      %v2597 = vunpack.c.l.b16 %v2021
      %v2598 = vunpack.c.l.b16 %v2022
      %v2599 = vunpack.c.l.b16 %v2023
      %v2600 = vunpack.c.l.b16 %v2024
      %v2601 = vunpack.c.l.b16 %v2025
      %v2602 = vunpack.c.l.b16 %v2026
      %v2603 = vunpack.c.l.b16 %v2027
      %v2604 = vunpack.c.l.b16 %v2028
      %v2605 = vunpack.c.l.b16 %v2029
      %v2606 = vunpack.c.l.b16 %v2030
      %v2607 = vunpack.c.l.b16 %v2031
      %v2608 = vunpack.c.l.b16 %v2032
      %v2609 = vunpack.c.l.b16 %v2033
      %v2610 = vpack.c.b16 %v2323, %v2322
      %v2611 = vpack.c.b16 %v2325, %v2324
      %v2612 = vpack.c.b16 %v2327, %v2326
      %v2613 = vpack.c.b16 %v2329, %v2328
      %v2614 = vpack.c.b16 %v2331, %v2330
      %v2615 = vpack.c.b16 %v2333, %v2332
      %v2616 = vpack.c.b16 %v2335, %v2334
      %v2617 = vpack.c.b16 %v2337, %v2336
      %v2618 = vpack.c.b16 %v2339, %v2338
      %v2619 = vpack.c.b16 %v2341, %v2340
      %v2620 = vpack.c.b16 %v2343, %v2342
      %v2621 = vpack.c.b16 %v2345, %v2344
      %v2622 = vpack.c.b16 %v2347, %v2346
      %v2623 = vpack.c.b16 %v2349, %v2348
      %v2624 = vpack.c.b16 %v2351, %v2350
      %v2625 = vpack.c.b16 %v2353, %v2352
      %v2626 = vpack.c.b16 %v2355, %v2354
      %v2627 = vpack.c.b16 %v2357, %v2356
      %v2628 = vpack.c.b16 %v2359, %v2358
      %v2629 = vpack.c.b16 %v2361, %v2360
      %v2630 = vpack.c.b16 %v2363, %v2362
      %v2631 = vpack.c.b16 %v2365, %v2364
      %v2632 = vpack.c.b16 %v2367, %v2366
      %v2633 = vpack.c.b16 %v2369, %v2368
      %v2634 = vpack.c.b16 %v2371, %v2370
      %v2635 = vpack.c.b16 %v2373, %v2372
      %v2636 = vpack.c.b16 %v2375, %v2374
      %v2637 = vpack.c.b16 %v2377, %v2376
      %v2638 = vpack.c.b16 %v2379, %v2378
      %v2639 = vpack.c.b16 %v2381, %v2380
      %v2640 = vpack.c.b16 %v2383, %v2382
      %v2641 = vpack.c.b16 %v2385, %v2384
      %v2642 = vpack.c.b16 %v2387, %v2386
      %v2643 = vpack.c.b16 %v2389, %v2388
      %v2644 = vpack.c.b16 %v2391, %v2390
      %v2645 = vpack.c.b16 %v2393, %v2392
      %v2646 = vpack.c.b16 %v2395, %v2394
      %v2647 = vpack.c.b16 %v2397, %v2396
      %v2648 = vpack.c.b16 %v2399, %v2398
      %v2649 = vpack.c.b16 %v2401, %v2400
      %v2650 = vpack.c.b16 %v2403, %v2402
      %v2651 = vpack.c.b16 %v2405, %v2404
      %v2652 = vpack.c.b16 %v2407, %v2406
      %v2653 = vpack.c.b16 %v2409, %v2408
      %v2654 = vpack.c.b16 %v2411, %v2410
      %v2655 = vpack.c.b16 %v2413, %v2412
      %v2656 = vpack.c.b16 %v2415, %v2414
      %v2657 = vpack.c.b16 %v2417, %v2416
      %v2658 = vpack.c.b16 %v2419, %v2418
      %v2659 = vpack.c.b16 %v2421, %v2420
      %v2660 = vpack.c.b16 %v2423, %v2422
      %v2661 = vpack.c.b16 %v2425, %v2424
      %v2662 = vpack.c.b16 %v2427, %v2426
      %v2663 = vpack.c.b16 %v2429, %v2428
      %v2664 = vpack.c.b16 %v2431, %v2430
      %v2665 = vpack.c.b16 %v2433, %v2432
      %v2666 = vpack.c.b16 %v2435, %v2434
      %v2667 = vpack.c.b16 %v2437, %v2436
      %v2668 = vpack.c.b16 %v2439, %v2438
      %v2669 = vpack.c.b16 %v2441, %v2440
      %v2670 = vpack.c.b16 %v2443, %v2442
      %v2671 = vpack.c.b16 %v2445, %v2444
      %v2672 = vpack.c.b16 %v2447, %v2446
      %v2673 = vpack.c.b16 %v2449, %v2448
      %v2674 = vpack.c.b16 %v2451, %v2450
      %v2675 = vpack.c.b16 %v2453, %v2452
      %v2676 = vpack.c.b16 %v2455, %v2454
      %v2677 = vpack.c.b16 %v2457, %v2456
      %v2678 = vpack.c.b16 %v2459, %v2458
      %v2679 = vpack.c.b16 %v2461, %v2460
      %v2680 = vpack.c.b16 %v2463, %v2462
      %v2681 = vpack.c.b16 %v2465, %v2464
      %v2682 = vpack.c.b16 %v2467, %v2466
      %v2683 = vpack.c.b16 %v2469, %v2468
      %v2684 = vpack.c.b16 %v2471, %v2470
      %v2685 = vpack.c.b16 %v2473, %v2472
      %v2686 = vpack.c.b16 %v2475, %v2474
      %v2687 = vpack.c.b16 %v2477, %v2476
      %v2688 = vpack.c.b16 %v2479, %v2478
      %v2689 = vpack.c.b16 %v2481, %v2480
      %v2690 = vpack.c.b16 %v2483, %v2482
      %v2691 = vpack.c.b16 %v2485, %v2484
      %v2692 = vpack.c.b16 %v2487, %v2486
      %v2693 = vpack.c.b16 %v2489, %v2488
      %v2694 = vpack.c.b16 %v2491, %v2490
      %v2695 = vpack.c.b16 %v2493, %v2492
      %v2696 = vpack.c.b16 %v2495, %v2494
      %v2697 = vpack.c.b16 %v2497, %v2496
      %v2698 = vpack.c.b16 %v2499, %v2498
      %v2699 = vpack.c.b16 %v2501, %v2500
      %v2700 = vpack.c.b16 %v2503, %v2502
      %v2701 = vpack.c.b16 %v2505, %v2504
      %v2702 = vpack.c.b16 %v2507, %v2506
      %v2703 = vpack.c.b16 %v2509, %v2508
      %v2704 = vpack.c.b16 %v2511, %v2510
      %v2705 = vpack.c.b16 %v2513, %v2512
      %v2706 = vpack.c.b16 %v2515, %v2514
      %v2707 = vpack.c.b16 %v2517, %v2516
      %v2708 = vpack.c.b16 %v2519, %v2518
      %v2709 = vpack.c.b16 %v2521, %v2520
      %v2710 = vpack.c.b16 %v2523, %v2522
      %v2711 = vpack.c.b16 %v2525, %v2524
      %v2712 = vpack.c.b16 %v2527, %v2526
      %v2713 = vpack.c.b16 %v2529, %v2528
      %v2714 = vpack.c.b16 %v2531, %v2530
      %v2715 = vpack.c.b16 %v2533, %v2532
      %v2716 = vpack.c.b16 %v2535, %v2534
      %v2717 = vpack.c.b16 %v2537, %v2536
      %v2718 = vpack.c.b16 %v2539, %v2538
      %v2719 = vpack.c.b16 %v2541, %v2540
      %v2720 = vpack.c.b16 %v2543, %v2542
      %v2721 = vpack.c.b16 %v2545, %v2544
      %v2722 = vpack.c.b16 %v2547, %v2546
      %v2723 = vpack.c.b16 %v2549, %v2548
      %v2724 = vpack.c.b16 %v2551, %v2550
      %v2725 = vpack.c.b16 %v2553, %v2552
      %v2726 = vpack.c.b16 %v2555, %v2554
      %v2727 = vpack.c.b16 %v2557, %v2556
      %v2728 = vpack.c.b16 %v2559, %v2558
      %v2729 = vpack.c.b16 %v2561, %v2560
      %v2730 = vpack.c.b16 %v2563, %v2562
      %v2731 = vpack.c.b16 %v2565, %v2564
      %v2732 = vpack.c.b16 %v2567, %v2566
      %v2733 = vpack.c.b16 %v2569, %v2568
      %v2734 = vpack.c.b16 %v2571, %v2570
      %v2735 = vpack.c.b16 %v2573, %v2572
      %v2736 = vpack.c.b16 %v2575, %v2574
      %v2737 = vpack.c.b16 %v2577, %v2576
      %v2738 = vpack.c.b16 %v2579, %v2578
      %v2739 = vpack.c.b16 %v2581, %v2580
      %v2740 = vpack.c.b16 %v2583, %v2582
      %v2741 = vpack.c.b16 %v2585, %v2584
      %v2742 = vpack.c.b16 %v2587, %v2586
      %v2743 = vpack.c.b16 %v2589, %v2588
      %v2744 = vpack.c.b16 %v2591, %v2590
      %v2745 = vpack.c.b16 %v2593, %v2592
      %v2746 = vpack.c.b16 %v2595, %v2594
      %v2747 = vpack.c.b16 %v2597, %v2596
      %v2748 = vpack.c.b16 %v2599, %v2598
      %v2749 = vpack.c.b16 %v2601, %v2600
      %v2750 = vpack.c.b16 %v2603, %v2602
      %v2751 = vpack.c.b16 %v2605, %v2604
      %v2752 = vpack.c.b16 %v2607, %v2606
      %v2753 = vpack.c.b16 %v2609, %v2608
      %2898 = vmatprep.subr.bf16.mxu0 0
      %2899 = vmatpush1.bf16.msra.mxu0 %v2610
      %2900 = vmatprep.subr.bf16.mxu0 0
      %2901 = vmatpush1.bf16.msra.mxu0 %v2611
      %2902 = vmatprep.subr.bf16.mxu0 0
      %2903 = vmatpush1.bf16.msra.mxu0 %v2612
      %2904 = vmatprep.subr.bf16.mxu0 0
      %2905 = vmatpush1.bf16.msra.mxu0 %v2613
      %2906 = vmatprep.subr.bf16.mxu0 0
      %2907 = vmatpush1.bf16.msra.mxu0 %v2614
      %2908 = vmatprep.subr.bf16.mxu0 0
      %2909 = vmatpush1.bf16.msra.mxu0 %v2615
      %2910 = vmatprep.subr.bf16.mxu0 0
      %2911 = vmatpush1.bf16.msra.mxu0 %v2616
      %2912 = vmatprep.subr.bf16.mxu0 0
      %2913 = vmatpush1.bf16.msra.mxu0 %v2617
      %2914 = vmatprep.subr.bf16.mxu0 0
      %2915 = vmatpush1.bf16.msra.mxu0 %v2618
      %2916 = vmatprep.subr.bf16.mxu0 0
      %2917 = vmatpush1.bf16.msra.mxu0 %v2619
      %2918 = vmatprep.subr.bf16.mxu0 0
      %2919 = vmatpush1.bf16.msra.mxu0 %v2620
      %2920 = vmatprep.subr.bf16.mxu0 0
      %2921 = vmatpush1.bf16.msra.mxu0 %v2621
      %2922 = vmatprep.subr.bf16.mxu0 0
      %2923 = vmatpush1.bf16.msra.mxu0 %v2622
      %2924 = vmatprep.subr.bf16.mxu0 0
      %2925 = vmatpush1.bf16.msra.mxu0 %v2623
      %2926 = vmatprep.subr.bf16.mxu0 0
      %2927 = vmatpush1.bf16.msra.mxu0 %v2624
      %2928 = vmatprep.subr.bf16.mxu0 0
      %2929 = vmatpush1.bf16.msra.mxu0 %v2625
      %2930 = vmatprep.mubr.bf16.mxu0 %v1567
      %2931 = vmatmul.mubr.bf16.gmra.mrb[0].mxu0 %v1566
      %v2932 = vpop.f32.mrb[0].mxu0
      %v2933 = vadd.f32 0.0, %v2932
      %v2934 = vpop.f32.mrb[0].mxu0
      %v2935 = vpop.f32.mrb[0].mxu0
      %v2936 = vadd.f32 0.0, %v2935
      %v2937 = vpop.f32.mrb[0].mxu0
      %2938 = vmatprep.mubr.bf16.mxu0 %v1585
      %2939 = vmatmul.mubr.bf16.gmra.mrb[0].mxu0 %v1584
      %v2940 = vpop.f32.mrb[0].mxu0
      %v2941 = vadd.f32 0.0, %v2940
      %v2942 = vpop.f32.mrb[0].mxu0
      %v2943 = vpop.f32.mrb[0].mxu0
      %v2944 = vadd.f32 0.0, %v2943
      %v2945 = vpop.f32.mrb[0].mxu0
      %2946 = vmatprep.mubr.bf16.mxu0 %v1603
      %2947 = vmatmul.mubr.bf16.gmra.mrb[0].mxu0 %v1602
      %v2948 = vpop.f32.mrb[0].mxu0
      %v2949 = vadd.f32 0.0, %v2948
      %v2950 = vpop.f32.mrb[0].mxu0
      %v2951 = vpop.f32.mrb[0].mxu0
      %v2952 = vadd.f32 0.0, %v2951
      %v2953 = vpop.f32.mrb[0].mxu0
      %2954 = vmatprep.mubr.bf16.mxu0 %v1621
      %2955 = vmatmul.mubr.bf16.gmra.mrb[0].mxu0 %v1620
      %v2956 = vpop.f32.mrb[0].mxu0
      %v2957 = vadd.f32 0.0, %v2956
      %v2958 = vpop.f32.mrb[0].mxu0
      %v2959 = vpop.f32.mrb[0].mxu0
      %v2960 = vadd.f32 0.0, %v2959
      %v2961 = vpop.f32.mrb[0].mxu0
      %2962 = vmatprep.mubr.bf16.mxu0 %v1639
      %2963 = vmatmul.mubr.bf16.gmra.mrb[0].mxu0 %v1638
      %v2964 = vpop.f32.mrb[0].mxu0
      %v2965 = vadd.f32 0.0, %v2964
      %v2966 = vpop.f32.mrb[0].mxu0
      %v2967 = vpop.f32.mrb[0].mxu0
      %v2968 = vadd.f32 0.0, %v2967
      %v2969 = vpop.f32.mrb[0].mxu0
      %2970 = vmatprep.mubr.bf16.mxu0 %v1657
      %2971 = vmatmul.mubr.bf16.gmra.mrb[0].mxu0 %v1656
      %v2972 = vpop.f32.mrb[0].mxu0
      %v2973 = vadd.f32 0.0, %v2972
      %v2974 = vpop.f32.mrb[0].mxu0
      %v2975 = vpop.f32.mrb[0].mxu0
      %v2976 = vadd.f32 0.0, %v2975
      %v2977 = vpop.f32.mrb[0].mxu0
      %2978 = vmatprep.mubr.bf16.mxu0 %v1675
      %2979 = vmatmul.mubr.bf16.gmra.mrb[0].mxu0 %v1674
      %v2980 = vpop.f32.mrb[0].mxu0
      %v2981 = vadd.f32 0.0, %v2980
      %v2982 = vpop.f32.mrb[0].mxu0
      %v2983 = vpop.f32.mrb[0].mxu0
      %v2984 = vadd.f32 0.0, %v2983
      %v2985 = vpop.f32.mrb[0].mxu0
      %2986 = vmatprep.mubr.bf16.mxu0 %v1693
      %2987 = vmatmul.mubr.bf16.gmra.mrb[0].mxu0 %v1692
      %v2988 = vpop.f32.mrb[0].mxu0
      %v2989 = vadd.f32 0.0, %v2988
      %v2990 = vpop.f32.mrb[0].mxu0
      %v2991 = vpop.f32.mrb[0].mxu0
      %v2992 = vadd.f32 0.0, %v2991
      %v2993 = vpop.f32.mrb[0].mxu0
      %2994 = vmatprep.mubr.bf16.mxu0 %v1711
      %2995 = vmatmul.mubr.bf16.gmra.mrb[0].mxu0 %v1710
      %v2996 = vpop.f32.mrb[0].mxu0
      %v2997 = vadd.f32 0.0, %v2996
      %v2998 = vpop.f32.mrb[0].mxu0
      %v2999 = vpop.f32.mrb[0].mxu0
      %v3000 = vadd.f32 0.0, %v2999
      %v3001 = vpop.f32.mrb[0].mxu0
      %3002 = vmatprep.mubr.bf16.mxu0 %v1729
      %3003 = vmatmul.mubr.bf16.gmra.mrb[0].mxu0 %v1728
      %v3004 = vpop.f32.mrb[0].mxu0
      %v3005 = vadd.f32 0.0, %v3004
      %v3006 = vpop.f32.mrb[0].mxu0
      %v3007 = vpop.f32.mrb[0].mxu0
      %v3008 = vadd.f32 0.0, %v3007
      %v3009 = vpop.f32.mrb[0].mxu0
      %3010 = vdwg.mxu0
      %3011 = vmatprep.subr.bf16.mxu0 0
      %3012 = vmatpush1.bf16.msra.mxu0 %v2626
      %3013 = vmatprep.subr.bf16.mxu0 0
      %3014 = vmatpush1.bf16.msra.mxu0 %v2627
      %3015 = vmatprep.subr.bf16.mxu0 0
      %3016 = vmatpush1.bf16.msra.mxu0 %v2628
      %3017 = vmatprep.subr.bf16.mxu0 0
      %3018 = vmatpush1.bf16.msra.mxu0 %v2629
      %3019 = vmatprep.subr.bf16.mxu0 0
      %3020 = vmatpush1.bf16.msra.mxu0 %v2630
      %3021 = vmatprep.subr.bf16.mxu0 0
      %3022 = vmatpush1.bf16.msra.mxu0 %v2631
      %3023 = vmatprep.subr.bf16.mxu0 0
      %3024 = vmatpush1.bf16.msra.mxu0 %v2632
      %3025 = vmatprep.subr.bf16.mxu0 0
      %3026 = vmatpush1.bf16.msra.mxu0 %v2633
      %3027 = vmatprep.subr.bf16.mxu0 0
      %3028 = vmatpush1.bf16.msra.mxu0 %v2634
      %3029 = vmatprep.subr.bf16.mxu0 0
      %3030 = vmatpush1.bf16.msra.mxu0 %v2635
      %3031 = vmatprep.subr.bf16.mxu0 0
      %3032 = vmatpush1.bf16.msra.mxu0 %v2636
      %3033 = vmatprep.subr.bf16.mxu0 0
      %3034 = vmatpush1.bf16.msra.mxu0 %v2637
      %3035 = vmatprep.subr.bf16.mxu0 0
      %3036 = vmatpush1.bf16.msra.mxu0 %v2638
      %3037 = vmatprep.subr.bf16.mxu0 0
      %3038 = vmatpush1.bf16.msra.mxu0 %v2639
      %3039 = vmatprep.subr.bf16.mxu0 0
      %3040 = vmatpush1.bf16.msra.mxu0 %v2640
      %3041 = vmatprep.subr.bf16.mxu0 0
      %3042 = vmatpush1.bf16.msra.mxu0 %v2641
      %3043 = vmatprep.mubr.bf16.mxu0 %v1569
      %3044 = vmatmul.mubr.bf16.gmra.mrb[0].mxu0 %v1568
      %v3045 = vpop.f32.mrb[0].mxu0
      %v3046 = vadd.f32 %v2933, %v3045
      %v3047 = vpop.f32.mrb[0].mxu0
      %v3048 = vpop.f32.mrb[0].mxu0
      %v3049 = vadd.f32 %v2936, %v3048
      %v3050 = vpop.f32.mrb[0].mxu0
      %3051 = vmatprep.mubr.bf16.mxu0 %v1587
      %3052 = vmatmul.mubr.bf16.gmra.mrb[0].mxu0 %v1586
      %v3053 = vpop.f32.mrb[0].mxu0
      %v3054 = vadd.f32 %v2941, %v3053
      %v3055 = vpop.f32.mrb[0].mxu0
      %v3056 = vpop.f32.mrb[0].mxu0
      %v3057 = vadd.f32 %v2944, %v3056
      %v3058 = vpop.f32.mrb[0].mxu0
      %3059 = vmatprep.mubr.bf16.mxu0 %v1605
      %3060 = vmatmul.mubr.bf16.gmra.mrb[0].mxu0 %v1604
      %v3061 = vpop.f32.mrb[0].mxu0
      %v3062 = vadd.f32 %v2949, %v3061
      %v3063 = vpop.f32.mrb[0].mxu0
      %v3064 = vpop.f32.mrb[0].mxu0
      %v3065 = vadd.f32 %v2952, %v3064
      %v3066 = vpop.f32.mrb[0].mxu0
      %3067 = vmatprep.mubr.bf16.mxu0 %v1623
      %3068 = vmatmul.mubr.bf16.gmra.mrb[0].mxu0 %v1622
      %v3069 = vpop.f32.mrb[0].mxu0
      %v3070 = vadd.f32 %v2957, %v3069
      %v3071 = vpop.f32.mrb[0].mxu0
      %v3072 = vpop.f32.mrb[0].mxu0
      %v3073 = vadd.f32 %v2960, %v3072
      %v3074 = vpop.f32.mrb[0].mxu0
      %3075 = vmatprep.mubr.bf16.mxu0 %v1641
      %3076 = vmatmul.mubr.bf16.gmra.mrb[0].mxu0 %v1640
      %v3077 = vpop.f32.mrb[0].mxu0
      %v3078 = vadd.f32 %v2965, %v3077
      %v3079 = vpop.f32.mrb[0].mxu0
      %v3080 = vpop.f32.mrb[0].mxu0
      %v3081 = vadd.f32 %v2968, %v3080
      %v3082 = vpop.f32.mrb[0].mxu0
      %3083 = vmatprep.mubr.bf16.mxu0 %v1659
      %3084 = vmatmul.mubr.bf16.gmra.mrb[0].mxu0 %v1658
      %v3085 = vpop.f32.mrb[0].mxu0
      %v3086 = vadd.f32 %v2973, %v3085
      %v3087 = vpop.f32.mrb[0].mxu0
      %v3088 = vpop.f32.mrb[0].mxu0
      %v3089 = vadd.f32 %v2976, %v3088
      %v3090 = vpop.f32.mrb[0].mxu0
      %3091 = vmatprep.mubr.bf16.mxu0 %v1677
      %3092 = vmatmul.mubr.bf16.gmra.mrb[0].mxu0 %v1676
      %v3093 = vpop.f32.mrb[0].mxu0
      %v3094 = vadd.f32 %v2981, %v3093
      %v3095 = vpop.f32.mrb[0].mxu0
      %v3096 = vpop.f32.mrb[0].mxu0
      %v3097 = vadd.f32 %v2984, %v3096
      %v3098 = vpop.f32.mrb[0].mxu0
      %3099 = vmatprep.mubr.bf16.mxu0 %v1695
      %3100 = vmatmul.mubr.bf16.gmra.mrb[0].mxu0 %v1694
      %v3101 = vpop.f32.mrb[0].mxu0
      %v3102 = vadd.f32 %v2989, %v3101
      %v3103 = vpop.f32.mrb[0].mxu0
      %v3104 = vpop.f32.mrb[0].mxu0
      %v3105 = vadd.f32 %v2992, %v3104
      %v3106 = vpop.f32.mrb[0].mxu0
      %3107 = vmatprep.mubr.bf16.mxu0 %v1713
      %3108 = vmatmul.mubr.bf16.gmra.mrb[0].mxu0 %v1712
      %v3109 = vpop.f32.mrb[0].mxu0
      %v3110 = vadd.f32 %v2997, %v3109
      %v3111 = vpop.f32.mrb[0].mxu0
      %v3112 = vpop.f32.mrb[0].mxu0
      %v3113 = vadd.f32 %v3000, %v3112
      %v3114 = vpop.f32.mrb[0].mxu0
      %3115 = vmatprep.mubr.bf16.mxu0 %v1731
      %3116 = vmatmul.mubr.bf16.gmra.mrb[0].mxu0 %v1730
      %v3117 = vpop.f32.mrb[0].mxu0
      %v3118 = vadd.f32 %v3005, %v3117
      %v3119 = vpop.f32.mrb[0].mxu0
      %v3120 = vpop.f32.mrb[0].mxu0
      %v3121 = vadd.f32 %v3008, %v3120
      %v3122 = vpop.f32.mrb[0].mxu0
      %3123 = vdwg.mxu0
      %3124 = vmatprep.subr.bf16.mxu0 0
      %3125 = vmatpush1.bf16.msra.mxu0 %v2642
      %3126 = vmatprep.subr.bf16.mxu0 0
      %3127 = vmatpush1.bf16.msra.mxu0 %v2643
      %3128 = vmatprep.subr.bf16.mxu0 0
      %3129 = vmatpush1.bf16.msra.mxu0 %v2644
      %3130 = vmatprep.subr.bf16.mxu0 0
      %3131 = vmatpush1.bf16.msra.mxu0 %v2645
      %3132 = vmatprep.subr.bf16.mxu0 0
      %3133 = vmatpush1.bf16.msra.mxu0 %v2646
      %3134 = vmatprep.subr.bf16.mxu0 0
      %3135 = vmatpush1.bf16.msra.mxu0 %v2647
      %3136 = vmatprep.subr.bf16.mxu0 0
      %3137 = vmatpush1.bf16.msra.mxu0 %v2648
      %3138 = vmatprep.subr.bf16.mxu0 0
      %3139 = vmatpush1.bf16.msra.mxu0 %v2649
      %3140 = vmatprep.subr.bf16.mxu0 0
      %3141 = vmatpush1.bf16.msra.mxu0 %v2650
      %3142 = vmatprep.subr.bf16.mxu0 0
      %3143 = vmatpush1.bf16.msra.mxu0 %v2651
      %3144 = vmatprep.subr.bf16.mxu0 0
      %3145 = vmatpush1.bf16.msra.mxu0 %v2652
      %3146 = vmatprep.subr.bf16.mxu0 0
      %3147 = vmatpush1.bf16.msra.mxu0 %v2653
      %3148 = vmatprep.subr.bf16.mxu0 0
      %3149 = vmatpush1.bf16.msra.mxu0 %v2654
      %3150 = vmatprep.subr.bf16.mxu0 0
      %3151 = vmatpush1.bf16.msra.mxu0 %v2655
      %3152 = vmatprep.subr.bf16.mxu0 0
      %3153 = vmatpush1.bf16.msra.mxu0 %v2656
      %3154 = vmatprep.subr.bf16.mxu0 0
      %3155 = vmatpush1.bf16.msra.mxu0 %v2657
      %3156 = vmatprep.mubr.bf16.mxu0 %v1571
      %3157 = vmatmul.mubr.bf16.gmra.mrb[0].mxu0 %v1570
      %v3158 = vpop.f32.mrb[0].mxu0
      %v3159 = vadd.f32 %v3046, %v3158
      %v3160 = vpop.f32.mrb[0].mxu0
      %v3161 = vpop.f32.mrb[0].mxu0
      %v3162 = vadd.f32 %v3049, %v3161
      %v3163 = vpop.f32.mrb[0].mxu0
      %3164 = vmatprep.mubr.bf16.mxu0 %v1589
      %3165 = vmatmul.mubr.bf16.gmra.mrb[0].mxu0 %v1588
      %v3166 = vpop.f32.mrb[0].mxu0
      %v3167 = vadd.f32 %v3054, %v3166
      %v3168 = vpop.f32.mrb[0].mxu0
      %v3169 = vpop.f32.mrb[0].mxu0
      %v3170 = vadd.f32 %v3057, %v3169
      %v3171 = vpop.f32.mrb[0].mxu0
      %3172 = vmatprep.mubr.bf16.mxu0 %v1607
      %3173 = vmatmul.mubr.bf16.gmra.mrb[0].mxu0 %v1606
      %v3174 = vpop.f32.mrb[0].mxu0
      %v3175 = vadd.f32 %v3062, %v3174
      %v3176 = vpop.f32.mrb[0].mxu0
      %v3177 = vpop.f32.mrb[0].mxu0
      %v3178 = vadd.f32 %v3065, %v3177
      %v3179 = vpop.f32.mrb[0].mxu0
      %3180 = vmatprep.mubr.bf16.mxu0 %v1625
      %3181 = vmatmul.mubr.bf16.gmra.mrb[0].mxu0 %v1624
      %v3182 = vpop.f32.mrb[0].mxu0
      %v3183 = vadd.f32 %v3070, %v3182
      %v3184 = vpop.f32.mrb[0].mxu0
      %v3185 = vpop.f32.mrb[0].mxu0
      %v3186 = vadd.f32 %v3073, %v3185
      %v3187 = vpop.f32.mrb[0].mxu0
      %3188 = vmatprep.mubr.bf16.mxu0 %v1643
      %3189 = vmatmul.mubr.bf16.gmra.mrb[0].mxu0 %v1642
      %v3190 = vpop.f32.mrb[0].mxu0
      %v3191 = vadd.f32 %v3078, %v3190
      %v3192 = vpop.f32.mrb[0].mxu0
      %v3193 = vpop.f32.mrb[0].mxu0
      %v3194 = vadd.f32 %v3081, %v3193
      %v3195 = vpop.f32.mrb[0].mxu0
      %3196 = vmatprep.mubr.bf16.mxu0 %v1661
      %3197 = vmatmul.mubr.bf16.gmra.mrb[0].mxu0 %v1660
      %v3198 = vpop.f32.mrb[0].mxu0
      %v3199 = vadd.f32 %v3086, %v3198
      %v3200 = vpop.f32.mrb[0].mxu0
      %v3201 = vpop.f32.mrb[0].mxu0
      %v3202 = vadd.f32 %v3089, %v3201
      %v3203 = vpop.f32.mrb[0].mxu0
      %3204 = vmatprep.mubr.bf16.mxu0 %v1679
      %3205 = vmatmul.mubr.bf16.gmra.mrb[0].mxu0 %v1678
      %v3206 = vpop.f32.mrb[0].mxu0
      %v3207 = vadd.f32 %v3094, %v3206
      %v3208 = vpop.f32.mrb[0].mxu0
      %v3209 = vpop.f32.mrb[0].mxu0
      %v3210 = vadd.f32 %v3097, %v3209
      %v3211 = vpop.f32.mrb[0].mxu0
      %3212 = vmatprep.mubr.bf16.mxu0 %v1697
      %3213 = vmatmul.mubr.bf16.gmra.mrb[0].mxu0 %v1696
      %v3214 = vpop.f32.mrb[0].mxu0
      %v3215 = vadd.f32 %v3102, %v3214
      %v3216 = vpop.f32.mrb[0].mxu0
      %v3217 = vpop.f32.mrb[0].mxu0
      %v3218 = vadd.f32 %v3105, %v3217
      %v3219 = vpop.f32.mrb[0].mxu0
      %3220 = vmatprep.mubr.bf16.mxu0 %v1715
      %3221 = vmatmul.mubr.bf16.gmra.mrb[0].mxu0 %v1714
      %v3222 = vpop.f32.mrb[0].mxu0
      %v3223 = vadd.f32 %v3110, %v3222
      %v3224 = vpop.f32.mrb[0].mxu0
      %v3225 = vpop.f32.mrb[0].mxu0
      %v3226 = vadd.f32 %v3113, %v3225
      %v3227 = vpop.f32.mrb[0].mxu0
      %3228 = vmatprep.mubr.bf16.mxu0 %v1733
      %3229 = vmatmul.mubr.bf16.gmra.mrb[0].mxu0 %v1732
      %v3230 = vpop.f32.mrb[0].mxu0
      %v3231 = vadd.f32 %v3118, %v3230
      %v3232 = vpop.f32.mrb[0].mxu0
      %v3233 = vpop.f32.mrb[0].mxu0
      %v3234 = vadd.f32 %v3121, %v3233
      %v3235 = vpop.f32.mrb[0].mxu0
      %3236 = vdwg.mxu0
      %3237 = vmatprep.subr.bf16.mxu0 0
      %3238 = vmatpush1.bf16.msra.mxu0 %v2658
      %3239 = vmatprep.subr.bf16.mxu0 0
      %3240 = vmatpush1.bf16.msra.mxu0 %v2659
      %3241 = vmatprep.subr.bf16.mxu0 0
      %3242 = vmatpush1.bf16.msra.mxu0 %v2660
      %3243 = vmatprep.subr.bf16.mxu0 0
      %3244 = vmatpush1.bf16.msra.mxu0 %v2661
      %3245 = vmatprep.subr.bf16.mxu0 0
      %3246 = vmatpush1.bf16.msra.mxu0 %v2662
      %3247 = vmatprep.subr.bf16.mxu0 0
      %3248 = vmatpush1.bf16.msra.mxu0 %v2663
      %3249 = vmatprep.subr.bf16.mxu0 0
      %3250 = vmatpush1.bf16.msra.mxu0 %v2664
      %3251 = vmatprep.subr.bf16.mxu0 0
      %3252 = vmatpush1.bf16.msra.mxu0 %v2665
      %3253 = vmatprep.subr.bf16.mxu0 0
      %3254 = vmatpush1.bf16.msra.mxu0 %v2666
      %3255 = vmatprep.subr.bf16.mxu0 0
      %3256 = vmatpush1.bf16.msra.mxu0 %v2667
      %3257 = vmatprep.subr.bf16.mxu0 0
      %3258 = vmatpush1.bf16.msra.mxu0 %v2668
      %3259 = vmatprep.subr.bf16.mxu0 0
      %3260 = vmatpush1.bf16.msra.mxu0 %v2669
      %3261 = vmatprep.subr.bf16.mxu0 0
      %3262 = vmatpush1.bf16.msra.mxu0 %v2670
      %3263 = vmatprep.subr.bf16.mxu0 0
      %3264 = vmatpush1.bf16.msra.mxu0 %v2671
      %3265 = vmatprep.subr.bf16.mxu0 0
      %3266 = vmatpush1.bf16.msra.mxu0 %v2672
      %3267 = vmatprep.subr.bf16.mxu0 0
      %3268 = vmatpush1.bf16.msra.mxu0 %v2673
      %3269 = vmatprep.mubr.bf16.mxu0 %v1573
      %3270 = vmatmul.mubr.bf16.gmra.mrb[0].mxu0 %v1572
      %v3271 = vpop.f32.mrb[0].mxu0
      %v3272 = vadd.f32 %v3159, %v3271
      %v3273 = vpop.f32.mrb[0].mxu0
      %v3274 = vpop.f32.mrb[0].mxu0
      %v3275 = vadd.f32 %v3162, %v3274
      %v3276 = vpop.f32.mrb[0].mxu0
      %3277 = vmatprep.mubr.bf16.mxu0 %v1591
      %3278 = vmatmul.mubr.bf16.gmra.mrb[0].mxu0 %v1590
      %v3279 = vpop.f32.mrb[0].mxu0
      %v3280 = vadd.f32 %v3167, %v3279
      %v3281 = vpop.f32.mrb[0].mxu0
      %v3282 = vpop.f32.mrb[0].mxu0
      %v3283 = vadd.f32 %v3170, %v3282
      %v3284 = vpop.f32.mrb[0].mxu0
      %3285 = vmatprep.mubr.bf16.mxu0 %v1609
      %3286 = vmatmul.mubr.bf16.gmra.mrb[0].mxu0 %v1608
      %v3287 = vpop.f32.mrb[0].mxu0
      %v3288 = vadd.f32 %v3175, %v3287
      %v3289 = vpop.f32.mrb[0].mxu0
      %v3290 = vpop.f32.mrb[0].mxu0
      %v3291 = vadd.f32 %v3178, %v3290
      %v3292 = vpop.f32.mrb[0].mxu0
      %3293 = vmatprep.mubr.bf16.mxu0 %v1627
      %3294 = vmatmul.mubr.bf16.gmra.mrb[0].mxu0 %v1626
      %v3295 = vpop.f32.mrb[0].mxu0
      %v3296 = vadd.f32 %v3183, %v3295
      %v3297 = vpop.f32.mrb[0].mxu0
      %v3298 = vpop.f32.mrb[0].mxu0
      %v3299 = vadd.f32 %v3186, %v3298
      %v3300 = vpop.f32.mrb[0].mxu0
      %3301 = vmatprep.mubr.bf16.mxu0 %v1645
      %3302 = vmatmul.mubr.bf16.gmra.mrb[0].mxu0 %v1644
      %v3303 = vpop.f32.mrb[0].mxu0
      %v3304 = vadd.f32 %v3191, %v3303
      %v3305 = vpop.f32.mrb[0].mxu0
      %v3306 = vpop.f32.mrb[0].mxu0
      %v3307 = vadd.f32 %v3194, %v3306
      %v3308 = vpop.f32.mrb[0].mxu0
      %3309 = vmatprep.mubr.bf16.mxu0 %v1663
      %3310 = vmatmul.mubr.bf16.gmra.mrb[0].mxu0 %v1662
      %v3311 = vpop.f32.mrb[0].mxu0
      %v3312 = vadd.f32 %v3199, %v3311
      %v3313 = vpop.f32.mrb[0].mxu0
      %v3314 = vpop.f32.mrb[0].mxu0
      %v3315 = vadd.f32 %v3202, %v3314
      %v3316 = vpop.f32.mrb[0].mxu0
      %3317 = vmatprep.mubr.bf16.mxu0 %v1681
      %3318 = vmatmul.mubr.bf16.gmra.mrb[0].mxu0 %v1680
      %v3319 = vpop.f32.mrb[0].mxu0
      %v3320 = vadd.f32 %v3207, %v3319
      %v3321 = vpop.f32.mrb[0].mxu0
      %v3322 = vpop.f32.mrb[0].mxu0
      %v3323 = vadd.f32 %v3210, %v3322
      %v3324 = vpop.f32.mrb[0].mxu0
      %3325 = vmatprep.mubr.bf16.mxu0 %v1699
      %3326 = vmatmul.mubr.bf16.gmra.mrb[0].mxu0 %v1698
      %v3327 = vpop.f32.mrb[0].mxu0
      %v3328 = vadd.f32 %v3215, %v3327
      %v3329 = vpop.f32.mrb[0].mxu0
      %v3330 = vpop.f32.mrb[0].mxu0
      %v3331 = vadd.f32 %v3218, %v3330
      %v3332 = vpop.f32.mrb[0].mxu0
      %3333 = vmatprep.mubr.bf16.mxu0 %v1717
      %3334 = vmatmul.mubr.bf16.gmra.mrb[0].mxu0 %v1716
      %v3335 = vpop.f32.mrb[0].mxu0
      %v3336 = vadd.f32 %v3223, %v3335
      %v3337 = vpop.f32.mrb[0].mxu0
      %v3338 = vpop.f32.mrb[0].mxu0
      %v3339 = vadd.f32 %v3226, %v3338
      %v3340 = vpop.f32.mrb[0].mxu0
      %3341 = vmatprep.mubr.bf16.mxu0 %v1735
      %3342 = vmatmul.mubr.bf16.gmra.mrb[0].mxu0 %v1734
      %v3343 = vpop.f32.mrb[0].mxu0
      %v3344 = vadd.f32 %v3231, %v3343
      %v3345 = vpop.f32.mrb[0].mxu0
      %v3346 = vpop.f32.mrb[0].mxu0
      %v3347 = vadd.f32 %v3234, %v3346
      %v3348 = vpop.f32.mrb[0].mxu0
      %3349 = vdwg.mxu0
      %3350 = vmatprep.subr.bf16.mxu0 0
      %3351 = vmatpush1.bf16.msra.mxu0 %v2674
      %3352 = vmatprep.subr.bf16.mxu0 0
      %3353 = vmatpush1.bf16.msra.mxu0 %v2675
      %3354 = vmatprep.subr.bf16.mxu0 0
      %3355 = vmatpush1.bf16.msra.mxu0 %v2676
      %3356 = vmatprep.subr.bf16.mxu0 0
      %3357 = vmatpush1.bf16.msra.mxu0 %v2677
      %3358 = vmatprep.subr.bf16.mxu0 0
      %3359 = vmatpush1.bf16.msra.mxu0 %v2678
      %3360 = vmatprep.subr.bf16.mxu0 0
      %3361 = vmatpush1.bf16.msra.mxu0 %v2679
      %3362 = vmatprep.subr.bf16.mxu0 0
      %3363 = vmatpush1.bf16.msra.mxu0 %v2680
      %3364 = vmatprep.subr.bf16.mxu0 0
      %3365 = vmatpush1.bf16.msra.mxu0 %v2681
      %3366 = vmatprep.subr.bf16.mxu0 0
      %3367 = vmatpush1.bf16.msra.mxu0 %v2682
      %3368 = vmatprep.subr.bf16.mxu0 0
      %3369 = vmatpush1.bf16.msra.mxu0 %v2683
      %3370 = vmatprep.subr.bf16.mxu0 0
      %3371 = vmatpush1.bf16.msra.mxu0 %v2684
      %3372 = vmatprep.subr.bf16.mxu0 0
      %3373 = vmatpush1.bf16.msra.mxu0 %v2685
      %3374 = vmatprep.subr.bf16.mxu0 0
      %3375 = vmatpush1.bf16.msra.mxu0 %v2686
      %3376 = vmatprep.subr.bf16.mxu0 0
      %3377 = vmatpush1.bf16.msra.mxu0 %v2687
      %3378 = vmatprep.subr.bf16.mxu0 0
      %3379 = vmatpush1.bf16.msra.mxu0 %v2688
      %3380 = vmatprep.subr.bf16.mxu0 0
      %3381 = vmatpush1.bf16.msra.mxu0 %v2689
      %3382 = vmatprep.mubr.bf16.mxu0 %v1575
      %3383 = vmatmul.mubr.bf16.gmra.mrb[0].mxu0 %v1574
      %v3384 = vpop.f32.mrb[0].mxu0
      %v3385 = vadd.f32 %v3272, %v3384
      %v3386 = vpop.f32.mrb[0].mxu0
      %v3387 = vpop.f32.mrb[0].mxu0
      %v3388 = vadd.f32 %v3275, %v3387
      %v3389 = vpop.f32.mrb[0].mxu0
      %3390 = vmatprep.mubr.bf16.mxu0 %v1593
      %3391 = vmatmul.mubr.bf16.gmra.mrb[0].mxu0 %v1592
      %v3392 = vpop.f32.mrb[0].mxu0
      %v3393 = vadd.f32 %v3280, %v3392
      %v3394 = vpop.f32.mrb[0].mxu0
      %v3395 = vpop.f32.mrb[0].mxu0
      %v3396 = vadd.f32 %v3283, %v3395
      %v3397 = vpop.f32.mrb[0].mxu0
      %3398 = vmatprep.mubr.bf16.mxu0 %v1611
      %3399 = vmatmul.mubr.bf16.gmra.mrb[0].mxu0 %v1610
      %v3400 = vpop.f32.mrb[0].mxu0
      %v3401 = vadd.f32 %v3288, %v3400
      %v3402 = vpop.f32.mrb[0].mxu0
      %v3403 = vpop.f32.mrb[0].mxu0
      %v3404 = vadd.f32 %v3291, %v3403
      %v3405 = vpop.f32.mrb[0].mxu0
      %3406 = vmatprep.mubr.bf16.mxu0 %v1629
      %3407 = vmatmul.mubr.bf16.gmra.mrb[0].mxu0 %v1628
      %v3408 = vpop.f32.mrb[0].mxu0
      %v3409 = vadd.f32 %v3296, %v3408
      %v3410 = vpop.f32.mrb[0].mxu0
      %v3411 = vpop.f32.mrb[0].mxu0
      %v3412 = vadd.f32 %v3299, %v3411
      %v3413 = vpop.f32.mrb[0].mxu0
      %3414 = vmatprep.mubr.bf16.mxu0 %v1647
      %3415 = vmatmul.mubr.bf16.gmra.mrb[0].mxu0 %v1646
      %v3416 = vpop.f32.mrb[0].mxu0
      %v3417 = vadd.f32 %v3304, %v3416
      %v3418 = vpop.f32.mrb[0].mxu0
      %v3419 = vpop.f32.mrb[0].mxu0
      %v3420 = vadd.f32 %v3307, %v3419
      %v3421 = vpop.f32.mrb[0].mxu0
      %3422 = vmatprep.mubr.bf16.mxu0 %v1665
      %3423 = vmatmul.mubr.bf16.gmra.mrb[0].mxu0 %v1664
      %v3424 = vpop.f32.mrb[0].mxu0
      %v3425 = vadd.f32 %v3312, %v3424
      %v3426 = vpop.f32.mrb[0].mxu0
      %v3427 = vpop.f32.mrb[0].mxu0
      %v3428 = vadd.f32 %v3315, %v3427
      %v3429 = vpop.f32.mrb[0].mxu0
      %3430 = vmatprep.mubr.bf16.mxu0 %v1683
      %3431 = vmatmul.mubr.bf16.gmra.mrb[0].mxu0 %v1682
      %v3432 = vpop.f32.mrb[0].mxu0
      %v3433 = vadd.f32 %v3320, %v3432
      %v3434 = vpop.f32.mrb[0].mxu0
      %v3435 = vpop.f32.mrb[0].mxu0
      %v3436 = vadd.f32 %v3323, %v3435
      %v3437 = vpop.f32.mrb[0].mxu0
      %3438 = vmatprep.mubr.bf16.mxu0 %v1701
      %3439 = vmatmul.mubr.bf16.gmra.mrb[0].mxu0 %v1700
      %v3440 = vpop.f32.mrb[0].mxu0
      %v3441 = vadd.f32 %v3328, %v3440
      %v3442 = vpop.f32.mrb[0].mxu0
      %v3443 = vpop.f32.mrb[0].mxu0
      %v3444 = vadd.f32 %v3331, %v3443
      %v3445 = vpop.f32.mrb[0].mxu0
      %3446 = vmatprep.mubr.bf16.mxu0 %v1719
      %3447 = vmatmul.mubr.bf16.gmra.mrb[0].mxu0 %v1718
      %v3448 = vpop.f32.mrb[0].mxu0
      %v3449 = vadd.f32 %v3336, %v3448
      %v3450 = vpop.f32.mrb[0].mxu0
      %v3451 = vpop.f32.mrb[0].mxu0
      %v3452 = vadd.f32 %v3339, %v3451
      %v3453 = vpop.f32.mrb[0].mxu0
      %3454 = vmatprep.mubr.bf16.mxu0 %v1737
      %3455 = vmatmul.mubr.bf16.gmra.mrb[0].mxu0 %v1736
      %v3456 = vpop.f32.mrb[0].mxu0
      %v3457 = vadd.f32 %v3344, %v3456
      %v3458 = vpop.f32.mrb[0].mxu0
      %v3459 = vpop.f32.mrb[0].mxu0
      %v3460 = vadd.f32 %v3347, %v3459
      %v3461 = vpop.f32.mrb[0].mxu0
      %3462 = vdwg.mxu0
      %3463 = vmatprep.subr.bf16.mxu0 0
      %3464 = vmatpush1.bf16.msra.mxu0 %v2690
      %3465 = vmatprep.subr.bf16.mxu0 0
      %3466 = vmatpush1.bf16.msra.mxu0 %v2691
      %3467 = vmatprep.subr.bf16.mxu0 0
      %3468 = vmatpush1.bf16.msra.mxu0 %v2692
      %3469 = vmatprep.subr.bf16.mxu0 0
      %3470 = vmatpush1.bf16.msra.mxu0 %v2693
      %3471 = vmatprep.subr.bf16.mxu0 0
      %3472 = vmatpush1.bf16.msra.mxu0 %v2694
      %3473 = vmatprep.subr.bf16.mxu0 0
      %3474 = vmatpush1.bf16.msra.mxu0 %v2695
      %3475 = vmatprep.subr.bf16.mxu0 0
      %3476 = vmatpush1.bf16.msra.mxu0 %v2696
      %3477 = vmatprep.subr.bf16.mxu0 0
      %3478 = vmatpush1.bf16.msra.mxu0 %v2697
      %3479 = vmatprep.subr.bf16.mxu0 0
      %3480 = vmatpush1.bf16.msra.mxu0 %v2698
      %3481 = vmatprep.subr.bf16.mxu0 0
      %3482 = vmatpush1.bf16.msra.mxu0 %v2699
      %3483 = vmatprep.subr.bf16.mxu0 0
      %3484 = vmatpush1.bf16.msra.mxu0 %v2700
      %3485 = vmatprep.subr.bf16.mxu0 0
      %3486 = vmatpush1.bf16.msra.mxu0 %v2701
      %3487 = vmatprep.subr.bf16.mxu0 0
      %3488 = vmatpush1.bf16.msra.mxu0 %v2702
      %3489 = vmatprep.subr.bf16.mxu0 0
      %3490 = vmatpush1.bf16.msra.mxu0 %v2703
      %3491 = vmatprep.subr.bf16.mxu0 0
      %3492 = vmatpush1.bf16.msra.mxu0 %v2704
      %3493 = vmatprep.subr.bf16.mxu0 0
      %3494 = vmatpush1.bf16.msra.mxu0 %v2705
      %3495 = vmatprep.mubr.bf16.mxu0 %v1577
      %3496 = vmatmul.mubr.bf16.gmra.mrb[0].mxu0 %v1576
      %v3497 = vpop.f32.mrb[0].mxu0
      %v3498 = vadd.f32 %v3385, %v3497
      %v3499 = vpop.f32.mrb[0].mxu0
      %v3500 = vpop.f32.mrb[0].mxu0
      %v3501 = vadd.f32 %v3388, %v3500
      %v3502 = vpop.f32.mrb[0].mxu0
      %3503 = vmatprep.mubr.bf16.mxu0 %v1595
      %3504 = vmatmul.mubr.bf16.gmra.mrb[0].mxu0 %v1594
      %v3505 = vpop.f32.mrb[0].mxu0
      %v3506 = vadd.f32 %v3393, %v3505
      %v3507 = vpop.f32.mrb[0].mxu0
      %v3508 = vpop.f32.mrb[0].mxu0
      %v3509 = vadd.f32 %v3396, %v3508
      %v3510 = vpop.f32.mrb[0].mxu0
      %3511 = vmatprep.mubr.bf16.mxu0 %v1613
      %3512 = vmatmul.mubr.bf16.gmra.mrb[0].mxu0 %v1612
      %v3513 = vpop.f32.mrb[0].mxu0
      %v3514 = vadd.f32 %v3401, %v3513
      %v3515 = vpop.f32.mrb[0].mxu0
      %v3516 = vpop.f32.mrb[0].mxu0
      %v3517 = vadd.f32 %v3404, %v3516
      %v3518 = vpop.f32.mrb[0].mxu0
      %3519 = vmatprep.mubr.bf16.mxu0 %v1631
      %3520 = vmatmul.mubr.bf16.gmra.mrb[0].mxu0 %v1630
      %v3521 = vpop.f32.mrb[0].mxu0
      %v3522 = vadd.f32 %v3409, %v3521
      %v3523 = vpop.f32.mrb[0].mxu0
      %v3524 = vpop.f32.mrb[0].mxu0
      %v3525 = vadd.f32 %v3412, %v3524
      %v3526 = vpop.f32.mrb[0].mxu0
      %3527 = vmatprep.mubr.bf16.mxu0 %v1649
      %3528 = vmatmul.mubr.bf16.gmra.mrb[0].mxu0 %v1648
      %v3529 = vpop.f32.mrb[0].mxu0
      %v3530 = vadd.f32 %v3417, %v3529
      %v3531 = vpop.f32.mrb[0].mxu0
      %v3532 = vpop.f32.mrb[0].mxu0
      %v3533 = vadd.f32 %v3420, %v3532
      %v3534 = vpop.f32.mrb[0].mxu0
      %3535 = vmatprep.mubr.bf16.mxu0 %v1667
      %3536 = vmatmul.mubr.bf16.gmra.mrb[0].mxu0 %v1666
      %v3537 = vpop.f32.mrb[0].mxu0
      %v3538 = vadd.f32 %v3425, %v3537
      %v3539 = vpop.f32.mrb[0].mxu0
      %v3540 = vpop.f32.mrb[0].mxu0
      %v3541 = vadd.f32 %v3428, %v3540
      %v3542 = vpop.f32.mrb[0].mxu0
      %3543 = vmatprep.mubr.bf16.mxu0 %v1685
      %3544 = vmatmul.mubr.bf16.gmra.mrb[0].mxu0 %v1684
      %v3545 = vpop.f32.mrb[0].mxu0
      %v3546 = vadd.f32 %v3433, %v3545
      %v3547 = vpop.f32.mrb[0].mxu0
      %v3548 = vpop.f32.mrb[0].mxu0
      %v3549 = vadd.f32 %v3436, %v3548
      %v3550 = vpop.f32.mrb[0].mxu0
      %3551 = vmatprep.mubr.bf16.mxu0 %v1703
      %3552 = vmatmul.mubr.bf16.gmra.mrb[0].mxu0 %v1702
      %v3553 = vpop.f32.mrb[0].mxu0
      %v3554 = vadd.f32 %v3441, %v3553
      %v3555 = vpop.f32.mrb[0].mxu0
      %v3556 = vpop.f32.mrb[0].mxu0
      %v3557 = vadd.f32 %v3444, %v3556
      %v3558 = vpop.f32.mrb[0].mxu0
      %3559 = vmatprep.mubr.bf16.mxu0 %v1721
      %3560 = vmatmul.mubr.bf16.gmra.mrb[0].mxu0 %v1720
      %v3561 = vpop.f32.mrb[0].mxu0
      %v3562 = vadd.f32 %v3449, %v3561
      %v3563 = vpop.f32.mrb[0].mxu0
      %v3564 = vpop.f32.mrb[0].mxu0
      %v3565 = vadd.f32 %v3452, %v3564
      %v3566 = vpop.f32.mrb[0].mxu0
      %3567 = vmatprep.mubr.bf16.mxu0 %v1739
      %3568 = vmatmul.mubr.bf16.gmra.mrb[0].mxu0 %v1738
      %v3569 = vpop.f32.mrb[0].mxu0
      %v3570 = vadd.f32 %v3457, %v3569
      %v3571 = vpop.f32.mrb[0].mxu0
      %v3572 = vpop.f32.mrb[0].mxu0
      %v3573 = vadd.f32 %v3460, %v3572
      %v3574 = vpop.f32.mrb[0].mxu0
      %3575 = vdwg.mxu0
      %3576 = vmatprep.subr.bf16.mxu0 0
      %3577 = vmatpush1.bf16.msra.mxu0 %v2706
      %3578 = vmatprep.subr.bf16.mxu0 0
      %3579 = vmatpush1.bf16.msra.mxu0 %v2707
      %3580 = vmatprep.subr.bf16.mxu0 0
      %3581 = vmatpush1.bf16.msra.mxu0 %v2708
      %3582 = vmatprep.subr.bf16.mxu0 0
      %3583 = vmatpush1.bf16.msra.mxu0 %v2709
      %3584 = vmatprep.subr.bf16.mxu0 0
      %3585 = vmatpush1.bf16.msra.mxu0 %v2710
      %3586 = vmatprep.subr.bf16.mxu0 0
      %3587 = vmatpush1.bf16.msra.mxu0 %v2711
      %3588 = vmatprep.subr.bf16.mxu0 0
      %3589 = vmatpush1.bf16.msra.mxu0 %v2712
      %3590 = vmatprep.subr.bf16.mxu0 0
      %3591 = vmatpush1.bf16.msra.mxu0 %v2713
      %3592 = vmatprep.subr.bf16.mxu0 0
      %3593 = vmatpush1.bf16.msra.mxu0 %v2714
      %3594 = vmatprep.subr.bf16.mxu0 0
      %3595 = vmatpush1.bf16.msra.mxu0 %v2715
      %3596 = vmatprep.subr.bf16.mxu0 0
      %3597 = vmatpush1.bf16.msra.mxu0 %v2716
      %3598 = vmatprep.subr.bf16.mxu0 0
      %3599 = vmatpush1.bf16.msra.mxu0 %v2717
      %3600 = vmatprep.subr.bf16.mxu0 0
      %3601 = vmatpush1.bf16.msra.mxu0 %v2718
      %3602 = vmatprep.subr.bf16.mxu0 0
      %3603 = vmatpush1.bf16.msra.mxu0 %v2719
      %3604 = vmatprep.subr.bf16.mxu0 0
      %3605 = vmatpush1.bf16.msra.mxu0 %v2720
      %3606 = vmatprep.subr.bf16.mxu0 0
      %3607 = vmatpush1.bf16.msra.mxu0 %v2721
      %3608 = vmatprep.mubr.bf16.mxu0 %v1579
      %3609 = vmatmul.mubr.bf16.gmra.mrb[0].mxu0 %v1578
      %v3610 = vpop.f32.mrb[0].mxu0
      %v3611 = vadd.f32 %v3498, %v3610
      %v3612 = vpop.f32.mrb[0].mxu0
      %v3613 = vpop.f32.mrb[0].mxu0
      %v3614 = vadd.f32 %v3501, %v3613
      %v3615 = vpop.f32.mrb[0].mxu0
      %3616 = vmatprep.mubr.bf16.mxu0 %v1597
      %3617 = vmatmul.mubr.bf16.gmra.mrb[0].mxu0 %v1596
      %v3618 = vpop.f32.mrb[0].mxu0
      %v3619 = vadd.f32 %v3506, %v3618
      %v3620 = vpop.f32.mrb[0].mxu0
      %v3621 = vpop.f32.mrb[0].mxu0
      %v3622 = vadd.f32 %v3509, %v3621
      %v3623 = vpop.f32.mrb[0].mxu0
      %3624 = vmatprep.mubr.bf16.mxu0 %v1615
      %3625 = vmatmul.mubr.bf16.gmra.mrb[0].mxu0 %v1614
      %v3626 = vpop.f32.mrb[0].mxu0
      %v3627 = vadd.f32 %v3514, %v3626
      %v3628 = vpop.f32.mrb[0].mxu0
      %v3629 = vpop.f32.mrb[0].mxu0
      %v3630 = vadd.f32 %v3517, %v3629
      %v3631 = vpop.f32.mrb[0].mxu0
      %3632 = vmatprep.mubr.bf16.mxu0 %v1633
      %3633 = vmatmul.mubr.bf16.gmra.mrb[0].mxu0 %v1632
      %v3634 = vpop.f32.mrb[0].mxu0
      %v3635 = vadd.f32 %v3522, %v3634
      %v3636 = vpop.f32.mrb[0].mxu0
      %v3637 = vpop.f32.mrb[0].mxu0
      %v3638 = vadd.f32 %v3525, %v3637
      %v3639 = vpop.f32.mrb[0].mxu0
      %3640 = vmatprep.mubr.bf16.mxu0 %v1651
      %3641 = vmatmul.mubr.bf16.gmra.mrb[0].mxu0 %v1650
      %v3642 = vpop.f32.mrb[0].mxu0
      %v3643 = vadd.f32 %v3530, %v3642
      %v3644 = vpop.f32.mrb[0].mxu0
      %v3645 = vpop.f32.mrb[0].mxu0
      %v3646 = vadd.f32 %v3533, %v3645
      %v3647 = vpop.f32.mrb[0].mxu0
      %3648 = vmatprep.mubr.bf16.mxu0 %v1669
      %3649 = vmatmul.mubr.bf16.gmra.mrb[0].mxu0 %v1668
      %v3650 = vpop.f32.mrb[0].mxu0
      %v3651 = vadd.f32 %v3538, %v3650
      %v3652 = vpop.f32.mrb[0].mxu0
      %v3653 = vpop.f32.mrb[0].mxu0
      %v3654 = vadd.f32 %v3541, %v3653
      %v3655 = vpop.f32.mrb[0].mxu0
      %3656 = vmatprep.mubr.bf16.mxu0 %v1687
      %3657 = vmatmul.mubr.bf16.gmra.mrb[0].mxu0 %v1686
      %v3658 = vpop.f32.mrb[0].mxu0
      %v3659 = vadd.f32 %v3546, %v3658
      %v3660 = vpop.f32.mrb[0].mxu0
      %v3661 = vpop.f32.mrb[0].mxu0
      %v3662 = vadd.f32 %v3549, %v3661
      %v3663 = vpop.f32.mrb[0].mxu0
      %3664 = vmatprep.mubr.bf16.mxu0 %v1705
      %3665 = vmatmul.mubr.bf16.gmra.mrb[0].mxu0 %v1704
      %v3666 = vpop.f32.mrb[0].mxu0
      %v3667 = vadd.f32 %v3554, %v3666
      %v3668 = vpop.f32.mrb[0].mxu0
      %v3669 = vpop.f32.mrb[0].mxu0
      %v3670 = vadd.f32 %v3557, %v3669
      %v3671 = vpop.f32.mrb[0].mxu0
      %3672 = vmatprep.mubr.bf16.mxu0 %v1723
      %3673 = vmatmul.mubr.bf16.gmra.mrb[0].mxu0 %v1722
      %v3674 = vpop.f32.mrb[0].mxu0
      %v3675 = vadd.f32 %v3562, %v3674
      %v3676 = vpop.f32.mrb[0].mxu0
      %v3677 = vpop.f32.mrb[0].mxu0
      %v3678 = vadd.f32 %v3565, %v3677
      %v3679 = vpop.f32.mrb[0].mxu0
      %3680 = vmatprep.mubr.bf16.mxu0 %v1741
      %3681 = vmatmul.mubr.bf16.gmra.mrb[0].mxu0 %v1740
      %v3682 = vpop.f32.mrb[0].mxu0
      %v3683 = vadd.f32 %v3570, %v3682
      %v3684 = vpop.f32.mrb[0].mxu0
      %v3685 = vpop.f32.mrb[0].mxu0
      %v3686 = vadd.f32 %v3573, %v3685
      %v3687 = vpop.f32.mrb[0].mxu0
      %3688 = vdwg.mxu0
      %3689 = vmatprep.subr.bf16.mxu0 0
      %3690 = vmatpush1.bf16.msra.mxu0 %v2722
      %3691 = vmatprep.subr.bf16.mxu0 0
      %3692 = vmatpush1.bf16.msra.mxu0 %v2723
      %3693 = vmatprep.subr.bf16.mxu0 0
      %3694 = vmatpush1.bf16.msra.mxu0 %v2724
      %3695 = vmatprep.subr.bf16.mxu0 0
      %3696 = vmatpush1.bf16.msra.mxu0 %v2725
      %3697 = vmatprep.subr.bf16.mxu0 0
      %3698 = vmatpush1.bf16.msra.mxu0 %v2726
      %3699 = vmatprep.subr.bf16.mxu0 0
      %3700 = vmatpush1.bf16.msra.mxu0 %v2727
      %3701 = vmatprep.subr.bf16.mxu0 0
      %3702 = vmatpush1.bf16.msra.mxu0 %v2728
      %3703 = vmatprep.subr.bf16.mxu0 0
      %3704 = vmatpush1.bf16.msra.mxu0 %v2729
      %3705 = vmatprep.subr.bf16.mxu0 0
      %3706 = vmatpush1.bf16.msra.mxu0 %v2730
      %3707 = vmatprep.subr.bf16.mxu0 0
      %3708 = vmatpush1.bf16.msra.mxu0 %v2731
      %3709 = vmatprep.subr.bf16.mxu0 0
      %3710 = vmatpush1.bf16.msra.mxu0 %v2732
      %3711 = vmatprep.subr.bf16.mxu0 0
      %3712 = vmatpush1.bf16.msra.mxu0 %v2733
      %3713 = vmatprep.subr.bf16.mxu0 0
      %3714 = vmatpush1.bf16.msra.mxu0 %v2734
      %3715 = vmatprep.subr.bf16.mxu0 0
      %3716 = vmatpush1.bf16.msra.mxu0 %v2735
      %3717 = vmatprep.subr.bf16.mxu0 0
      %3718 = vmatpush1.bf16.msra.mxu0 %v2736
      %3719 = vmatprep.subr.bf16.mxu0 0
      %3720 = vmatpush1.bf16.msra.mxu0 %v2737
      %3721 = vmatprep.mubr.bf16.mxu0 %v1581
      %3722 = vmatmul.mubr.bf16.gmra.mrb[0].mxu0 %v1580
      %v3723 = vpop.f32.mrb[0].mxu0
      %v3724 = vadd.f32 %v3611, %v3723
      %v3725 = vpop.f32.mrb[0].mxu0
      %v3726 = vpop.f32.mrb[0].mxu0
      %v3727 = vadd.f32 %v3614, %v3726
      %v3728 = vpop.f32.mrb[0].mxu0
      %3729 = vmatprep.mubr.bf16.mxu0 %v1599
      %3730 = vmatmul.mubr.bf16.gmra.mrb[0].mxu0 %v1598
      %v3731 = vpop.f32.mrb[0].mxu0
      %v3732 = vadd.f32 %v3619, %v3731
      %v3733 = vpop.f32.mrb[0].mxu0
      %v3734 = vpop.f32.mrb[0].mxu0
      %v3735 = vadd.f32 %v3622, %v3734
      %v3736 = vpop.f32.mrb[0].mxu0
      %3737 = vmatprep.mubr.bf16.mxu0 %v1617
      %3738 = vmatmul.mubr.bf16.gmra.mrb[0].mxu0 %v1616
      %v3739 = vpop.f32.mrb[0].mxu0
      %v3740 = vadd.f32 %v3627, %v3739
      %v3741 = vpop.f32.mrb[0].mxu0
      %v3742 = vpop.f32.mrb[0].mxu0
      %v3743 = vadd.f32 %v3630, %v3742
      %v3744 = vpop.f32.mrb[0].mxu0
      %3745 = vmatprep.mubr.bf16.mxu0 %v1635
      %3746 = vmatmul.mubr.bf16.gmra.mrb[0].mxu0 %v1634
      %v3747 = vpop.f32.mrb[0].mxu0
      %v3748 = vadd.f32 %v3635, %v3747
      %v3749 = vpop.f32.mrb[0].mxu0
      %v3750 = vpop.f32.mrb[0].mxu0
      %v3751 = vadd.f32 %v3638, %v3750
      %v3752 = vpop.f32.mrb[0].mxu0
      %3753 = vmatprep.mubr.bf16.mxu0 %v1653
      %3754 = vmatmul.mubr.bf16.gmra.mrb[0].mxu0 %v1652
      %v3755 = vpop.f32.mrb[0].mxu0
      %v3756 = vadd.f32 %v3643, %v3755
      %v3757 = vpop.f32.mrb[0].mxu0
      %v3758 = vpop.f32.mrb[0].mxu0
      %v3759 = vadd.f32 %v3646, %v3758
      %v3760 = vpop.f32.mrb[0].mxu0
      %3761 = vmatprep.mubr.bf16.mxu0 %v1671
      %3762 = vmatmul.mubr.bf16.gmra.mrb[0].mxu0 %v1670
      %v3763 = vpop.f32.mrb[0].mxu0
      %v3764 = vadd.f32 %v3651, %v3763
      %v3765 = vpop.f32.mrb[0].mxu0
      %v3766 = vpop.f32.mrb[0].mxu0
      %v3767 = vadd.f32 %v3654, %v3766
      %v3768 = vpop.f32.mrb[0].mxu0
      %3769 = vmatprep.mubr.bf16.mxu0 %v1689
      %3770 = vmatmul.mubr.bf16.gmra.mrb[0].mxu0 %v1688
      %v3771 = vpop.f32.mrb[0].mxu0
      %v3772 = vadd.f32 %v3659, %v3771
      %v3773 = vpop.f32.mrb[0].mxu0
      %v3774 = vpop.f32.mrb[0].mxu0
      %v3775 = vadd.f32 %v3662, %v3774
      %v3776 = vpop.f32.mrb[0].mxu0
      %3777 = vmatprep.mubr.bf16.mxu0 %v1707
      %3778 = vmatmul.mubr.bf16.gmra.mrb[0].mxu0 %v1706
      %v3779 = vpop.f32.mrb[0].mxu0
      %v3780 = vadd.f32 %v3667, %v3779
      %v3781 = vpop.f32.mrb[0].mxu0
      %v3782 = vpop.f32.mrb[0].mxu0
      %v3783 = vadd.f32 %v3670, %v3782
      %v3784 = vpop.f32.mrb[0].mxu0
      %3785 = vmatprep.mubr.bf16.mxu0 %v1725
      %3786 = vmatmul.mubr.bf16.gmra.mrb[0].mxu0 %v1724
      %v3787 = vpop.f32.mrb[0].mxu0
      %v3788 = vadd.f32 %v3675, %v3787
      %v3789 = vpop.f32.mrb[0].mxu0
      %v3790 = vpop.f32.mrb[0].mxu0
      %v3791 = vadd.f32 %v3678, %v3790
      %v3792 = vpop.f32.mrb[0].mxu0
      %3793 = vmatprep.mubr.bf16.mxu0 %v1743
      %3794 = vmatmul.mubr.bf16.gmra.mrb[0].mxu0 %v1742
      %v3795 = vpop.f32.mrb[0].mxu0
      %v3796 = vadd.f32 %v3683, %v3795
      %v3797 = vpop.f32.mrb[0].mxu0
      %v3798 = vpop.f32.mrb[0].mxu0
      %v3799 = vadd.f32 %v3686, %v3798
      %v3800 = vpop.f32.mrb[0].mxu0
      %3801 = vdwg.mxu0
      %3802 = vmatprep.subr.bf16.mxu0 0
      %3803 = vmatpush1.bf16.msra.mxu0 %v2738
      %3804 = vmatprep.subr.bf16.mxu0 0
      %3805 = vmatpush1.bf16.msra.mxu0 %v2739
      %3806 = vmatprep.subr.bf16.mxu0 0
      %3807 = vmatpush1.bf16.msra.mxu0 %v2740
      %3808 = vmatprep.subr.bf16.mxu0 0
      %3809 = vmatpush1.bf16.msra.mxu0 %v2741
      %3810 = vmatprep.subr.bf16.mxu0 0
      %3811 = vmatpush1.bf16.msra.mxu0 %v2742
      %3812 = vmatprep.subr.bf16.mxu0 0
      %3813 = vmatpush1.bf16.msra.mxu0 %v2743
      %3814 = vmatprep.subr.bf16.mxu0 0
      %3815 = vmatpush1.bf16.msra.mxu0 %v2744
      %3816 = vmatprep.subr.bf16.mxu0 0
      %3817 = vmatpush1.bf16.msra.mxu0 %v2745
      %3818 = vmatprep.subr.bf16.mxu0 0
      %3819 = vmatpush1.bf16.msra.mxu0 %v2746
      %3820 = vmatprep.subr.bf16.mxu0 0
      %3821 = vmatpush1.bf16.msra.mxu0 %v2747
      %3822 = vmatprep.subr.bf16.mxu0 0
      %3823 = vmatpush1.bf16.msra.mxu0 %v2748
      %3824 = vmatprep.subr.bf16.mxu0 0
      %3825 = vmatpush1.bf16.msra.mxu0 %v2749
      %3826 = vmatprep.subr.bf16.mxu0 0
      %3827 = vmatpush1.bf16.msra.mxu0 %v2750
      %3828 = vmatprep.subr.bf16.mxu0 0
      %3829 = vmatpush1.bf16.msra.mxu0 %v2751
      %3830 = vmatprep.subr.bf16.mxu0 0
      %3831 = vmatpush1.bf16.msra.mxu0 %v2752
      %3832 = vmatprep.subr.bf16.mxu0 0
      %3833 = vmatpush1.bf16.msra.mxu0 %v2753
      %3834 = vmatprep.mubr.bf16.mxu0 %v1583
      %3835 = vmatmul.mubr.bf16.gmra.mrb[0].mxu0 %v1582
      %v3836 = vpop.f32.mrb[0].mxu0
      %v3837 = vadd.f32 %v3724, %v3836
      %v3838 = vpop.f32.mrb[0].mxu0
      %v3839 = vpop.f32.mrb[0].mxu0
      %v3840 = vadd.f32 %v3727, %v3839
      %v3841 = vpop.f32.mrb[0].mxu0
      %3842 = vmatprep.mubr.bf16.mxu0 %v1601
      %3843 = vmatmul.mubr.bf16.gmra.mrb[0].mxu0 %v1600
      %v3844 = vpop.f32.mrb[0].mxu0
      %v3845 = vadd.f32 %v3732, %v3844
      %v3846 = vpop.f32.mrb[0].mxu0
      %v3847 = vpop.f32.mrb[0].mxu0
      %v3848 = vadd.f32 %v3735, %v3847
      %v3849 = vpop.f32.mrb[0].mxu0
      %3850 = vmatprep.mubr.bf16.mxu0 %v1619
      %3851 = vmatmul.mubr.bf16.gmra.mrb[0].mxu0 %v1618
      %v3852 = vpop.f32.mrb[0].mxu0
      %v3853 = vadd.f32 %v3740, %v3852
      %v3854 = vpop.f32.mrb[0].mxu0
      %v3855 = vpop.f32.mrb[0].mxu0
      %v3856 = vadd.f32 %v3743, %v3855
      %v3857 = vpop.f32.mrb[0].mxu0
      %3858 = vmatprep.mubr.bf16.mxu0 %v1637
      %3859 = vmatmul.mubr.bf16.gmra.mrb[0].mxu0 %v1636
      %v3860 = vpop.f32.mrb[0].mxu0
      %v3861 = vadd.f32 %v3748, %v3860
      %v3862 = vpop.f32.mrb[0].mxu0
      %v3863 = vpop.f32.mrb[0].mxu0
      %v3864 = vadd.f32 %v3751, %v3863
      %v3865 = vpop.f32.mrb[0].mxu0
      %3866 = vmatprep.mubr.bf16.mxu0 %v1655
      %3867 = vmatmul.mubr.bf16.gmra.mrb[0].mxu0 %v1654
      %v3868 = vpop.f32.mrb[0].mxu0
      %v3869 = vadd.f32 %v3756, %v3868
      %v3870 = vpop.f32.mrb[0].mxu0
      %v3871 = vpop.f32.mrb[0].mxu0
      %v3872 = vadd.f32 %v3759, %v3871
      %v3873 = vpop.f32.mrb[0].mxu0
      %3874 = vmatprep.mubr.bf16.mxu0 %v1673
      %3875 = vmatmul.mubr.bf16.gmra.mrb[0].mxu0 %v1672
      %v3876 = vpop.f32.mrb[0].mxu0
      %v3877 = vadd.f32 %v3764, %v3876
      %v3878 = vpop.f32.mrb[0].mxu0
      %v3879 = vpop.f32.mrb[0].mxu0
      %v3880 = vadd.f32 %v3767, %v3879
      %v3881 = vpop.f32.mrb[0].mxu0
      %3882 = vmatprep.mubr.bf16.mxu0 %v1691
      %3883 = vmatmul.mubr.bf16.gmra.mrb[0].mxu0 %v1690
      %v3884 = vpop.f32.mrb[0].mxu0
      %v3885 = vadd.f32 %v3772, %v3884
      %v3886 = vpop.f32.mrb[0].mxu0
      %v3887 = vpop.f32.mrb[0].mxu0
      %v3888 = vadd.f32 %v3775, %v3887
      %v3889 = vpop.f32.mrb[0].mxu0
      %3890 = vmatprep.mubr.bf16.mxu0 %v1709
      %3891 = vmatmul.mubr.bf16.gmra.mrb[0].mxu0 %v1708
      %v3892 = vpop.f32.mrb[0].mxu0
      %v3893 = vadd.f32 %v3780, %v3892
      %v3894 = vpop.f32.mrb[0].mxu0
      %v3895 = vpop.f32.mrb[0].mxu0
      %v3896 = vadd.f32 %v3783, %v3895
      %v3897 = vpop.f32.mrb[0].mxu0
      %3898 = vmatprep.mubr.bf16.mxu0 %v1727
      %3899 = vmatmul.mubr.bf16.gmra.mrb[0].mxu0 %v1726
      %v3900 = vpop.f32.mrb[0].mxu0
      %v3901 = vadd.f32 %v3788, %v3900
      %v3902 = vpop.f32.mrb[0].mxu0
      %v3903 = vpop.f32.mrb[0].mxu0
      %v3904 = vadd.f32 %v3791, %v3903
      %v3905 = vpop.f32.mrb[0].mxu0
      %3906 = vmatprep.mubr.bf16.mxu0 %v1745
      %3907 = vmatmul.mubr.bf16.gmra.mrb[0].mxu0 %v1744
      %v3908 = vpop.f32.mrb[0].mxu0
      %v3909 = vadd.f32 %v3796, %v3908
      %v3910 = vpop.f32.mrb[0].mxu0
      %v3911 = vpop.f32.mrb[0].mxu0
      %v3912 = vadd.f32 %v3799, %v3911
      %v3913 = vpop.f32.mrb[0].mxu0
      %3914 = vdwg.mxu0
      %v3915 = vld [vmem:[%s4] sm:$0x1]
      %v3917 = vlaneseq
      %v3918 = vshrl.u32 %v3917, 7
      %v3919 = vsub.s32 0, %v3918
      %v3920 = vrot.slane %v3915, %v3919
      %v3922 = vmul.f32 %v3837, %v3920
      %v3923 = vmul.f32 %v3840, %v3920
      %v3924 = vmul.f32 %v3845, %v3920
      %v3925 = vmul.f32 %v3848, %v3920
      %v3926 = vmul.f32 %v3853, %v3920
      %v3927 = vmul.f32 %v3856, %v3920
      %v3928 = vmul.f32 %v3861, %v3920
      %v3929 = vmul.f32 %v3864, %v3920
      %v3930 = vmul.f32 %v3869, %v3920
      %v3931 = vmul.f32 %v3872, %v3920
      %v3932 = vmul.f32 %v3877, %v3920
      %v3933 = vmul.f32 %v3880, %v3920
      %v3934 = vmul.f32 %v3885, %v3920
      %v3935 = vmul.f32 %v3888, %v3920
      %v3936 = vmul.f32 %v3893, %v3920
      %v3937 = vmul.f32 %v3896, %v3920
      %v3938 = vmul.f32 %v3901, %v3920
      %v3939 = vmul.f32 %v3904, %v3920
      %v3940 = vmul.f32 %v3909, %v3920
      %v3941 = vmul.f32 %v3912, %v3920
      %v3942 = vld [vmem:[%s5] sm:$0x1]
      %v3944 = vlaneseq
      %v3945 = vshrl.u32 %v3944, 7
      %v3946 = vsub.s32 0, %v3945
      %v3947 = vrot.slane %v3942, %v3946
      %v3949 = vadd.f32 %v3922, %v3947
      %v3950 = vadd.f32 %v3923, %v3947
      %v3951 = vadd.f32 %v3924, %v3947
      %v3952 = vadd.f32 %v3925, %v3947
      %v3953 = vadd.f32 %v3926, %v3947
      %v3954 = vadd.f32 %v3927, %v3947
      %v3955 = vadd.f32 %v3928, %v3947
      %v3956 = vadd.f32 %v3929, %v3947
      %v3957 = vadd.f32 %v3930, %v3947
      %v3958 = vadd.f32 %v3931, %v3947
      %v3959 = vadd.f32 %v3932, %v3947
      %v3960 = vadd.f32 %v3933, %v3947
      %v3961 = vadd.f32 %v3934, %v3947
      %v3962 = vadd.f32 %v3935, %v3947
      %v3963 = vadd.f32 %v3936, %v3947
      %v3964 = vadd.f32 %v3937, %v3947
      %v3965 = vadd.f32 %v3938, %v3947
      %v3966 = vadd.f32 %v3939, %v3947
      %v3967 = vadd.f32 %v3940, %v3947
      %v3968 = vadd.f32 %v3941, %v3947
      %v3969 = vmax.f32 %v3949, 0.0
      %v3970 = vmax.f32 %v3950, 0.0
      %v3971 = vmax.f32 %v3951, 0.0
      %v3972 = vmax.f32 %v3952, 0.0
      %v3973 = vmax.f32 %v3953, 0.0
      %v3974 = vmax.f32 %v3954, 0.0
      %v3975 = vmax.f32 %v3955, 0.0
      %v3976 = vmax.f32 %v3956, 0.0
      %v3977 = vmax.f32 %v3957, 0.0
      %v3978 = vmax.f32 %v3958, 0.0
      %v3979 = vmax.f32 %v3959, 0.0
      %v3980 = vmax.f32 %v3960, 0.0
      %v3981 = vmax.f32 %v3961, 0.0
      %v3982 = vmax.f32 %v3962, 0.0
      %v3983 = vmax.f32 %v3963, 0.0
      %v3984 = vmax.f32 %v3964, 0.0
      %v3985 = vmax.f32 %v3965, 0.0
      %v3986 = vmax.f32 %v3966, 0.0
      %v3987 = vmax.f32 %v3967, 0.0
      %v3988 = vmax.f32 %v3968, 0.0
      %s3989 = ssub.s32 %s352, 1
      %v3990 = vstv %s3989
      %v3991 = vadd.s32 %v3990, 1
      %v3992 = vadd.s32 %v3990, 2
      %v3993 = vadd.s32 %v3990, 3
      %v3994 = vadd.s32 %v3990, 4
      %v3995 = vadd.s32 %v3990, 5
      %v3996 = vadd.s32 %v3990, 6
      %v3997 = vadd.s32 %v3990, 7
      %v3998 = vadd.s32 %v3990, 8
      %v3999 = vadd.s32 %v3990, 9
      %vm4000 = vcmp.ge.s32.totalorder %v3990, 0
      %vm4001 = vcmp.ge.s32.totalorder %v3991, 0
      %vm4002 = vcmp.ge.s32.totalorder %v3992, 0
      %vm4003 = vcmp.ge.s32.totalorder %v3993, 0
      %vm4004 = vcmp.ge.s32.totalorder %v3994, 0
      %vm4005 = vcmp.ge.s32.totalorder %v3995, 0
      %vm4006 = vcmp.ge.s32.totalorder %v3996, 0
      %vm4007 = vcmp.ge.s32.totalorder %v3997, 0
      %vm4008 = vcmp.ge.s32.totalorder %v3998, 0
      %vm4009 = vcmp.ge.s32.totalorder %v3999, 0
      %vm4010 = vcmp.lt.s32.totalorder %v3990, 16
      %vm4011 = vcmp.lt.s32.totalorder %v3991, 16
      %vm4012 = vcmp.lt.s32.totalorder %v3992, 16
      %vm4013 = vcmp.lt.s32.totalorder %v3993, 16
      %vm4014 = vcmp.lt.s32.totalorder %v3994, 16
      %vm4015 = vcmp.lt.s32.totalorder %v3995, 16
      %vm4016 = vcmp.lt.s32.totalorder %v3996, 16
      %vm4017 = vcmp.lt.s32.totalorder %v3997, 16
      %vm4018 = vcmp.lt.s32.totalorder %v3998, 16
      %vm4019 = vcmp.lt.s32.totalorder %v3999, 16
      %vm4020 = vmand %vm4000, %vm4010
      %vm4021 = vmand %vm4001, %vm4011
      %vm4022 = vmand %vm4002, %vm4012
      %vm4023 = vmand %vm4003, %vm4013
      %vm4024 = vmand %vm4004, %vm4014
      %vm4025 = vmand %vm4005, %vm4015
      %vm4026 = vmand %vm4006, %vm4016
      %vm4027 = vmand %vm4007, %vm4017
      %vm4028 = vmand %vm4008, %vm4018
      %vm4029 = vmand %vm4009, %vm4019
      %v4030 = vsel %vm4020, %v3969, 0.0
      %v4031 = vsel %vm4020, %v3970, 0.0
      %v4032 = vsel %vm4021, %v3971, 0.0
      %v4033 = vsel %vm4021, %v3972, 0.0
      %v4034 = vsel %vm4022, %v3973, 0.0
      %v4035 = vsel %vm4022, %v3974, 0.0
      %v4036 = vsel %vm4023, %v3975, 0.0
      %v4037 = vsel %vm4023, %v3976, 0.0
      %v4038 = vsel %vm4024, %v3977, 0.0
      %v4039 = vsel %vm4024, %v3978, 0.0
      %v4040 = vsel %vm4025, %v3979, 0.0
      %v4041 = vsel %vm4025, %v3980, 0.0
      %v4042 = vsel %vm4026, %v3981, 0.0
      %v4043 = vsel %vm4026, %v3982, 0.0
      %v4044 = vsel %vm4027, %v3983, 0.0
      %v4045 = vsel %vm4027, %v3984, 0.0
      %v4046 = vsel %vm4028, %v3985, 0.0
      %v4047 = vsel %vm4028, %v3986, 0.0
      %v4048 = vsel %vm4029, %v3987, 0.0
      %v4049 = vsel %vm4029, %v3988, 0.0
      %4050 = vst [vmem:[#allocation2] sm:$0xff] 0.0
      %4051 = vst [vmem:[#allocation2 + $0x8] sm:$0xff] 0.0
      %4052 = vst [vmem:[#allocation2 + $0x10] sm:$0x3] 0.0
      %4053 = vst [vmem:[#allocation2 + $0x18] sm:$0xff] 0.0
      %4054 = vst [vmem:[#allocation2 + $0x20] sm:$0xff] 0.0
      %4055 = vst [vmem:[#allocation2 + $0x28] sm:$0x3] 0.0
      %4056 = vst [vmem:[#allocation2 + $0x30] sm:$0xff] 0.0
      %4057 = vst [vmem:[#allocation2 + $0x38] sm:$0xff] 0.0
      %4058 = vst [vmem:[#allocation2 + $0x40] sm:$0x3] 0.0
      %4059 = vst [vmem:[#allocation2 + $0x48] sm:$0xff] 0.0
      %4060 = vst [vmem:[#allocation2 + $0x50] sm:$0xff] 0.0
      %4061 = vst [vmem:[#allocation2 + $0x58] sm:$0x3] 0.0
      %4062 = vst [vmem:[#allocation2 + $0x60] sm:$0xff] 0.0
      %4063 = vst [vmem:[#allocation2 + $0x68] sm:$0xff] 0.0
      %4064 = vst [vmem:[#allocation2 + $0x70] sm:$0x3] 0.0
      %4065 = vst [vmem:[#allocation2 + $0x78] sm:$0xff] 0.0
      %4066 = vst [vmem:[#allocation2 + $0x80] sm:$0xff] 0.0
      %4067 = vst [vmem:[#allocation2 + $0x88] sm:$0x3] 0.0
      %4068 = vst [vmem:[#allocation2 + $0x90] sm:$0xff] 0.0
      %4069 = vst [vmem:[#allocation2 + $0x98] sm:$0xff] 0.0
      %4070 = vst [vmem:[#allocation2 + $0xa0] sm:$0x3] 0.0
      %4071 = vst [vmem:[#allocation2 + $0xa8] sm:$0xff] 0.0
      %4072 = vst [vmem:[#allocation2 + $0xb0] sm:$0xff] 0.0
      %4073 = vst [vmem:[#allocation2 + $0xb8] sm:$0x3] 0.0
      %4074 = vst [vmem:[#allocation2 + $0xc0] sm:$0xff] 0.0
      %4075 = vst [vmem:[#allocation2 + $0xc8] sm:$0xff] 0.0
      %4076 = vst [vmem:[#allocation2 + $0xd0] sm:$0x3] 0.0
      %4077 = vst [vmem:[#allocation2 + $0xd8] sm:$0xff] 0.0
      %4078 = vst [vmem:[#allocation2 + $0xe0] sm:$0xff] 0.0
      %4079 = vst [vmem:[#allocation2 + $0xe8] sm:$0x3] 0.0
      %4080 = vst [vmem:[#allocation2 + $0x1] sm:$0xff] %v4030
      %4081 = vst [vmem:[#allocation2 + $0x9] sm:$0xff] %v4031
      %4082 = vst [vmem:[#allocation2 + $0x19] sm:$0xff] %v4032
      %4083 = vst [vmem:[#allocation2 + $0x21] sm:$0xff] %v4033
      %4084 = vst [vmem:[#allocation2 + $0x31] sm:$0xff] %v4034
      %4085 = vst [vmem:[#allocation2 + $0x39] sm:$0xff] %v4035
      %4086 = vst [vmem:[#allocation2 + $0x49] sm:$0xff] %v4036
      %4087 = vst [vmem:[#allocation2 + $0x51] sm:$0xff] %v4037
      %4088 = vst [vmem:[#allocation2 + $0x61] sm:$0xff] %v4038
      %4089 = vst [vmem:[#allocation2 + $0x69] sm:$0xff] %v4039
      %4090 = vst [vmem:[#allocation2 + $0x79] sm:$0xff] %v4040
      %4091 = vst [vmem:[#allocation2 + $0x81] sm:$0xff] %v4041
      %4092 = vst [vmem:[#allocation2 + $0x91] sm:$0xff] %v4042
      %4093 = vst [vmem:[#allocation2 + $0x99] sm:$0xff] %v4043
      %4094 = vst [vmem:[#allocation2 + $0xa9] sm:$0xff] %v4044
      %4095 = vst [vmem:[#allocation2 + $0xb1] sm:$0xff] %v4045
      %4096 = vst [vmem:[#allocation2 + $0xc1] sm:$0xff] %v4046
      %4097 = vst [vmem:[#allocation2 + $0xc9] sm:$0xff] %v4047
      %4098 = vst [vmem:[#allocation2 + $0xd9] sm:$0xff] %v4048
      %4099 = vst [vmem:[#allocation2 + $0xe1] sm:$0xff] %v4049
      %v4100 = vld [vmem:[#allocation2] sm:$0xff]
      %v4101 = vld [vmem:[#allocation2 + $0x8] sm:$0xff]
      %v4102 = vld [vmem:[#allocation2 + $0x10] sm:$0x3]
      %v4103 = vld [vmem:[#allocation2 + $0x18] sm:$0xff]
      %v4104 = vld [vmem:[#allocation2 + $0x20] sm:$0xff]
      %v4105 = vld [vmem:[#allocation2 + $0x28] sm:$0x3]
      %v4106 = vld [vmem:[#allocation2 + $0x30] sm:$0xff]
      %v4107 = vld [vmem:[#allocation2 + $0x38] sm:$0xff]
      %v4108 = vld [vmem:[#allocation2 + $0x40] sm:$0x3]
      %v4109 = vld [vmem:[#allocation2 + $0x48] sm:$0xff]
      %v4110 = vld [vmem:[#allocation2 + $0x50] sm:$0xff]
      %v4111 = vld [vmem:[#allocation2 + $0x58] sm:$0x3]
      %v4112 = vld [vmem:[#allocation2 + $0x60] sm:$0xff]
      %v4113 = vld [vmem:[#allocation2 + $0x68] sm:$0xff]
      %v4114 = vld [vmem:[#allocation2 + $0x70] sm:$0x3]
      %v4115 = vld [vmem:[#allocation2 + $0x78] sm:$0xff]
      %v4116 = vld [vmem:[#allocation2 + $0x80] sm:$0xff]
      %v4117 = vld [vmem:[#allocation2 + $0x88] sm:$0x3]
      %v4118 = vld [vmem:[#allocation2 + $0x90] sm:$0xff]
      %v4119 = vld [vmem:[#allocation2 + $0x98] sm:$0xff]
      %v4120 = vld [vmem:[#allocation2 + $0xa0] sm:$0x3]
      %v4121 = vld [vmem:[#allocation2 + $0xa8] sm:$0xff]
      %v4122 = vld [vmem:[#allocation2 + $0xb0] sm:$0xff]
      %v4123 = vld [vmem:[#allocation2 + $0xb8] sm:$0x3]
      %s4124 = scalar_lea.vmem [#allocation2], 24
      %v4125 = vld [vmem:[%s4124] sm:$0xff]
      %v4126 = vld [vmem:[%s4124 + $0x8] sm:$0xff]
      %v4127 = vld [vmem:[%s4124 + $0x10] sm:$0x3]
      %v4128 = vld [vmem:[%s4124 + $0x18] sm:$0xff]
      %v4129 = vld [vmem:[%s4124 + $0x20] sm:$0xff]
      %v4130 = vld [vmem:[%s4124 + $0x28] sm:$0x3]
      %v4131 = vld [vmem:[%s4124 + $0x30] sm:$0xff]
      %v4132 = vld [vmem:[%s4124 + $0x38] sm:$0xff]
      %v4133 = vld [vmem:[%s4124 + $0x40] sm:$0x3]
      %v4134 = vld [vmem:[%s4124 + $0x48] sm:$0xff]
      %v4135 = vld [vmem:[%s4124 + $0x50] sm:$0xff]
      %v4136 = vld [vmem:[%s4124 + $0x58] sm:$0x3]
      %v4137 = vld [vmem:[%s4124 + $0x60] sm:$0xff]
      %v4138 = vld [vmem:[%s4124 + $0x68] sm:$0xff]
      %v4139 = vld [vmem:[%s4124 + $0x70] sm:$0x3]
      %v4140 = vld [vmem:[%s4124 + $0x78] sm:$0xff]
      %v4141 = vld [vmem:[%s4124 + $0x80] sm:$0xff]
      %v4142 = vld [vmem:[%s4124 + $0x88] sm:$0x3]
      %v4143 = vld [vmem:[%s4124 + $0x90] sm:$0xff]
      %v4144 = vld [vmem:[%s4124 + $0x98] sm:$0xff]
      %v4145 = vld [vmem:[%s4124 + $0xa0] sm:$0x3]
      %v4146 = vld [vmem:[%s4124 + $0xa8] sm:$0xff]
      %v4147 = vld [vmem:[%s4124 + $0xb0] sm:$0xff]
      %v4148 = vld [vmem:[%s4124 + $0xb8] sm:$0x3]
      %s4149 = scalar_lea.vmem [#allocation2], 48
      %v4150 = vld [vmem:[%s4149] sm:$0xff]
      %v4151 = vld [vmem:[%s4149 + $0x8] sm:$0xff]
      %v4152 = vld [vmem:[%s4149 + $0x10] sm:$0x3]
      %v4153 = vld [vmem:[%s4149 + $0x18] sm:$0xff]
      %v4154 = vld [vmem:[%s4149 + $0x20] sm:$0xff]
      %v4155 = vld [vmem:[%s4149 + $0x28] sm:$0x3]
      %v4156 = vld [vmem:[%s4149 + $0x30] sm:$0xff]
      %v4157 = vld [vmem:[%s4149 + $0x38] sm:$0xff]
      %v4158 = vld [vmem:[%s4149 + $0x40] sm:$0x3]
      %v4159 = vld [vmem:[%s4149 + $0x48] sm:$0xff]
      %v4160 = vld [vmem:[%s4149 + $0x50] sm:$0xff]
      %v4161 = vld [vmem:[%s4149 + $0x58] sm:$0x3]
      %v4162 = vld [vmem:[%s4149 + $0x60] sm:$0xff]
      %v4163 = vld [vmem:[%s4149 + $0x68] sm:$0xff]
      %v4164 = vld [vmem:[%s4149 + $0x70] sm:$0x3]
      %v4165 = vld [vmem:[%s4149 + $0x78] sm:$0xff]
      %v4166 = vld [vmem:[%s4149 + $0x80] sm:$0xff]
      %v4167 = vld [vmem:[%s4149 + $0x88] sm:$0x3]
      %v4168 = vld [vmem:[%s4149 + $0x90] sm:$0xff]
      %v4169 = vld [vmem:[%s4149 + $0x98] sm:$0xff]
      %v4170 = vld [vmem:[%s4149 + $0xa0] sm:$0x3]
      %v4171 = vld [vmem:[%s4149 + $0xa8] sm:$0xff]
      %v4172 = vld [vmem:[%s4149 + $0xb0] sm:$0xff]
      %v4173 = vld [vmem:[%s4149 + $0xb8] sm:$0x3]
      %v4198 = vrot.slane %v4100, 1
      %v4199 = vrot.slane %v4101, 1
      %v4200 = vsel %vm604, %v4198, %v4199
      %v4201 = vrot.slane %v4102, 1
      %v4202 = vsel %vm604, %v4199, %v4201
      %v4203 = vrot.slane %v4103, 1
      %v4204 = vrot.slane %v4104, 1
      %v4205 = vsel %vm604, %v4203, %v4204
      %v4206 = vrot.slane %v4105, 1
      %v4207 = vsel %vm604, %v4204, %v4206
      %v4208 = vrot.slane %v4106, 1
      %v4209 = vrot.slane %v4107, 1
      %v4210 = vsel %vm604, %v4208, %v4209
      %v4211 = vrot.slane %v4108, 1
      %v4212 = vsel %vm604, %v4209, %v4211
      %v4213 = vrot.slane %v4109, 1
      %v4214 = vrot.slane %v4110, 1
      %v4215 = vsel %vm604, %v4213, %v4214
      %v4216 = vrot.slane %v4111, 1
      %v4217 = vsel %vm604, %v4214, %v4216
      %v4218 = vrot.slane %v4112, 1
      %v4219 = vrot.slane %v4113, 1
      %v4220 = vsel %vm604, %v4218, %v4219
      %v4221 = vrot.slane %v4114, 1
      %v4222 = vsel %vm604, %v4219, %v4221
      %v4223 = vrot.slane %v4115, 1
      %v4224 = vrot.slane %v4116, 1
      %v4225 = vsel %vm604, %v4223, %v4224
      %v4226 = vrot.slane %v4117, 1
      %v4227 = vsel %vm604, %v4224, %v4226
      %v4228 = vrot.slane %v4118, 1
      %v4229 = vrot.slane %v4119, 1
      %v4230 = vsel %vm604, %v4228, %v4229
      %v4231 = vrot.slane %v4120, 1
      %v4232 = vsel %vm604, %v4229, %v4231
      %v4233 = vrot.slane %v4121, 1
      %v4234 = vrot.slane %v4122, 1
      %v4235 = vsel %vm604, %v4233, %v4234
      %v4236 = vrot.slane %v4123, 1
      %v4237 = vsel %vm604, %v4234, %v4236
      %v4254 = vrot.slane %v4100, 2
      %v4255 = vrot.slane %v4101, 2
      %v4256 = vsel %vm745, %v4254, %v4255
      %v4257 = vrot.slane %v4102, 2
      %v4258 = vsel %vm745, %v4255, %v4257
      %v4259 = vrot.slane %v4103, 2
      %v4260 = vrot.slane %v4104, 2
      %v4261 = vsel %vm745, %v4259, %v4260
      %v4262 = vrot.slane %v4105, 2
      %v4263 = vsel %vm745, %v4260, %v4262
      %v4264 = vrot.slane %v4106, 2
      %v4265 = vrot.slane %v4107, 2
      %v4266 = vsel %vm745, %v4264, %v4265
      %v4267 = vrot.slane %v4108, 2
      %v4268 = vsel %vm745, %v4265, %v4267
      %v4269 = vrot.slane %v4109, 2
      %v4270 = vrot.slane %v4110, 2
      %v4271 = vsel %vm745, %v4269, %v4270
      %v4272 = vrot.slane %v4111, 2
      %v4273 = vsel %vm745, %v4270, %v4272
      %v4274 = vrot.slane %v4112, 2
      %v4275 = vrot.slane %v4113, 2
      %v4276 = vsel %vm745, %v4274, %v4275
      %v4277 = vrot.slane %v4114, 2
      %v4278 = vsel %vm745, %v4275, %v4277
      %v4279 = vrot.slane %v4115, 2
      %v4280 = vrot.slane %v4116, 2
      %v4281 = vsel %vm745, %v4279, %v4280
      %v4282 = vrot.slane %v4117, 2
      %v4283 = vsel %vm745, %v4280, %v4282
      %v4284 = vrot.slane %v4118, 2
      %v4285 = vrot.slane %v4119, 2
      %v4286 = vsel %vm745, %v4284, %v4285
      %v4287 = vrot.slane %v4120, 2
      %v4288 = vsel %vm745, %v4285, %v4287
      %v4289 = vrot.slane %v4121, 2
      %v4290 = vrot.slane %v4122, 2
      %v4291 = vsel %vm745, %v4289, %v4290
      %v4292 = vrot.slane %v4123, 2
      %v4293 = vsel %vm745, %v4290, %v4292
      %v4334 = vrot.slane %v4125, 1
      %v4335 = vrot.slane %v4126, 1
      %v4336 = vsel %vm604, %v4334, %v4335
      %v4337 = vrot.slane %v4127, 1
      %v4338 = vsel %vm604, %v4335, %v4337
      %v4339 = vrot.slane %v4128, 1
      %v4340 = vrot.slane %v4129, 1
      %v4341 = vsel %vm604, %v4339, %v4340
      %v4342 = vrot.slane %v4130, 1
      %v4343 = vsel %vm604, %v4340, %v4342
      %v4344 = vrot.slane %v4131, 1
      %v4345 = vrot.slane %v4132, 1
      %v4346 = vsel %vm604, %v4344, %v4345
      %v4347 = vrot.slane %v4133, 1
      %v4348 = vsel %vm604, %v4345, %v4347
      %v4349 = vrot.slane %v4134, 1
      %v4350 = vrot.slane %v4135, 1
      %v4351 = vsel %vm604, %v4349, %v4350
      %v4352 = vrot.slane %v4136, 1
      %v4353 = vsel %vm604, %v4350, %v4352
      %v4354 = vrot.slane %v4137, 1
      %v4355 = vrot.slane %v4138, 1
      %v4356 = vsel %vm604, %v4354, %v4355
      %v4357 = vrot.slane %v4139, 1
      %v4358 = vsel %vm604, %v4355, %v4357
      %v4359 = vrot.slane %v4140, 1
      %v4360 = vrot.slane %v4141, 1
      %v4361 = vsel %vm604, %v4359, %v4360
      %v4362 = vrot.slane %v4142, 1
      %v4363 = vsel %vm604, %v4360, %v4362
      %v4364 = vrot.slane %v4143, 1
      %v4365 = vrot.slane %v4144, 1
      %v4366 = vsel %vm604, %v4364, %v4365
      %v4367 = vrot.slane %v4145, 1
      %v4368 = vsel %vm604, %v4365, %v4367
      %v4369 = vrot.slane %v4146, 1
      %v4370 = vrot.slane %v4147, 1
      %v4371 = vsel %vm604, %v4369, %v4370
      %v4372 = vrot.slane %v4148, 1
      %v4373 = vsel %vm604, %v4370, %v4372
      %v4390 = vrot.slane %v4125, 2
      %v4391 = vrot.slane %v4126, 2
      %v4392 = vsel %vm745, %v4390, %v4391
      %v4393 = vrot.slane %v4127, 2
      %v4394 = vsel %vm745, %v4391, %v4393
      %v4395 = vrot.slane %v4128, 2
      %v4396 = vrot.slane %v4129, 2
      %v4397 = vsel %vm745, %v4395, %v4396
      %v4398 = vrot.slane %v4130, 2
      %v4399 = vsel %vm745, %v4396, %v4398
      %v4400 = vrot.slane %v4131, 2
      %v4401 = vrot.slane %v4132, 2
      %v4402 = vsel %vm745, %v4400, %v4401
      %v4403 = vrot.slane %v4133, 2
      %v4404 = vsel %vm745, %v4401, %v4403
      %v4405 = vrot.slane %v4134, 2
      %v4406 = vrot.slane %v4135, 2
      %v4407 = vsel %vm745, %v4405, %v4406
      %v4408 = vrot.slane %v4136, 2
      %v4409 = vsel %vm745, %v4406, %v4408
      %v4410 = vrot.slane %v4137, 2
      %v4411 = vrot.slane %v4138, 2
      %v4412 = vsel %vm745, %v4410, %v4411
      %v4413 = vrot.slane %v4139, 2
      %v4414 = vsel %vm745, %v4411, %v4413
      %v4415 = vrot.slane %v4140, 2
      %v4416 = vrot.slane %v4141, 2
      %v4417 = vsel %vm745, %v4415, %v4416
      %v4418 = vrot.slane %v4142, 2
      %v4419 = vsel %vm745, %v4416, %v4418
      %v4420 = vrot.slane %v4143, 2
      %v4421 = vrot.slane %v4144, 2
      %v4422 = vsel %vm745, %v4420, %v4421
      %v4423 = vrot.slane %v4145, 2
      %v4424 = vsel %vm745, %v4421, %v4423
      %v4425 = vrot.slane %v4146, 2
      %v4426 = vrot.slane %v4147, 2
      %v4427 = vsel %vm745, %v4425, %v4426
      %v4428 = vrot.slane %v4148, 2
      %v4429 = vsel %vm745, %v4426, %v4428
      %v4470 = vrot.slane %v4150, 1
      %v4471 = vrot.slane %v4151, 1
      %v4472 = vsel %vm604, %v4470, %v4471
      %v4473 = vrot.slane %v4152, 1
      %v4474 = vsel %vm604, %v4471, %v4473
      %v4475 = vrot.slane %v4153, 1
      %v4476 = vrot.slane %v4154, 1
      %v4477 = vsel %vm604, %v4475, %v4476
      %v4478 = vrot.slane %v4155, 1
      %v4479 = vsel %vm604, %v4476, %v4478
      %v4480 = vrot.slane %v4156, 1
      %v4481 = vrot.slane %v4157, 1
      %v4482 = vsel %vm604, %v4480, %v4481
      %v4483 = vrot.slane %v4158, 1
      %v4484 = vsel %vm604, %v4481, %v4483
      %v4485 = vrot.slane %v4159, 1
      %v4486 = vrot.slane %v4160, 1
      %v4487 = vsel %vm604, %v4485, %v4486
      %v4488 = vrot.slane %v4161, 1
      %v4489 = vsel %vm604, %v4486, %v4488
      %v4490 = vrot.slane %v4162, 1
      %v4491 = vrot.slane %v4163, 1
      %v4492 = vsel %vm604, %v4490, %v4491
      %v4493 = vrot.slane %v4164, 1
      %v4494 = vsel %vm604, %v4491, %v4493
      %v4495 = vrot.slane %v4165, 1
      %v4496 = vrot.slane %v4166, 1
      %v4497 = vsel %vm604, %v4495, %v4496
      %v4498 = vrot.slane %v4167, 1
      %v4499 = vsel %vm604, %v4496, %v4498
      %v4500 = vrot.slane %v4168, 1
      %v4501 = vrot.slane %v4169, 1
      %v4502 = vsel %vm604, %v4500, %v4501
      %v4503 = vrot.slane %v4170, 1
      %v4504 = vsel %vm604, %v4501, %v4503
      %v4505 = vrot.slane %v4171, 1
      %v4506 = vrot.slane %v4172, 1
      %v4507 = vsel %vm604, %v4505, %v4506
      %v4508 = vrot.slane %v4173, 1
      %v4509 = vsel %vm604, %v4506, %v4508
      %v4526 = vrot.slane %v4150, 2
      %v4527 = vrot.slane %v4151, 2
      %v4528 = vsel %vm745, %v4526, %v4527
      %v4529 = vrot.slane %v4152, 2
      %v4530 = vsel %vm745, %v4527, %v4529
      %v4531 = vrot.slane %v4153, 2
      %v4532 = vrot.slane %v4154, 2
      %v4533 = vsel %vm745, %v4531, %v4532
      %v4534 = vrot.slane %v4155, 2
      %v4535 = vsel %vm745, %v4532, %v4534
      %v4536 = vrot.slane %v4156, 2
      %v4537 = vrot.slane %v4157, 2
      %v4538 = vsel %vm745, %v4536, %v4537
      %v4539 = vrot.slane %v4158, 2
      %v4540 = vsel %vm745, %v4537, %v4539
      %v4541 = vrot.slane %v4159, 2
      %v4542 = vrot.slane %v4160, 2
      %v4543 = vsel %vm745, %v4541, %v4542
      %v4544 = vrot.slane %v4161, 2
      %v4545 = vsel %vm745, %v4542, %v4544
      %v4546 = vrot.slane %v4162, 2
      %v4547 = vrot.slane %v4163, 2
      %v4548 = vsel %vm745, %v4546, %v4547
      %v4549 = vrot.slane %v4164, 2
      %v4550 = vsel %vm745, %v4547, %v4549
      %v4551 = vrot.slane %v4165, 2
      %v4552 = vrot.slane %v4166, 2
      %v4553 = vsel %vm745, %v4551, %v4552
      %v4554 = vrot.slane %v4167, 2
      %v4555 = vsel %vm745, %v4552, %v4554
      %v4556 = vrot.slane %v4168, 2
      %v4557 = vrot.slane %v4169, 2
      %v4558 = vsel %vm745, %v4556, %v4557
      %v4559 = vrot.slane %v4170, 2
      %v4560 = vsel %vm745, %v4557, %v4559
      %v4561 = vrot.slane %v4171, 2
      %v4562 = vrot.slane %v4172, 2
      %v4563 = vsel %vm745, %v4561, %v4562
      %v4564 = vrot.slane %v4173, 2
      %v4565 = vsel %vm745, %v4562, %v4564
      %v4582 = vpack.c.bf16 %v4101, %v4100
      %v4583 = vpack.c.bf16 %v4202, %v4200
      %v4584 = vpack.c.bf16 %v4258, %v4256
      %v4585 = vpack.c.bf16 %v4126, %v4125
      %v4586 = vpack.c.bf16 %v4338, %v4336
      %v4587 = vpack.c.bf16 %v4394, %v4392
      %v4588 = vpack.c.bf16 %v4151, %v4150
      %v4589 = vpack.c.bf16 %v4474, %v4472
      %v4590 = vpack.c.bf16 %v4530, %v4528
      %v4591 = vpack.c.bf16 %v4104, %v4103
      %v4592 = vpack.c.bf16 %v4207, %v4205
      %v4593 = vpack.c.bf16 %v4263, %v4261
      %v4594 = vpack.c.bf16 %v4129, %v4128
      %v4595 = vpack.c.bf16 %v4343, %v4341
      %v4596 = vpack.c.bf16 %v4399, %v4397
      %v4597 = vpack.c.bf16 %v4154, %v4153
      %v4598 = vpack.c.bf16 %v4479, %v4477
      %v4599 = vpack.c.bf16 %v4535, %v4533
      %v4600 = vpack.c.bf16 %v4107, %v4106
      %v4601 = vpack.c.bf16 %v4212, %v4210
      %v4602 = vpack.c.bf16 %v4268, %v4266
      %v4603 = vpack.c.bf16 %v4132, %v4131
      %v4604 = vpack.c.bf16 %v4348, %v4346
      %v4605 = vpack.c.bf16 %v4404, %v4402
      %v4606 = vpack.c.bf16 %v4157, %v4156
      %v4607 = vpack.c.bf16 %v4484, %v4482
      %v4608 = vpack.c.bf16 %v4540, %v4538
      %v4609 = vpack.c.bf16 %v4110, %v4109
      %v4610 = vpack.c.bf16 %v4217, %v4215
      %v4611 = vpack.c.bf16 %v4273, %v4271
      %v4612 = vpack.c.bf16 %v4135, %v4134
      %v4613 = vpack.c.bf16 %v4353, %v4351
      %v4614 = vpack.c.bf16 %v4409, %v4407
      %v4615 = vpack.c.bf16 %v4160, %v4159
      %v4616 = vpack.c.bf16 %v4489, %v4487
      %v4617 = vpack.c.bf16 %v4545, %v4543
      %v4618 = vpack.c.bf16 %v4113, %v4112
      %v4619 = vpack.c.bf16 %v4222, %v4220
      %v4620 = vpack.c.bf16 %v4278, %v4276
      %v4621 = vpack.c.bf16 %v4138, %v4137
      %v4622 = vpack.c.bf16 %v4358, %v4356
      %v4623 = vpack.c.bf16 %v4414, %v4412
      %v4624 = vpack.c.bf16 %v4163, %v4162
      %v4625 = vpack.c.bf16 %v4494, %v4492
      %v4626 = vpack.c.bf16 %v4550, %v4548
      %v4627 = vpack.c.bf16 %v4116, %v4115
      %v4628 = vpack.c.bf16 %v4227, %v4225
      %v4629 = vpack.c.bf16 %v4283, %v4281
      %v4630 = vpack.c.bf16 %v4141, %v4140
      %v4631 = vpack.c.bf16 %v4363, %v4361
      %v4632 = vpack.c.bf16 %v4419, %v4417
      %v4633 = vpack.c.bf16 %v4166, %v4165
      %v4634 = vpack.c.bf16 %v4499, %v4497
      %v4635 = vpack.c.bf16 %v4555, %v4553
      %v4636 = vpack.c.bf16 %v4119, %v4118
      %v4637 = vpack.c.bf16 %v4232, %v4230
      %v4638 = vpack.c.bf16 %v4288, %v4286
      %v4639 = vpack.c.bf16 %v4144, %v4143
      %v4640 = vpack.c.bf16 %v4368, %v4366
      %v4641 = vpack.c.bf16 %v4424, %v4422
      %v4642 = vpack.c.bf16 %v4169, %v4168
      %v4643 = vpack.c.bf16 %v4504, %v4502
      %v4644 = vpack.c.bf16 %v4560, %v4558
      %v4645 = vpack.c.bf16 %v4122, %v4121
      %v4646 = vpack.c.bf16 %v4237, %v4235
      %v4647 = vpack.c.bf16 %v4293, %v4291
      %v4648 = vpack.c.bf16 %v4147, %v4146
      %v4649 = vpack.c.bf16 %v4373, %v4371
      %v4650 = vpack.c.bf16 %v4429, %v4427
      %v4651 = vpack.c.bf16 %v4172, %v4171
      %v4652 = vpack.c.bf16 %v4509, %v4507
      %v4653 = vpack.c.bf16 %v4565, %v4563
      %v4654 = vld [vmem:[%s3] sm:$0xf]
      %v4655 = vld [vmem:[%s3 + $0x4] sm:$0xf]
      %v4656 = vld [vmem:[%s3 + $0x8] sm:$0xf]
      %v4657 = vld [vmem:[%s3 + $0xc] sm:$0xf]
      %v4658 = vld [vmem:[%s3 + $0x10] sm:$0xf]
      %v4659 = vld [vmem:[%s3 + $0x14] sm:$0xf]
      %v4660 = vld [vmem:[%s3 + $0x18] sm:$0xf]
      %v4661 = vld [vmem:[%s3 + $0x1c] sm:$0xf]
      %v4662 = vld [vmem:[%s3 + $0x20] sm:$0xf]
      %v4663 = vld [vmem:[%s3 + $0x24] sm:$0xf]
      %v4664 = vld [vmem:[%s3 + $0x28] sm:$0xf]
      %v4665 = vld [vmem:[%s3 + $0x2c] sm:$0xf]
      %v4666 = vld [vmem:[%s3 + $0x30] sm:$0xf]
      %v4667 = vld [vmem:[%s3 + $0x34] sm:$0xf]
      %v4668 = vld [vmem:[%s3 + $0x38] sm:$0xf]
      %v4669 = vld [vmem:[%s3 + $0x3c] sm:$0xf]
      %v4670 = vld [vmem:[%s3 + $0x40] sm:$0xf]
      %v4671 = vld [vmem:[%s3 + $0x44] sm:$0xf]
      %v4672 = vld [vmem:[%s3 + $0x48] sm:$0xf]
      %v4673 = vld [vmem:[%s3 + $0x4c] sm:$0xf]
      %v4674 = vld [vmem:[%s3 + $0x50] sm:$0xf]
      %v4675 = vld [vmem:[%s3 + $0x54] sm:$0xf]
      %v4676 = vld [vmem:[%s3 + $0x58] sm:$0xf]
      %v4677 = vld [vmem:[%s3 + $0x5c] sm:$0xf]
      %v4678 = vld [vmem:[%s3 + $0x60] sm:$0xf]
      %v4679 = vld [vmem:[%s3 + $0x64] sm:$0xf]
      %v4680 = vld [vmem:[%s3 + $0x68] sm:$0xf]
      %v4681 = vld [vmem:[%s3 + $0x6c] sm:$0xf]
      %v4682 = vld [vmem:[%s3 + $0x70] sm:$0xf]
      %v4683 = vld [vmem:[%s3 + $0x74] sm:$0xf]
      %v4684 = vld [vmem:[%s3 + $0x78] sm:$0xf]
      %v4685 = vld [vmem:[%s3 + $0x7c] sm:$0xf]
      %v4686 = vld [vmem:[%s3 + $0x80] sm:$0xf]
      %v4687 = vld [vmem:[%s3 + $0x84] sm:$0xf]
      %v4688 = vld [vmem:[%s3 + $0x88] sm:$0xf]
      %v4689 = vld [vmem:[%s3 + $0x8c] sm:$0xf]
      %v4690 = vld [vmem:[%s3 + $0x90] sm:$0xf]
      %v4691 = vld [vmem:[%s3 + $0x94] sm:$0xf]
      %v4692 = vld [vmem:[%s3 + $0x98] sm:$0xf]
      %v4693 = vld [vmem:[%s3 + $0x9c] sm:$0xf]
      %v4694 = vld [vmem:[%s3 + $0xa0] sm:$0xf]
      %v4695 = vld [vmem:[%s3 + $0xa4] sm:$0xf]
      %v4696 = vld [vmem:[%s3 + $0xa8] sm:$0xf]
      %v4697 = vld [vmem:[%s3 + $0xac] sm:$0xf]
      %v4698 = vld [vmem:[%s3 + $0xb0] sm:$0xf]
      %v4699 = vld [vmem:[%s3 + $0xb4] sm:$0xf]
      %v4700 = vld [vmem:[%s3 + $0xb8] sm:$0xf]
      %v4701 = vld [vmem:[%s3 + $0xbc] sm:$0xf]
      %v4702 = vld [vmem:[%s3 + $0xc0] sm:$0xf]
      %v4703 = vld [vmem:[%s3 + $0xc4] sm:$0xf]
      %v4704 = vld [vmem:[%s3 + $0xc8] sm:$0xf]
      %v4705 = vld [vmem:[%s3 + $0xcc] sm:$0xf]
      %v4706 = vld [vmem:[%s3 + $0xd0] sm:$0xf]
      %v4707 = vld [vmem:[%s3 + $0xd4] sm:$0xf]
      %v4708 = vld [vmem:[%s3 + $0xd8] sm:$0xf]
      %v4709 = vld [vmem:[%s3 + $0xdc] sm:$0xf]
      %v4710 = vld [vmem:[%s3 + $0xe0] sm:$0xf]
      %v4711 = vld [vmem:[%s3 + $0xe4] sm:$0xf]
      %v4712 = vld [vmem:[%s3 + $0xe8] sm:$0xf]
      %v4713 = vld [vmem:[%s3 + $0xec] sm:$0xf]
      %v4714 = vld [vmem:[%s3 + $0xf0] sm:$0xf]
      %v4715 = vld [vmem:[%s3 + $0xf4] sm:$0xf]
      %v4716 = vld [vmem:[%s3 + $0xf8] sm:$0xf]
      %v4717 = vld [vmem:[%s3 + $0xfc] sm:$0xf]
      %v4718 = vld [vmem:[%s3 + $0x100] sm:$0xf]
      %v4719 = vld [vmem:[%s3 + $0x104] sm:$0xf]
      %v4720 = vld [vmem:[%s3 + $0x108] sm:$0xf]
      %v4721 = vld [vmem:[%s3 + $0x10c] sm:$0xf]
      %v4722 = vld [vmem:[%s3 + $0x110] sm:$0xf]
      %v4723 = vld [vmem:[%s3 + $0x114] sm:$0xf]
      %v4724 = vld [vmem:[%s3 + $0x118] sm:$0xf]
      %v4725 = vld [vmem:[%s3 + $0x11c] sm:$0xf]
      %v4726 = vld [vmem:[%s3 + $0x120] sm:$0xf]
      %v4727 = vld [vmem:[%s3 + $0x124] sm:$0xf]
      %v4728 = vld [vmem:[%s3 + $0x128] sm:$0xf]
      %v4729 = vld [vmem:[%s3 + $0x12c] sm:$0xf]
      %v4730 = vld [vmem:[%s3 + $0x130] sm:$0xf]
      %v4731 = vld [vmem:[%s3 + $0x134] sm:$0xf]
      %v4732 = vld [vmem:[%s3 + $0x138] sm:$0xf]
      %v4733 = vld [vmem:[%s3 + $0x13c] sm:$0xf]
      %v4734 = vld [vmem:[%s3 + $0x140] sm:$0xf]
      %v4735 = vld [vmem:[%s3 + $0x144] sm:$0xf]
      %v4736 = vld [vmem:[%s3 + $0x148] sm:$0xf]
      %v4737 = vld [vmem:[%s3 + $0x14c] sm:$0xf]
      %v4738 = vld [vmem:[%s3 + $0x150] sm:$0xf]
      %v4739 = vld [vmem:[%s3 + $0x154] sm:$0xf]
      %v4740 = vld [vmem:[%s3 + $0x158] sm:$0xf]
      %v4741 = vld [vmem:[%s3 + $0x15c] sm:$0xf]
      %v4742 = vld [vmem:[%s3 + $0x160] sm:$0xf]
      %v4743 = vld [vmem:[%s3 + $0x164] sm:$0xf]
      %v4744 = vld [vmem:[%s3 + $0x168] sm:$0xf]
      %v4745 = vld [vmem:[%s3 + $0x16c] sm:$0xf]
      %v4746 = vld [vmem:[%s3 + $0x170] sm:$0xf]
      %v4747 = vld [vmem:[%s3 + $0x174] sm:$0xf]
      %v4748 = vld [vmem:[%s3 + $0x178] sm:$0xf]
      %v4749 = vld [vmem:[%s3 + $0x17c] sm:$0xf]
      %v4750 = vld [vmem:[%s3 + $0x180] sm:$0xf]
      %v4751 = vld [vmem:[%s3 + $0x184] sm:$0xf]
      %v4752 = vld [vmem:[%s3 + $0x188] sm:$0xf]
      %v4753 = vld [vmem:[%s3 + $0x18c] sm:$0xf]
      %v4754 = vld [vmem:[%s3 + $0x190] sm:$0xf]
      %v4755 = vld [vmem:[%s3 + $0x194] sm:$0xf]
      %v4756 = vld [vmem:[%s3 + $0x198] sm:$0xf]
      %v4757 = vld [vmem:[%s3 + $0x19c] sm:$0xf]
      %v4758 = vld [vmem:[%s3 + $0x1a0] sm:$0xf]
      %v4759 = vld [vmem:[%s3 + $0x1a4] sm:$0xf]
      %v4760 = vld [vmem:[%s3 + $0x1a8] sm:$0xf]
      %v4761 = vld [vmem:[%s3 + $0x1ac] sm:$0xf]
      %v4762 = vld [vmem:[%s3 + $0x1b0] sm:$0xf]
      %v4763 = vld [vmem:[%s3 + $0x1b4] sm:$0xf]
      %v4764 = vld [vmem:[%s3 + $0x1b8] sm:$0xf]
      %v4765 = vld [vmem:[%s3 + $0x1bc] sm:$0xf]
      %v4766 = vld [vmem:[%s3 + $0x1c0] sm:$0xf]
      %v4767 = vld [vmem:[%s3 + $0x1c4] sm:$0xf]
      %v4768 = vld [vmem:[%s3 + $0x1c8] sm:$0xf]
      %v4769 = vld [vmem:[%s3 + $0x1cc] sm:$0xf]
      %v4770 = vld [vmem:[%s3 + $0x1d0] sm:$0xf]
      %v4771 = vld [vmem:[%s3 + $0x1d4] sm:$0xf]
      %v4772 = vld [vmem:[%s3 + $0x1d8] sm:$0xf]
      %v4773 = vld [vmem:[%s3 + $0x1dc] sm:$0xf]
      %v4774 = vld [vmem:[%s3 + $0x1e0] sm:$0xf]
      %v4775 = vld [vmem:[%s3 + $0x1e4] sm:$0xf]
      %v4776 = vld [vmem:[%s3 + $0x1e8] sm:$0xf]
      %v4777 = vld [vmem:[%s3 + $0x1ec] sm:$0xf]
      %v4778 = vld [vmem:[%s3 + $0x1f0] sm:$0xf]
      %v4779 = vld [vmem:[%s3 + $0x1f4] sm:$0xf]
      %v4780 = vld [vmem:[%s3 + $0x1f8] sm:$0xf]
      %v4781 = vld [vmem:[%s3 + $0x1fc] sm:$0xf]
      %v4782 = vld [vmem:[%s3 + $0x200] sm:$0xf]
      %v4783 = vld [vmem:[%s3 + $0x204] sm:$0xf]
      %v4784 = vld [vmem:[%s3 + $0x208] sm:$0xf]
      %v4785 = vld [vmem:[%s3 + $0x20c] sm:$0xf]
      %v4786 = vld [vmem:[%s3 + $0x210] sm:$0xf]
      %v4787 = vld [vmem:[%s3 + $0x214] sm:$0xf]
      %v4788 = vld [vmem:[%s3 + $0x218] sm:$0xf]
      %v4789 = vld [vmem:[%s3 + $0x21c] sm:$0xf]
      %v4790 = vld [vmem:[%s3 + $0x220] sm:$0xf]
      %v4791 = vld [vmem:[%s3 + $0x224] sm:$0xf]
      %v4792 = vld [vmem:[%s3 + $0x228] sm:$0xf]
      %v4793 = vld [vmem:[%s3 + $0x22c] sm:$0xf]
      %v4794 = vld [vmem:[%s3 + $0x230] sm:$0xf]
      %v4795 = vld [vmem:[%s3 + $0x234] sm:$0xf]
      %v4796 = vld [vmem:[%s3 + $0x238] sm:$0xf]
      %v4797 = vld [vmem:[%s3 + $0x23c] sm:$0xf]
      %v4942 = vunpack.c.l.b16 %v4654
      %v4943 = vunpack.c.l.b16 %v4655
      %v4944 = vunpack.c.l.b16 %v4656
      %v4945 = vunpack.c.l.b16 %v4657
      %v4946 = vunpack.c.l.b16 %v4658
      %v4947 = vunpack.c.l.b16 %v4659
      %v4948 = vunpack.c.l.b16 %v4660
      %v4949 = vunpack.c.l.b16 %v4661
      %v4950 = vunpack.c.l.b16 %v4662
      %v4951 = vunpack.c.l.b16 %v4663
      %v4952 = vunpack.c.l.b16 %v4664
      %v4953 = vunpack.c.l.b16 %v4665
      %v4954 = vunpack.c.l.b16 %v4666
      %v4955 = vunpack.c.l.b16 %v4667
      %v4956 = vunpack.c.l.b16 %v4668
      %v4957 = vunpack.c.l.b16 %v4669
      %v4958 = vunpack.c.l.b16 %v4670
      %v4959 = vunpack.c.l.b16 %v4671
      %v4960 = vunpack.c.l.b16 %v4672
      %v4961 = vunpack.c.l.b16 %v4673
      %v4962 = vunpack.c.l.b16 %v4674
      %v4963 = vunpack.c.l.b16 %v4675
      %v4964 = vunpack.c.l.b16 %v4676
      %v4965 = vunpack.c.l.b16 %v4677
      %v4966 = vunpack.c.l.b16 %v4678
      %v4967 = vunpack.c.l.b16 %v4679
      %v4968 = vunpack.c.l.b16 %v4680
      %v4969 = vunpack.c.l.b16 %v4681
      %v4970 = vunpack.c.l.b16 %v4682
      %v4971 = vunpack.c.l.b16 %v4683
      %v4972 = vunpack.c.l.b16 %v4684
      %v4973 = vunpack.c.l.b16 %v4685
      %v4974 = vunpack.c.l.b16 %v4686
      %v4975 = vunpack.c.l.b16 %v4687
      %v4976 = vunpack.c.l.b16 %v4688
      %v4977 = vunpack.c.l.b16 %v4689
      %v4978 = vunpack.c.l.b16 %v4690
      %v4979 = vunpack.c.l.b16 %v4691
      %v4980 = vunpack.c.l.b16 %v4692
      %v4981 = vunpack.c.l.b16 %v4693
      %v4982 = vunpack.c.l.b16 %v4694
      %v4983 = vunpack.c.l.b16 %v4695
      %v4984 = vunpack.c.l.b16 %v4696
      %v4985 = vunpack.c.l.b16 %v4697
      %v4986 = vunpack.c.l.b16 %v4698
      %v4987 = vunpack.c.l.b16 %v4699
      %v4988 = vunpack.c.l.b16 %v4700
      %v4989 = vunpack.c.l.b16 %v4701
      %v4990 = vunpack.c.l.b16 %v4702
      %v4991 = vunpack.c.l.b16 %v4703
      %v4992 = vunpack.c.l.b16 %v4704
      %v4993 = vunpack.c.l.b16 %v4705
      %v4994 = vunpack.c.l.b16 %v4706
      %v4995 = vunpack.c.l.b16 %v4707
      %v4996 = vunpack.c.l.b16 %v4708
      %v4997 = vunpack.c.l.b16 %v4709
      %v4998 = vunpack.c.l.b16 %v4710
      %v4999 = vunpack.c.l.b16 %v4711
      %v5000 = vunpack.c.l.b16 %v4712
      %v5001 = vunpack.c.l.b16 %v4713
      %v5002 = vunpack.c.l.b16 %v4714
      %v5003 = vunpack.c.l.b16 %v4715
      %v5004 = vunpack.c.l.b16 %v4716
      %v5005 = vunpack.c.l.b16 %v4717
      %v5006 = vunpack.c.l.b16 %v4718
      %v5007 = vunpack.c.l.b16 %v4719
      %v5008 = vunpack.c.l.b16 %v4720
      %v5009 = vunpack.c.l.b16 %v4721
      %v5010 = vunpack.c.l.b16 %v4722
      %v5011 = vunpack.c.l.b16 %v4723
      %v5012 = vunpack.c.l.b16 %v4724
      %v5013 = vunpack.c.l.b16 %v4725
      %v5014 = vunpack.c.l.b16 %v4726
      %v5015 = vunpack.c.l.b16 %v4727
      %v5016 = vunpack.c.l.b16 %v4728
      %v5017 = vunpack.c.l.b16 %v4729
      %v5018 = vunpack.c.l.b16 %v4730
      %v5019 = vunpack.c.l.b16 %v4731
      %v5020 = vunpack.c.l.b16 %v4732
      %v5021 = vunpack.c.l.b16 %v4733
      %v5022 = vunpack.c.l.b16 %v4734
      %v5023 = vunpack.c.l.b16 %v4735
      %v5024 = vunpack.c.l.b16 %v4736
      %v5025 = vunpack.c.l.b16 %v4737
      %v5026 = vunpack.c.l.b16 %v4738
      %v5027 = vunpack.c.l.b16 %v4739
      %v5028 = vunpack.c.l.b16 %v4740
      %v5029 = vunpack.c.l.b16 %v4741
      %v5030 = vunpack.c.l.b16 %v4742
      %v5031 = vunpack.c.l.b16 %v4743
      %v5032 = vunpack.c.l.b16 %v4744
      %v5033 = vunpack.c.l.b16 %v4745
      %v5034 = vunpack.c.l.b16 %v4746
      %v5035 = vunpack.c.l.b16 %v4747
      %v5036 = vunpack.c.l.b16 %v4748
      %v5037 = vunpack.c.l.b16 %v4749
      %v5038 = vunpack.c.l.b16 %v4750
      %v5039 = vunpack.c.l.b16 %v4751
      %v5040 = vunpack.c.l.b16 %v4752
      %v5041 = vunpack.c.l.b16 %v4753
      %v5042 = vunpack.c.l.b16 %v4754
      %v5043 = vunpack.c.l.b16 %v4755
      %v5044 = vunpack.c.l.b16 %v4756
      %v5045 = vunpack.c.l.b16 %v4757
      %v5046 = vunpack.c.l.b16 %v4758
      %v5047 = vunpack.c.l.b16 %v4759
      %v5048 = vunpack.c.l.b16 %v4760
      %v5049 = vunpack.c.l.b16 %v4761
      %v5050 = vunpack.c.l.b16 %v4762
      %v5051 = vunpack.c.l.b16 %v4763
      %v5052 = vunpack.c.l.b16 %v4764
      %v5053 = vunpack.c.l.b16 %v4765
      %v5054 = vunpack.c.l.b16 %v4766
      %v5055 = vunpack.c.l.b16 %v4767
      %v5056 = vunpack.c.l.b16 %v4768
      %v5057 = vunpack.c.l.b16 %v4769
      %v5058 = vunpack.c.l.b16 %v4770
      %v5059 = vunpack.c.l.b16 %v4771
      %v5060 = vunpack.c.l.b16 %v4772
      %v5061 = vunpack.c.l.b16 %v4773
      %v5062 = vunpack.c.l.b16 %v4774
      %v5063 = vunpack.c.l.b16 %v4775
      %v5064 = vunpack.c.l.b16 %v4776
      %v5065 = vunpack.c.l.b16 %v4777
      %v5066 = vunpack.c.l.b16 %v4778
      %v5067 = vunpack.c.l.b16 %v4779
      %v5068 = vunpack.c.l.b16 %v4780
      %v5069 = vunpack.c.l.b16 %v4781
      %v5070 = vunpack.c.l.b16 %v4782
      %v5071 = vunpack.c.l.b16 %v4783
      %v5072 = vunpack.c.l.b16 %v4784
      %v5073 = vunpack.c.l.b16 %v4785
      %v5074 = vunpack.c.l.b16 %v4786
      %v5075 = vunpack.c.l.b16 %v4787
      %v5076 = vunpack.c.l.b16 %v4788
      %v5077 = vunpack.c.l.b16 %v4789
      %v5078 = vunpack.c.l.b16 %v4790
      %v5079 = vunpack.c.l.b16 %v4791
      %v5080 = vunpack.c.l.b16 %v4792
      %v5081 = vunpack.c.l.b16 %v4793
      %v5082 = vunpack.c.l.b16 %v4794
      %v5083 = vunpack.c.l.b16 %v4795
      %v5084 = vunpack.c.l.b16 %v4796
      %v5085 = vunpack.c.l.b16 %v4797
      %v5086 = vpack.c.b16 %v4943, %v4942
      %v5087 = vpack.c.b16 %v4945, %v4944
      %v5088 = vpack.c.b16 %v4947, %v4946
      %v5089 = vpack.c.b16 %v4949, %v4948
      %v5090 = vpack.c.b16 %v4951, %v4950
      %v5091 = vpack.c.b16 %v4953, %v4952
      %v5092 = vpack.c.b16 %v4955, %v4954
      %v5093 = vpack.c.b16 %v4957, %v4956
      %v5094 = vpack.c.b16 %v4959, %v4958
      %v5095 = vpack.c.b16 %v4961, %v4960
      %v5096 = vpack.c.b16 %v4963, %v4962
      %v5097 = vpack.c.b16 %v4965, %v4964
      %v5098 = vpack.c.b16 %v4967, %v4966
      %v5099 = vpack.c.b16 %v4969, %v4968
      %v5100 = vpack.c.b16 %v4971, %v4970
      %v5101 = vpack.c.b16 %v4973, %v4972
      %v5102 = vpack.c.b16 %v4975, %v4974
      %v5103 = vpack.c.b16 %v4977, %v4976
      %v5104 = vpack.c.b16 %v4979, %v4978
      %v5105 = vpack.c.b16 %v4981, %v4980
      %v5106 = vpack.c.b16 %v4983, %v4982
      %v5107 = vpack.c.b16 %v4985, %v4984
      %v5108 = vpack.c.b16 %v4987, %v4986
      %v5109 = vpack.c.b16 %v4989, %v4988
      %v5110 = vpack.c.b16 %v4991, %v4990
      %v5111 = vpack.c.b16 %v4993, %v4992
      %v5112 = vpack.c.b16 %v4995, %v4994
      %v5113 = vpack.c.b16 %v4997, %v4996
      %v5114 = vpack.c.b16 %v4999, %v4998
      %v5115 = vpack.c.b16 %v5001, %v5000
      %v5116 = vpack.c.b16 %v5003, %v5002
      %v5117 = vpack.c.b16 %v5005, %v5004
      %v5118 = vpack.c.b16 %v5007, %v5006
      %v5119 = vpack.c.b16 %v5009, %v5008
      %v5120 = vpack.c.b16 %v5011, %v5010
      %v5121 = vpack.c.b16 %v5013, %v5012
      %v5122 = vpack.c.b16 %v5015, %v5014
      %v5123 = vpack.c.b16 %v5017, %v5016
      %v5124 = vpack.c.b16 %v5019, %v5018
      %v5125 = vpack.c.b16 %v5021, %v5020
      %v5126 = vpack.c.b16 %v5023, %v5022
      %v5127 = vpack.c.b16 %v5025, %v5024
      %v5128 = vpack.c.b16 %v5027, %v5026
      %v5129 = vpack.c.b16 %v5029, %v5028
      %v5130 = vpack.c.b16 %v5031, %v5030
      %v5131 = vpack.c.b16 %v5033, %v5032
      %v5132 = vpack.c.b16 %v5035, %v5034
      %v5133 = vpack.c.b16 %v5037, %v5036
      %v5134 = vpack.c.b16 %v5039, %v5038
      %v5135 = vpack.c.b16 %v5041, %v5040
      %v5136 = vpack.c.b16 %v5043, %v5042
      %v5137 = vpack.c.b16 %v5045, %v5044
      %v5138 = vpack.c.b16 %v5047, %v5046
      %v5139 = vpack.c.b16 %v5049, %v5048
      %v5140 = vpack.c.b16 %v5051, %v5050
      %v5141 = vpack.c.b16 %v5053, %v5052
      %v5142 = vpack.c.b16 %v5055, %v5054
      %v5143 = vpack.c.b16 %v5057, %v5056
      %v5144 = vpack.c.b16 %v5059, %v5058
      %v5145 = vpack.c.b16 %v5061, %v5060
      %v5146 = vpack.c.b16 %v5063, %v5062
      %v5147 = vpack.c.b16 %v5065, %v5064
      %v5148 = vpack.c.b16 %v5067, %v5066
      %v5149 = vpack.c.b16 %v5069, %v5068
      %v5150 = vpack.c.b16 %v5071, %v5070
      %v5151 = vpack.c.b16 %v5073, %v5072
      %v5152 = vpack.c.b16 %v5075, %v5074
      %v5153 = vpack.c.b16 %v5077, %v5076
      %v5154 = vpack.c.b16 %v5079, %v5078
      %v5155 = vpack.c.b16 %v5081, %v5080
      %v5156 = vpack.c.b16 %v5083, %v5082
      %v5157 = vpack.c.b16 %v5085, %v5084
      %5230 = vmatprep.subr.bf16.mxu0 0
      %5231 = vmatpush1.bf16.msra.mxu0 %v5086
      %5232 = vmatprep.subr.bf16.mxu0 0
      %5233 = vmatpush1.bf16.msra.mxu0 %v5087
      %5234 = vmatprep.subr.bf16.mxu0 0
      %5235 = vmatpush1.bf16.msra.mxu0 %v5088
      %5236 = vmatprep.subr.bf16.mxu0 0
      %5237 = vmatpush1.bf16.msra.mxu0 %v5089
      %5238 = vmatprep.subr.bf16.mxu0 0
      %5239 = vmatpush1.bf16.msra.mxu0 %v5090
      %5240 = vmatprep.subr.bf16.mxu0 0
      %5241 = vmatpush1.bf16.msra.mxu0 %v5091
      %5242 = vmatprep.subr.bf16.mxu0 0
      %5243 = vmatpush1.bf16.msra.mxu0 %v5092
      %5244 = vmatprep.subr.bf16.mxu0 0
      %5245 = vmatpush1.bf16.msra.mxu0 %v5093
      %5246 = vmatprep.subr.bf16.mxu0 0
      %5247 = vmatpush1.bf16.msra.mxu0 %v5094
      %5248 = vmatprep.subr.bf16.mxu0 0
      %5249 = vmatpush1.bf16.msra.mxu0 %v5095
      %5250 = vmatprep.subr.bf16.mxu0 0
      %5251 = vmatpush1.bf16.msra.mxu0 %v5096
      %5252 = vmatprep.subr.bf16.mxu0 0
      %5253 = vmatpush1.bf16.msra.mxu0 %v5097
      %5254 = vmatprep.subr.bf16.mxu0 0
      %5255 = vmatpush1.bf16.msra.mxu0 %v5098
      %5256 = vmatprep.subr.bf16.mxu0 0
      %5257 = vmatpush1.bf16.msra.mxu0 %v5099
      %5258 = vmatprep.subr.bf16.mxu0 0
      %5259 = vmatpush1.bf16.msra.mxu0 %v5100
      %5260 = vmatprep.subr.bf16.mxu0 0
      %5261 = vmatpush1.bf16.msra.mxu0 %v5101
      %5262 = vmatprep.mubr.bf16.mxu0 %v4583
      %5263 = vmatmul.mubr.bf16.gmra.mrb[0].mxu0 %v4582
      %v5264 = vpop.f32.mrb[0].mxu0
      %v5265 = vadd.f32 0.0, %v5264
      %v5266 = vpop.f32.mrb[0].mxu0
      %v5267 = vpop.f32.mrb[0].mxu0
      %v5268 = vadd.f32 0.0, %v5267
      %v5269 = vpop.f32.mrb[0].mxu0
      %5270 = vmatprep.mubr.bf16.mxu0 %v4592
      %5271 = vmatmul.mubr.bf16.gmra.mrb[0].mxu0 %v4591
      %v5272 = vpop.f32.mrb[0].mxu0
      %v5273 = vadd.f32 0.0, %v5272
      %v5274 = vpop.f32.mrb[0].mxu0
      %v5275 = vpop.f32.mrb[0].mxu0
      %v5276 = vadd.f32 0.0, %v5275
      %v5277 = vpop.f32.mrb[0].mxu0
      %5278 = vmatprep.mubr.bf16.mxu0 %v4601
      %5279 = vmatmul.mubr.bf16.gmra.mrb[0].mxu0 %v4600
      %v5280 = vpop.f32.mrb[0].mxu0
      %v5281 = vadd.f32 0.0, %v5280
      %v5282 = vpop.f32.mrb[0].mxu0
      %v5283 = vpop.f32.mrb[0].mxu0
      %v5284 = vadd.f32 0.0, %v5283
      %v5285 = vpop.f32.mrb[0].mxu0
      %5286 = vmatprep.mubr.bf16.mxu0 %v4610
      %5287 = vmatmul.mubr.bf16.gmra.mrb[0].mxu0 %v4609
      %v5288 = vpop.f32.mrb[0].mxu0
      %v5289 = vadd.f32 0.0, %v5288
      %v5290 = vpop.f32.mrb[0].mxu0
      %v5291 = vpop.f32.mrb[0].mxu0
      %v5292 = vadd.f32 0.0, %v5291
      %v5293 = vpop.f32.mrb[0].mxu0
      %5294 = vmatprep.mubr.bf16.mxu0 %v4619
      %5295 = vmatmul.mubr.bf16.gmra.mrb[0].mxu0 %v4618
      %v5296 = vpop.f32.mrb[0].mxu0
      %v5297 = vadd.f32 0.0, %v5296
      %v5298 = vpop.f32.mrb[0].mxu0
      %v5299 = vpop.f32.mrb[0].mxu0
      %v5300 = vadd.f32 0.0, %v5299
      %v5301 = vpop.f32.mrb[0].mxu0
      %5302 = vmatprep.mubr.bf16.mxu0 %v4628
      %5303 = vmatmul.mubr.bf16.gmra.mrb[0].mxu0 %v4627
      %v5304 = vpop.f32.mrb[0].mxu0
      %v5305 = vadd.f32 0.0, %v5304
      %v5306 = vpop.f32.mrb[0].mxu0
      %v5307 = vpop.f32.mrb[0].mxu0
      %v5308 = vadd.f32 0.0, %v5307
      %v5309 = vpop.f32.mrb[0].mxu0
      %5310 = vmatprep.mubr.bf16.mxu0 %v4637
      %5311 = vmatmul.mubr.bf16.gmra.mrb[0].mxu0 %v4636
      %v5312 = vpop.f32.mrb[0].mxu0
      %v5313 = vadd.f32 0.0, %v5312
      %v5314 = vpop.f32.mrb[0].mxu0
      %v5315 = vpop.f32.mrb[0].mxu0
      %v5316 = vadd.f32 0.0, %v5315
      %v5317 = vpop.f32.mrb[0].mxu0
      %5318 = vmatprep.mubr.bf16.mxu0 %v4646
      %5319 = vmatmul.mubr.bf16.gmra.mrb[0].mxu0 %v4645
      %v5320 = vpop.f32.mrb[0].mxu0
      %v5321 = vadd.f32 0.0, %v5320
      %v5322 = vpop.f32.mrb[0].mxu0
      %v5323 = vpop.f32.mrb[0].mxu0
      %v5324 = vadd.f32 0.0, %v5323
      %v5325 = vpop.f32.mrb[0].mxu0
      %5326 = vdwg.mxu0
      %5327 = vmatprep.subr.bf16.mxu0 0
      %5328 = vmatpush1.bf16.msra.mxu0 %v5102
      %5329 = vmatprep.subr.bf16.mxu0 0
      %5330 = vmatpush1.bf16.msra.mxu0 %v5103
      %5331 = vmatprep.subr.bf16.mxu0 0
      %5332 = vmatpush1.bf16.msra.mxu0 %v5104
      %5333 = vmatprep.subr.bf16.mxu0 0
      %5334 = vmatpush1.bf16.msra.mxu0 %v5105
      %5335 = vmatprep.subr.bf16.mxu0 0
      %5336 = vmatpush1.bf16.msra.mxu0 %v5106
      %5337 = vmatprep.subr.bf16.mxu0 0
      %5338 = vmatpush1.bf16.msra.mxu0 %v5107
      %5339 = vmatprep.subr.bf16.mxu0 0
      %5340 = vmatpush1.bf16.msra.mxu0 %v5108
      %5341 = vmatprep.subr.bf16.mxu0 0
      %5342 = vmatpush1.bf16.msra.mxu0 %v5109
      %5343 = vmatprep.subr.bf16.mxu0 0
      %5344 = vmatpush1.bf16.msra.mxu0 %v5110
      %5345 = vmatprep.subr.bf16.mxu0 0
      %5346 = vmatpush1.bf16.msra.mxu0 %v5111
      %5347 = vmatprep.subr.bf16.mxu0 0
      %5348 = vmatpush1.bf16.msra.mxu0 %v5112
      %5349 = vmatprep.subr.bf16.mxu0 0
      %5350 = vmatpush1.bf16.msra.mxu0 %v5113
      %5351 = vmatprep.subr.bf16.mxu0 0
      %5352 = vmatpush1.bf16.msra.mxu0 %v5114
      %5353 = vmatprep.subr.bf16.mxu0 0
      %5354 = vmatpush1.bf16.msra.mxu0 %v5115
      %5355 = vmatprep.subr.bf16.mxu0 0
      %5356 = vmatpush1.bf16.msra.mxu0 %v5116
      %5357 = vmatprep.subr.bf16.mxu0 0
      %5358 = vmatpush1.bf16.msra.mxu0 %v5117
      %5359 = vmatprep.mubr.bf16.mxu0 %v4585
      %5360 = vmatmul.mubr.bf16.gmra.mrb[0].mxu0 %v4584
      %v5361 = vpop.f32.mrb[0].mxu0
      %v5362 = vadd.f32 %v5265, %v5361
      %v5363 = vpop.f32.mrb[0].mxu0
      %v5364 = vpop.f32.mrb[0].mxu0
      %v5365 = vadd.f32 %v5268, %v5364
      %v5366 = vpop.f32.mrb[0].mxu0
      %5367 = vmatprep.mubr.bf16.mxu0 %v4594
      %5368 = vmatmul.mubr.bf16.gmra.mrb[0].mxu0 %v4593
      %v5369 = vpop.f32.mrb[0].mxu0
      %v5370 = vadd.f32 %v5273, %v5369
      %v5371 = vpop.f32.mrb[0].mxu0
      %v5372 = vpop.f32.mrb[0].mxu0
      %v5373 = vadd.f32 %v5276, %v5372
      %v5374 = vpop.f32.mrb[0].mxu0
      %5375 = vmatprep.mubr.bf16.mxu0 %v4603
      %5376 = vmatmul.mubr.bf16.gmra.mrb[0].mxu0 %v4602
      %v5377 = vpop.f32.mrb[0].mxu0
      %v5378 = vadd.f32 %v5281, %v5377
      %v5379 = vpop.f32.mrb[0].mxu0
      %v5380 = vpop.f32.mrb[0].mxu0
      %v5381 = vadd.f32 %v5284, %v5380
      %v5382 = vpop.f32.mrb[0].mxu0
      %5383 = vmatprep.mubr.bf16.mxu0 %v4612
      %5384 = vmatmul.mubr.bf16.gmra.mrb[0].mxu0 %v4611
      %v5385 = vpop.f32.mrb[0].mxu0
      %v5386 = vadd.f32 %v5289, %v5385
      %v5387 = vpop.f32.mrb[0].mxu0
      %v5388 = vpop.f32.mrb[0].mxu0
      %v5389 = vadd.f32 %v5292, %v5388
      %v5390 = vpop.f32.mrb[0].mxu0
      %5391 = vmatprep.mubr.bf16.mxu0 %v4621
      %5392 = vmatmul.mubr.bf16.gmra.mrb[0].mxu0 %v4620
      %v5393 = vpop.f32.mrb[0].mxu0
      %v5394 = vadd.f32 %v5297, %v5393
      %v5395 = vpop.f32.mrb[0].mxu0
      %v5396 = vpop.f32.mrb[0].mxu0
      %v5397 = vadd.f32 %v5300, %v5396
      %v5398 = vpop.f32.mrb[0].mxu0
      %5399 = vmatprep.mubr.bf16.mxu0 %v4630
      %5400 = vmatmul.mubr.bf16.gmra.mrb[0].mxu0 %v4629
      %v5401 = vpop.f32.mrb[0].mxu0
      %v5402 = vadd.f32 %v5305, %v5401
      %v5403 = vpop.f32.mrb[0].mxu0
      %v5404 = vpop.f32.mrb[0].mxu0
      %v5405 = vadd.f32 %v5308, %v5404
      %v5406 = vpop.f32.mrb[0].mxu0
      %5407 = vmatprep.mubr.bf16.mxu0 %v4639
      %5408 = vmatmul.mubr.bf16.gmra.mrb[0].mxu0 %v4638
      %v5409 = vpop.f32.mrb[0].mxu0
      %v5410 = vadd.f32 %v5313, %v5409
      %v5411 = vpop.f32.mrb[0].mxu0
      %v5412 = vpop.f32.mrb[0].mxu0
      %v5413 = vadd.f32 %v5316, %v5412
      %v5414 = vpop.f32.mrb[0].mxu0
      %5415 = vmatprep.mubr.bf16.mxu0 %v4648
      %5416 = vmatmul.mubr.bf16.gmra.mrb[0].mxu0 %v4647
      %v5417 = vpop.f32.mrb[0].mxu0
      %v5418 = vadd.f32 %v5321, %v5417
      %v5419 = vpop.f32.mrb[0].mxu0
      %v5420 = vpop.f32.mrb[0].mxu0
      %v5421 = vadd.f32 %v5324, %v5420
      %v5422 = vpop.f32.mrb[0].mxu0
      %5423 = vdwg.mxu0
      %5424 = vmatprep.subr.bf16.mxu0 0
      %5425 = vmatpush1.bf16.msra.mxu0 %v5118
      %5426 = vmatprep.subr.bf16.mxu0 0
      %5427 = vmatpush1.bf16.msra.mxu0 %v5119
      %5428 = vmatprep.subr.bf16.mxu0 0
      %5429 = vmatpush1.bf16.msra.mxu0 %v5120
      %5430 = vmatprep.subr.bf16.mxu0 0
      %5431 = vmatpush1.bf16.msra.mxu0 %v5121
      %5432 = vmatprep.subr.bf16.mxu0 0
      %5433 = vmatpush1.bf16.msra.mxu0 %v5122
      %5434 = vmatprep.subr.bf16.mxu0 0
      %5435 = vmatpush1.bf16.msra.mxu0 %v5123
      %5436 = vmatprep.subr.bf16.mxu0 0
      %5437 = vmatpush1.bf16.msra.mxu0 %v5124
      %5438 = vmatprep.subr.bf16.mxu0 0
      %5439 = vmatpush1.bf16.msra.mxu0 %v5125
      %5440 = vmatprep.subr.bf16.mxu0 0
      %5441 = vmatpush1.bf16.msra.mxu0 %v5126
      %5442 = vmatprep.subr.bf16.mxu0 0
      %5443 = vmatpush1.bf16.msra.mxu0 %v5127
      %5444 = vmatprep.subr.bf16.mxu0 0
      %5445 = vmatpush1.bf16.msra.mxu0 %v5128
      %5446 = vmatprep.subr.bf16.mxu0 0
      %5447 = vmatpush1.bf16.msra.mxu0 %v5129
      %5448 = vmatprep.subr.bf16.mxu0 0
      %5449 = vmatpush1.bf16.msra.mxu0 %v5130
      %5450 = vmatprep.subr.bf16.mxu0 0
      %5451 = vmatpush1.bf16.msra.mxu0 %v5131
      %5452 = vmatprep.subr.bf16.mxu0 0
      %5453 = vmatpush1.bf16.msra.mxu0 %v5132
      %5454 = vmatprep.subr.bf16.mxu0 0
      %5455 = vmatpush1.bf16.msra.mxu0 %v5133
      %5456 = vmatprep.mubr.bf16.mxu0 %v4587
      %5457 = vmatmul.mubr.bf16.gmra.mrb[0].mxu0 %v4586
      %v5458 = vpop.f32.mrb[0].mxu0
      %v5459 = vadd.f32 %v5362, %v5458
      %v5460 = vpop.f32.mrb[0].mxu0
      %v5461 = vpop.f32.mrb[0].mxu0
      %v5462 = vadd.f32 %v5365, %v5461
      %v5463 = vpop.f32.mrb[0].mxu0
      %5464 = vmatprep.mubr.bf16.mxu0 %v4596
      %5465 = vmatmul.mubr.bf16.gmra.mrb[0].mxu0 %v4595
      %v5466 = vpop.f32.mrb[0].mxu0
      %v5467 = vadd.f32 %v5370, %v5466
      %v5468 = vpop.f32.mrb[0].mxu0
      %v5469 = vpop.f32.mrb[0].mxu0
      %v5470 = vadd.f32 %v5373, %v5469
      %v5471 = vpop.f32.mrb[0].mxu0
      %5472 = vmatprep.mubr.bf16.mxu0 %v4605
      %5473 = vmatmul.mubr.bf16.gmra.mrb[0].mxu0 %v4604
      %v5474 = vpop.f32.mrb[0].mxu0
      %v5475 = vadd.f32 %v5378, %v5474
      %v5476 = vpop.f32.mrb[0].mxu0
      %v5477 = vpop.f32.mrb[0].mxu0
      %v5478 = vadd.f32 %v5381, %v5477
      %v5479 = vpop.f32.mrb[0].mxu0
      %5480 = vmatprep.mubr.bf16.mxu0 %v4614
      %5481 = vmatmul.mubr.bf16.gmra.mrb[0].mxu0 %v4613
      %v5482 = vpop.f32.mrb[0].mxu0
      %v5483 = vadd.f32 %v5386, %v5482
      %v5484 = vpop.f32.mrb[0].mxu0
      %v5485 = vpop.f32.mrb[0].mxu0
      %v5486 = vadd.f32 %v5389, %v5485
      %v5487 = vpop.f32.mrb[0].mxu0
      %5488 = vmatprep.mubr.bf16.mxu0 %v4623
      %5489 = vmatmul.mubr.bf16.gmra.mrb[0].mxu0 %v4622
      %v5490 = vpop.f32.mrb[0].mxu0
      %v5491 = vadd.f32 %v5394, %v5490
      %v5492 = vpop.f32.mrb[0].mxu0
      %v5493 = vpop.f32.mrb[0].mxu0
      %v5494 = vadd.f32 %v5397, %v5493
      %v5495 = vpop.f32.mrb[0].mxu0
      %5496 = vmatprep.mubr.bf16.mxu0 %v4632
      %5497 = vmatmul.mubr.bf16.gmra.mrb[0].mxu0 %v4631
      %v5498 = vpop.f32.mrb[0].mxu0
      %v5499 = vadd.f32 %v5402, %v5498
      %v5500 = vpop.f32.mrb[0].mxu0
      %v5501 = vpop.f32.mrb[0].mxu0
      %v5502 = vadd.f32 %v5405, %v5501
      %v5503 = vpop.f32.mrb[0].mxu0
      %5504 = vmatprep.mubr.bf16.mxu0 %v4641
      %5505 = vmatmul.mubr.bf16.gmra.mrb[0].mxu0 %v4640
      %v5506 = vpop.f32.mrb[0].mxu0
      %v5507 = vadd.f32 %v5410, %v5506
      %v5508 = vpop.f32.mrb[0].mxu0
      %v5509 = vpop.f32.mrb[0].mxu0
      %v5510 = vadd.f32 %v5413, %v5509
      %v5511 = vpop.f32.mrb[0].mxu0
      %5512 = vmatprep.mubr.bf16.mxu0 %v4650
      %5513 = vmatmul.mubr.bf16.gmra.mrb[0].mxu0 %v4649
      %v5514 = vpop.f32.mrb[0].mxu0
      %v5515 = vadd.f32 %v5418, %v5514
      %v5516 = vpop.f32.mrb[0].mxu0
      %v5517 = vpop.f32.mrb[0].mxu0
      %v5518 = vadd.f32 %v5421, %v5517
      %v5519 = vpop.f32.mrb[0].mxu0
      %5520 = vdwg.mxu0
      %5521 = vmatprep.subr.bf16.mxu0 0
      %5522 = vmatpush1.bf16.msra.mxu0 %v5134
      %5523 = vmatprep.subr.bf16.mxu0 0
      %5524 = vmatpush1.bf16.msra.mxu0 %v5135
      %5525 = vmatprep.subr.bf16.mxu0 0
      %5526 = vmatpush1.bf16.msra.mxu0 %v5136
      %5527 = vmatprep.subr.bf16.mxu0 0
      %5528 = vmatpush1.bf16.msra.mxu0 %v5137
      %5529 = vmatprep.subr.bf16.mxu0 0
      %5530 = vmatpush1.bf16.msra.mxu0 %v5138
      %5531 = vmatprep.subr.bf16.mxu0 0
      %5532 = vmatpush1.bf16.msra.mxu0 %v5139
      %5533 = vmatprep.subr.bf16.mxu0 0
      %5534 = vmatpush1.bf16.msra.mxu0 %v5140
      %5535 = vmatprep.subr.bf16.mxu0 0
      %5536 = vmatpush1.bf16.msra.mxu0 %v5141
      %5537 = vmatprep.subr.bf16.mxu0 0
      %5538 = vmatpush1.bf16.msra.mxu0 %v5142
      %5539 = vmatprep.subr.bf16.mxu0 0
      %5540 = vmatpush1.bf16.msra.mxu0 %v5143
      %5541 = vmatprep.subr.bf16.mxu0 0
      %5542 = vmatpush1.bf16.msra.mxu0 %v5144
      %5543 = vmatprep.subr.bf16.mxu0 0
      %5544 = vmatpush1.bf16.msra.mxu0 %v5145
      %5545 = vmatprep.subr.bf16.mxu0 0
      %5546 = vmatpush1.bf16.msra.mxu0 %v5146
      %5547 = vmatprep.subr.bf16.mxu0 0
      %5548 = vmatpush1.bf16.msra.mxu0 %v5147
      %5549 = vmatprep.subr.bf16.mxu0 0
      %5550 = vmatpush1.bf16.msra.mxu0 %v5148
      %5551 = vmatprep.subr.bf16.mxu0 0
      %5552 = vmatpush1.bf16.msra.mxu0 %v5149
      %5553 = vmatprep.mubr.bf16.mxu0 %v4589
      %5554 = vmatmul.mubr.bf16.gmra.mrb[0].mxu0 %v4588
      %v5555 = vpop.f32.mrb[0].mxu0
      %v5556 = vadd.f32 %v5459, %v5555
      %v5557 = vpop.f32.mrb[0].mxu0
      %v5558 = vpop.f32.mrb[0].mxu0
      %v5559 = vadd.f32 %v5462, %v5558
      %v5560 = vpop.f32.mrb[0].mxu0
      %5561 = vmatprep.mubr.bf16.mxu0 %v4598
      %5562 = vmatmul.mubr.bf16.gmra.mrb[0].mxu0 %v4597
      %v5563 = vpop.f32.mrb[0].mxu0
      %v5564 = vadd.f32 %v5467, %v5563
      %v5565 = vpop.f32.mrb[0].mxu0
      %v5566 = vpop.f32.mrb[0].mxu0
      %v5567 = vadd.f32 %v5470, %v5566
      %v5568 = vpop.f32.mrb[0].mxu0
      %5569 = vmatprep.mubr.bf16.mxu0 %v4607
      %5570 = vmatmul.mubr.bf16.gmra.mrb[0].mxu0 %v4606
      %v5571 = vpop.f32.mrb[0].mxu0
      %v5572 = vadd.f32 %v5475, %v5571
      %v5573 = vpop.f32.mrb[0].mxu0
      %v5574 = vpop.f32.mrb[0].mxu0
      %v5575 = vadd.f32 %v5478, %v5574
      %v5576 = vpop.f32.mrb[0].mxu0
      %5577 = vmatprep.mubr.bf16.mxu0 %v4616
      %5578 = vmatmul.mubr.bf16.gmra.mrb[0].mxu0 %v4615
      %v5579 = vpop.f32.mrb[0].mxu0
      %v5580 = vadd.f32 %v5483, %v5579
      %v5581 = vpop.f32.mrb[0].mxu0
      %v5582 = vpop.f32.mrb[0].mxu0
      %v5583 = vadd.f32 %v5486, %v5582
      %v5584 = vpop.f32.mrb[0].mxu0
      %5585 = vmatprep.mubr.bf16.mxu0 %v4625
      %5586 = vmatmul.mubr.bf16.gmra.mrb[0].mxu0 %v4624
      %v5587 = vpop.f32.mrb[0].mxu0
      %v5588 = vadd.f32 %v5491, %v5587
      %v5589 = vpop.f32.mrb[0].mxu0
      %v5590 = vpop.f32.mrb[0].mxu0
      %v5591 = vadd.f32 %v5494, %v5590
      %v5592 = vpop.f32.mrb[0].mxu0
      %5593 = vmatprep.mubr.bf16.mxu0 %v4634
      %5594 = vmatmul.mubr.bf16.gmra.mrb[0].mxu0 %v4633
      %v5595 = vpop.f32.mrb[0].mxu0
      %v5596 = vadd.f32 %v5499, %v5595
      %v5597 = vpop.f32.mrb[0].mxu0
      %v5598 = vpop.f32.mrb[0].mxu0
      %v5599 = vadd.f32 %v5502, %v5598
      %v5600 = vpop.f32.mrb[0].mxu0
      %5601 = vmatprep.mubr.bf16.mxu0 %v4643
      %5602 = vmatmul.mubr.bf16.gmra.mrb[0].mxu0 %v4642
      %v5603 = vpop.f32.mrb[0].mxu0
      %v5604 = vadd.f32 %v5507, %v5603
      %v5605 = vpop.f32.mrb[0].mxu0
      %v5606 = vpop.f32.mrb[0].mxu0
      %v5607 = vadd.f32 %v5510, %v5606
      %v5608 = vpop.f32.mrb[0].mxu0
      %5609 = vmatprep.mubr.bf16.mxu0 %v4652
      %5610 = vmatmul.mubr.bf16.gmra.mrb[0].mxu0 %v4651
      %v5611 = vpop.f32.mrb[0].mxu0
      %v5612 = vadd.f32 %v5515, %v5611
      %v5613 = vpop.f32.mrb[0].mxu0
      %v5614 = vpop.f32.mrb[0].mxu0
      %v5615 = vadd.f32 %v5518, %v5614
      %v5616 = vpop.f32.mrb[0].mxu0
      %5617 = vdwg.mxu0
      %5618 = vmatprep.subr.bf16.mxu0 0
      %5619 = vmatpush1.bf16.msra.mxu0 %v5150
      %5620 = vmatprep.subr.bf16.mxu0 0
      %5621 = vmatpush1.bf16.msra.mxu0 %v5151
      %5622 = vmatprep.subr.bf16.mxu0 0
      %5623 = vmatpush1.bf16.msra.mxu0 %v5152
      %5624 = vmatprep.subr.bf16.mxu0 0
      %5625 = vmatpush1.bf16.msra.mxu0 %v5153
      %5626 = vmatprep.subr.bf16.mxu0 0
      %5627 = vmatpush1.bf16.msra.mxu0 %v5154
      %5628 = vmatprep.subr.bf16.mxu0 0
      %5629 = vmatpush1.bf16.msra.mxu0 %v5155
      %5630 = vmatprep.subr.bf16.mxu0 0
      %5631 = vmatpush1.bf16.msra.mxu0 %v5156
      %5632 = vmatprep.subr.bf16.mxu0 0
      %5633 = vmatpush1.bf16.msra.mxu0 %v5157
      %5634 = vmatprep.subr.bf16.mxu0 0
      %5635 = vmatpush1.bf16.msra.mxu0 0
      %5636 = vmatprep.subr.bf16.mxu0 0
      %5637 = vmatpush1.bf16.msra.mxu0 0
      %5638 = vmatprep.subr.bf16.mxu0 0
      %5639 = vmatpush1.bf16.msra.mxu0 0
      %5640 = vmatprep.subr.bf16.mxu0 0
      %5641 = vmatpush1.bf16.msra.mxu0 0
      %5642 = vmatprep.subr.bf16.mxu0 0
      %5643 = vmatpush1.bf16.msra.mxu0 0
      %5644 = vmatprep.subr.bf16.mxu0 0
      %5645 = vmatpush1.bf16.msra.mxu0 0
      %5646 = vmatprep.subr.bf16.mxu0 0
      %5647 = vmatpush1.bf16.msra.mxu0 0
      %5648 = vmatprep.subr.bf16.mxu0 0
      %5649 = vmatpush1.bf16.msra.mxu0 0
      %5650 = vmatprep.mubr.bf16.mxu0 0
      %5651 = vmatmul.mubr.bf16.gmra.mrb[0].mxu0 %v4590
      %v5652 = vpop.f32.mrb[0].mxu0
      %v5653 = vadd.f32 %v5556, %v5652
      %v5654 = vpop.f32.mrb[0].mxu0
      %v5655 = vpop.f32.mrb[0].mxu0
      %v5656 = vadd.f32 %v5559, %v5655
      %v5657 = vpop.f32.mrb[0].mxu0
      %5658 = vmatprep.mubr.bf16.mxu0 0
      %5659 = vmatmul.mubr.bf16.gmra.mrb[0].mxu0 %v4599
      %v5660 = vpop.f32.mrb[0].mxu0
      %v5661 = vadd.f32 %v5564, %v5660
      %v5662 = vpop.f32.mrb[0].mxu0
      %v5663 = vpop.f32.mrb[0].mxu0
      %v5664 = vadd.f32 %v5567, %v5663
      %v5665 = vpop.f32.mrb[0].mxu0
      %5666 = vmatprep.mubr.bf16.mxu0 0
      %5667 = vmatmul.mubr.bf16.gmra.mrb[0].mxu0 %v4608
      %v5668 = vpop.f32.mrb[0].mxu0
      %v5669 = vadd.f32 %v5572, %v5668
      %v5670 = vpop.f32.mrb[0].mxu0
      %v5671 = vpop.f32.mrb[0].mxu0
      %v5672 = vadd.f32 %v5575, %v5671
      %v5673 = vpop.f32.mrb[0].mxu0
      %5674 = vmatprep.mubr.bf16.mxu0 0
      %5675 = vmatmul.mubr.bf16.gmra.mrb[0].mxu0 %v4617
      %v5676 = vpop.f32.mrb[0].mxu0
      %v5677 = vadd.f32 %v5580, %v5676
      %v5678 = vpop.f32.mrb[0].mxu0
      %v5679 = vpop.f32.mrb[0].mxu0
      %v5680 = vadd.f32 %v5583, %v5679
      %v5681 = vpop.f32.mrb[0].mxu0
      %5682 = vmatprep.mubr.bf16.mxu0 0
      %5683 = vmatmul.mubr.bf16.gmra.mrb[0].mxu0 %v4626
      %v5684 = vpop.f32.mrb[0].mxu0
      %v5685 = vadd.f32 %v5588, %v5684
      %v5686 = vpop.f32.mrb[0].mxu0
      %v5687 = vpop.f32.mrb[0].mxu0
      %v5688 = vadd.f32 %v5591, %v5687
      %v5689 = vpop.f32.mrb[0].mxu0
      %5690 = vmatprep.mubr.bf16.mxu0 0
      %5691 = vmatmul.mubr.bf16.gmra.mrb[0].mxu0 %v4635
      %v5692 = vpop.f32.mrb[0].mxu0
      %v5693 = vadd.f32 %v5596, %v5692
      %v5694 = vpop.f32.mrb[0].mxu0
      %v5695 = vpop.f32.mrb[0].mxu0
      %v5696 = vadd.f32 %v5599, %v5695
      %v5697 = vpop.f32.mrb[0].mxu0
      %5698 = vmatprep.mubr.bf16.mxu0 0
      %5699 = vmatmul.mubr.bf16.gmra.mrb[0].mxu0 %v4644
      %v5700 = vpop.f32.mrb[0].mxu0
      %v5701 = vadd.f32 %v5604, %v5700
      %v5702 = vpop.f32.mrb[0].mxu0
      %v5703 = vpop.f32.mrb[0].mxu0
      %v5704 = vadd.f32 %v5607, %v5703
      %v5705 = vpop.f32.mrb[0].mxu0
      %5706 = vmatprep.mubr.bf16.mxu0 0
      %5707 = vmatmul.mubr.bf16.gmra.mrb[0].mxu0 %v4653
      %v5708 = vpop.f32.mrb[0].mxu0
      %v5709 = vadd.f32 %v5612, %v5708
      %v5710 = vpop.f32.mrb[0].mxu0
      %v5711 = vpop.f32.mrb[0].mxu0
      %v5712 = vadd.f32 %v5615, %v5711
      %v5713 = vpop.f32.mrb[0].mxu0
      %5714 = vdwg.mxu0
      %v5715 = vld [vmem:[%s6] sm:$0x1]
      %v5717 = vlaneseq
      %v5718 = vshrl.u32 %v5717, 7
      %v5719 = vsub.s32 0, %v5718
      %v5720 = vrot.slane %v5715, %v5719
      %v5722 = vmul.f32 %v5653, %v5720
      %v5723 = vmul.f32 %v5656, %v5720
      %v5724 = vmul.f32 %v5661, %v5720
      %v5725 = vmul.f32 %v5664, %v5720
      %v5726 = vmul.f32 %v5669, %v5720
      %v5727 = vmul.f32 %v5672, %v5720
      %v5728 = vmul.f32 %v5677, %v5720
      %v5729 = vmul.f32 %v5680, %v5720
      %v5730 = vmul.f32 %v5685, %v5720
      %v5731 = vmul.f32 %v5688, %v5720
      %v5732 = vmul.f32 %v5693, %v5720
      %v5733 = vmul.f32 %v5696, %v5720
      %v5734 = vmul.f32 %v5701, %v5720
      %v5735 = vmul.f32 %v5704, %v5720
      %v5736 = vmul.f32 %v5709, %v5720
      %v5737 = vmul.f32 %v5712, %v5720
      %v5738 = vld [vmem:[%s7] sm:$0x1]
      %v5740 = vlaneseq
      %v5741 = vshrl.u32 %v5740, 7
      %v5742 = vsub.s32 0, %v5741
      %v5743 = vrot.slane %v5738, %v5742
      %v5745 = vadd.f32 %v5722, %v5743
      %v5746 = vadd.f32 %v5723, %v5743
      %v5747 = vadd.f32 %v5724, %v5743
      %v5748 = vadd.f32 %v5725, %v5743
      %v5749 = vadd.f32 %v5726, %v5743
      %v5750 = vadd.f32 %v5727, %v5743
      %v5751 = vadd.f32 %v5728, %v5743
      %v5752 = vadd.f32 %v5729, %v5743
      %v5753 = vadd.f32 %v5730, %v5743
      %v5754 = vadd.f32 %v5731, %v5743
      %v5755 = vadd.f32 %v5732, %v5743
      %v5756 = vadd.f32 %v5733, %v5743
      %v5757 = vadd.f32 %v5734, %v5743
      %v5758 = vadd.f32 %v5735, %v5743
      %v5759 = vadd.f32 %v5736, %v5743
      %v5760 = vadd.f32 %v5737, %v5743
      %v5761 = vmax.f32 %v5745, 0.0
      %v5762 = vmax.f32 %v5746, 0.0
      %v5763 = vmax.f32 %v5747, 0.0
      %v5764 = vmax.f32 %v5748, 0.0
      %v5765 = vmax.f32 %v5749, 0.0
      %v5766 = vmax.f32 %v5750, 0.0
      %v5767 = vmax.f32 %v5751, 0.0
      %v5768 = vmax.f32 %v5752, 0.0
      %v5769 = vmax.f32 %v5753, 0.0
      %v5770 = vmax.f32 %v5754, 0.0
      %v5771 = vmax.f32 %v5755, 0.0
      %v5772 = vmax.f32 %v5756, 0.0
      %v5773 = vmax.f32 %v5757, 0.0
      %v5774 = vmax.f32 %v5758, 0.0
      %v5775 = vmax.f32 %v5759, 0.0
      %v5776 = vmax.f32 %v5760, 0.0
      %5777 = vst [vmem:[%s349] sm:$0xff] %v5761
      %5778 = vst [vmem:[%s349 + $0x8] sm:$0xff] %v5762
      %5779 = vst [vmem:[%s349 + $0x10] sm:$0xff] %v5763
      %5780 = vst [vmem:[%s349 + $0x18] sm:$0xff] %v5764
      %5781 = vst [vmem:[%s349 + $0x20] sm:$0xff] %v5765
      %5782 = vst [vmem:[%s349 + $0x28] sm:$0xff] %v5766
      %5783 = vst [vmem:[%s349 + $0x30] sm:$0xff] %v5767
      %5784 = vst [vmem:[%s349 + $0x38] sm:$0xff] %v5768
      %5785 = vst [vmem:[%s349 + $0x40] sm:$0xff] %v5769
      %5786 = vst [vmem:[%s349 + $0x48] sm:$0xff] %v5770
      %5787 = vst [vmem:[%s349 + $0x50] sm:$0xff] %v5771
      %5788 = vst [vmem:[%s349 + $0x58] sm:$0xff] %v5772
      %5789 = vst [vmem:[%s349 + $0x60] sm:$0xff] %v5773
      %5790 = vst [vmem:[%s349 + $0x68] sm:$0xff] %v5774
      %5791 = vst [vmem:[%s349 + $0x70] sm:$0xff] %v5775
      %5792 = vst [vmem:[%s349 + $0x78] sm:$0xff] %v5776
      %s5793 = smul.u32 8, %s24
      %p5794 = scmp.lt.s32.totalorder %s23, 1
      %s5795 = scalar_select %p5794, %s23, 1
      %p5796 = scmp.lt.s32.totalorder %s5793, 15
      %s5797 = scalar_select %p5796, %s5793, 15
      %s5798 = smul.addr %s5797, 2
      %s5799 = smul.addr %s5795, 32
      %s5800 = sadd.s32 %s5798, %s5799
      %s5801 = smul.addr %s5800, 8
      %s5802 = scalar_lea.vmem %s8, %s5801
      // Predicated region
      $region53: #{decoder_block_forward.1} parent=51 // pred_check
        %p5803 = pneg %p229
      $region54: #{decoder_block_forward.1} parent=51 // pred_check_branch
        %5805 = sbr.rel (%p5803) target = $region56
      $region55: #{decoder_block_forward.1} parent=51 // pred_region
        %s5806 = smul.u32 8, %s24
      $region56: #{decoder_block_forward.1} parent=51 // pred_fallthru
        _
    $region52: #{decoder_block_forward.1} parent=5 // pred_fallthru
      _
    %p5807 = scmp.le.s32.totalorder 2, %s14
    // Predicated region
    $region57: #{decoder_block_forward.1} parent=5 // pred_check
      %p5808 = pneg %p5807
    $region58: #{decoder_block_forward.1} parent=5 // pred_check_branch
      %5810 = sbr.rel (%p5808) target = $region60
    $region59: #{decoder_block_forward.1} parent=5 // pred_region
      %s5811 = ssub.s32 %s14, 2
      // Predicated region
      $region61: #{decoder_block_forward.1} parent=59 // pred_check
        %p5812 = pneg %p235
      $region62: #{decoder_block_forward.1} parent=59 // pred_check_branch
        %5814 = sbr.rel (%p5812) target = $region64
      $region63: #{decoder_block_forward.1} parent=59 // pred_region
        %s5815 = smul.u32 8, %s26
        %p5816 = scmp.lt.s32.totalorder %s25, 1
        %s5817 = scalar_select %p5816, %s25, 1
        %p5818 = scmp.lt.s32.totalorder %s5815, 15
        %s5819 = scalar_select %p5818, %s5815, 15
        %s5820 = smul.addr %s5819, 2
        %s5821 = smul.addr %s5817, 32
        %s5822 = sadd.s32 %s5820, %s5821
        %s5823 = smul.addr %s5822, 8
        %s5824 = scalar_lea.vmem %s8, %s5823
      $region64: #{decoder_block_forward.1} parent=59 // pred_fallthru
        _
    $region60: #{decoder_block_forward.1} parent=5 // pred_fallthru
      _
  $region6: #{decoder_block_forward.1} parent=0 // loop_footer
    %s18 = sadd.s32 1, %s14
  $region7: #{decoder_block_forward.1} parent=0 // loop_footer_branch
    %13 = sbr.rel target = $region3
  $region8: #{decoder_block_forward.1} parent=0 // loop_exit
    _

</llo_original>
